<compile_context>
chip_gen: v6e
topology: v6e:2x2x1
jax: 0.10.0
libtpu: 0.0.40
codegen_flags: <defaults>
</compile_context>

<pallas_src>
import math
import numpy as np
import jax
import jax.numpy as jnp
from jax.experimental import pallas as pl
from jax.experimental.pallas import tpu as pltpu


def mish(v):
    # PyTorch Mish: x * tanh(softplus(x)), softplus threshold=20 for stability.
    # (log(1+exp) instead of log1p to stay on well-supported Mosaic EUP ops.)
    sp = jnp.where(v > 20.0, v, jnp.log(1.0 + jnp.exp(jnp.minimum(v, 20.0))))
    return v * jnp.tanh(sp)


def _make_kernel(N, C, D, H, W, K, C_O, KPAD):
    P = K // 2
    S = D * H * W
    NC = N * C
    K3 = K * K * K
    K3NC = K3 * NC
    n_pool = C_O ** 3
    wd, wh, ww = D // C_O, H // C_O, W // C_O          # pool windows (divisible case)
    taps = [(kd, kh, kw) for kd in range(K) for kh in range(K) for kw in range(K)]
    eps = 1e-5

    def conv_same(v, w_mat, bias, mask_ref, patches_ref):
        # v: (NC, S) packed activations.  For each of the K^3 taps: lane-roll
        # the slab, kill wrapped/out-of-bounds lanes with the precomputed mask,
        # and stream the (NC, S) piece into the im2col scratch with an aligned
        # 8-row store.  One MXU matmul with the block-diagonal weight then
        # mixes (tap, cin) -> cout independently per sample.
        for t, (kd, kh, kw) in enumerate(taps):
            off = (kd - P) * H * W + (kh - P) * W + (kw - P)
            shifted = v if off == 0 else pltpu.roll(v, (-off) % S, axis=1)
            patches_ref[t * NC:(t + 1) * NC, :] = (
                shifted * mask_ref[t * NC:(t + 1) * NC, :])
        y = jnp.dot(w_mat, patches_ref[...],            # (NC,KPAD) @ (KPAD,S)
                    preferred_element_type=jnp.float32)
        return mish(y + bias)

    def window_max(m, size, stride):
        # max over lanes {i, i+stride, ..., i+(size-1)*stride}; only window-start
        # lanes (which never wrap) are ever read downstream.
        cov = 1
        while cov < size:
            step = min(cov, size - cov)
            m = jnp.maximum(m, pltpu.roll(m, (-step * stride) % S, axis=1))
            cov += step
        return m

    def kernel(x_ref, w1_ref, b1_ref, w2_ref, b2_ref, mask_ref, g_ref,
               out_ref, patches_ref):
        x = x_ref[...]                                   # (NC, S)

        # Zero the contraction-dim pad rows of the scratch once per invocation.
        # The matching weight columns are zero, but 0 * Inf/NaN garbage != 0.
        patches_ref[K3NC:, :] = jnp.zeros((KPAD - K3NC, S), jnp.float32)

        # ---- MyLayer: x + Mish(conv(Mish(conv(x)))) ----
        y = conv_same(x, w1_ref[...], b1_ref[...], mask_ref, patches_ref)
        y = conv_same(y, w2_ref[...], b2_ref[...], mask_ref, patches_ref)
        res = x + y                                      # (NC, S)

        # ---- AdaptiveMaxPool3d(C_O): hierarchical rolled maxima (XLU) ----
        m = window_max(res, ww, 1)                       # reduce w within window
        m = window_max(m, wh, W)                         # reduce h
        m = window_max(m, wd, H * W)                     # reduce d
        # m holds each window's max at that window's start lane.

        # ---- LayerNorm((C_O,C_O,C_O), no affine) per (n, c) row, f32 stats ----
        smask = mask_ref[K3NC:K3NC + NC, :]              # (NC,S) window-start mask
        inv_n = 1.0 / n_pool
        mean = jnp.sum(m * smask, axis=1, keepdims=True) * inv_n
        diff = (m - mean) * smask
        var = jnp.sum(diff * diff, axis=1, keepdims=True) * inv_n
        mnorm = (m - mean) * jax.lax.rsqrt(var + eps)    # (NC, S)

        # ---- gather the C_O^3 normalized window-start lanes into a
        #      lane-padded (NC, OUT_LANES) slab: one tiny matmul, unmasked vst.
        out_ref[...] = jnp.dot(mnorm, g_ref[...],        # (NC,S) @ (S,OUT_LANES)
                               preferred_element_type=jnp.float32)

    return kernel


def my_compound_pallas(x_ncdhw, w1, b1, w2, b2, C_O):
    N, C, D, H, W = x_ncdhw.shape
    K = w1.shape[0]
    P = K // 2
    S = D * H * W
    NC = N * C
    K3 = K * K * K
    K3NC = K3 * NC
    n_pool = C_O ** 3

    # TODO(synk): AdaptiveMaxPool3d windows assume D,H,W divisible by C_O (true
    # for this module's shapes); general adaptive windows not implemented.
    assert D % C_O == 0 and H % C_O == 0 and W % C_O == 0
    # TODO(synk): batch*channels packed into sublanes; (N*C) % 8 != 0 or
    # S % 128 != 0 would need padding (not required for this module's shapes).
    assert NC % 8 == 0 and S % 128 == 0

    KPAD = -(-K3NC // 128) * 128                       # pad contraction dim
    OUT_LANES = max(128, -(-n_pool // 128) * 128)      # lane-dense output slab

    # lane-dense packed layout: (N*C, D*H*W) -- the natural NCDHW flattening.
    x_flat = x_ncdhw.reshape(NC, S).astype(jnp.float32)

    def prep_w(w):
        # DHWIO -> (C_out, K^3*C_in), then block-diagonal over the batch so the
        # packed matmul never mixes samples:
        #   big[n*C + co, t*NC + n*C + ci] = W[co, t*C + ci]
        wm = np.transpose(np.asarray(w, np.float32).reshape(K3 * C, C))   # (C, K3*C)
        wm3 = wm.reshape(C, K3, C)                                         # (co,t,ci)
        big = np.zeros((NC, K3, NC), np.float32)
        for n in range(N):
            big[n * C:(n + 1) * C, :, n * C:(n + 1) * C] = wm3
        big = big.reshape(NC, K3NC)
        return jnp.asarray(np.pad(big, ((0, 0), (0, KPAD - K3NC))))

    w1m, w2m = prep_w(w1), prep_w(w2)
    b1c = jnp.asarray(np.tile(np.asarray(b1, np.float32), N).reshape(NC, 1))
    b2c = jnp.asarray(np.tile(np.asarray(b2, np.float32), N).reshape(NC, 1))

    # Per-tap validity masks implementing the zero 'same' padding, expanded to
    # all NC sublanes; plus one (NC, S) block marking pool window-start lanes.
    di = np.arange(D)[:, None, None]
    hi = np.arange(H)[None, :, None]
    wi = np.arange(W)[None, None, :]
    mrows = []
    for kd in range(K):
        for kh in range(K):
            for kw in range(K):
                valid = ((di + kd - P >= 0) & (di + kd - P < D) &
                         (hi + kh - P >= 0) & (hi + kh - P < H) &
                         (wi + kw - P >= 0) & (wi + kw - P < W))
                mrows.append(valid.reshape(-1))
    mask_np = np.stack(mrows).astype(np.float32)                         # (K^3, S)
    mask_exp = np.repeat(mask_np[:, None, :], NC, axis=1).reshape(K3NC, S)

    wd, wh, ww = D // C_O, H // C_O, W // C_O
    pool_lanes = [(od * wd) * H * W + (oh * wh) * W + (ow * ww)
                  for od in range(C_O) for oh in range(C_O) for ow in range(C_O)]
    start_np = np.zeros((S,), np.float32)
    start_np[np.asarray(pool_lanes)] = 1.0
    masks = jnp.asarray(np.concatenate([mask_exp, np.tile(start_np, (NC, 1))],
                                       axis=0))                          # (K3NC+NC, S)

    gmat_np = np.zeros((S, OUT_LANES), np.float32)                       # 0/1 gather
    for j, lane in enumerate(pool_lanes):
        gmat_np[lane, j] = 1.0
    gmat = jnp.asarray(gmat_np)

    kernel = _make_kernel(N, C, D, H, W, K, C_O, KPAD)
    out_wide = pl.pallas_call(
        kernel,
        out_shape=jax.ShapeDtypeStruct((NC, OUT_LANES), jnp.float32),
        grid=(1,),
        in_specs=[
            pl.BlockSpec((NC, S), lambda i: (0, 0)),
            pl.BlockSpec((NC, KPAD), lambda i: (0, 0)),
            pl.BlockSpec((NC, 1), lambda i: (0, 0)),
            pl.BlockSpec((NC, KPAD), lambda i: (0, 0)),
            pl.BlockSpec((NC, 1), lambda i: (0, 0)),
            pl.BlockSpec((K3NC + NC, S), lambda i: (0, 0)),
            pl.BlockSpec((S, OUT_LANES), lambda i: (0, 0)),
        ],
        out_specs=pl.BlockSpec((NC, OUT_LANES), lambda i: (0, 0)),
        scratch_shapes=[pltpu.VMEM((KPAD, S), jnp.float32)],
        compiler_params=pltpu.CompilerParams(dimension_semantics=("arbitrary",)),
    )(x_flat, w1m, b1c, w2m, b2c, masks, gmat)

    # back to PyTorch layout: (N, C, C_O, C_O, C_O)
    return out_wide[:, :n_pool].reshape(N, C, C_O, C_O, C_O)


def reference(x_ncdhw, w1, b1, w2, b2, C_O):
    """Pure-JAX reference mirroring the PyTorch forward (exact f32 convs)."""
    x = jnp.transpose(x_ncdhw, (0, 2, 3, 4, 1)).astype(jnp.float32)

    def conv(v, w, b):
        y = jax.lax.conv_general_dilated(
            v, w, (1, 1, 1), 'SAME',
            dimension_numbers=('NDHWC', 'DHWIO', 'NDHWC'),
            precision=jax.lax.Precision.HIGHEST)
        return y + b

    y = mish(conv(x, w1, b1))
    y = mish(conv(y, w2, b2))
    y = x + y
    N, D, H, W, C = y.shape
    y = y.reshape(N, C_O, D // C_O, C_O, H // C_O, C_O, W // C_O, C)
    y = y.max(axis=(2, 4, 6))                                   # adaptive max pool
    mean = y.mean(axis=(1, 2, 3), keepdims=True)
    var = ((y - mean) ** 2).mean(axis=(1, 2, 3), keepdims=True)
    y = (y - mean) / jnp.sqrt(var + 1e-5)                       # LayerNorm, no affine
    return jnp.transpose(y, (0, 4, 1, 2, 3))


if __name__ == "__main__":
    # MyCompund(C_I=4, C_O=2, kernel=3) on x: (N=2, C=4, D=H=W=8), NCDHW.
    N, C_I, D, H, W = 2, 4, 8, 8, 8
    K, C_O = 3, 2

    key = jax.random.PRNGKey(0)
    kx, k1, k2, k3, k4 = jax.random.split(key, 5)
    fan_in = C_I * K * K * K
    bound = 1.0 / math.sqrt(fan_in)      # PyTorch Conv3d default init bound
    w1 = jax.random.uniform(k1, (K, K, K, C_I, C_I), jnp.float32, -bound, bound)
    b1 = jax.random.uniform(k2, (C_I,), jnp.float32, -bound, bound)
    w2 = jax.random.uniform(k3, (K, K, K, C_I, C_I), jnp.float32, -bound, bound)
    b2 = jax.random.uniform(k4, (C_I,), jnp.float32, -bound, bound)
    x = jax.random.normal(kx, (N, C_I, D, H, W), jnp.float32)

    out = jax.block_until_ready(my_compound_pallas(x, w1, b1, w2, b2, C_O))
    ref = jax.block_until_ready(reference(x, w1, b1, w2, b2, C_O))

    assert out.shape == (N, C_I, C_O, C_O, C_O), out.shape
    err = float(jnp.max(jnp.abs(out - ref)))
    # Conv matmuls run at default (single-pass bf16) MXU precision per the perf
    # review; tolerance covers bf16 truncation amplified by the LayerNorm.
    assert err < 5e-2, f"max abs err = {err}"
    print("KERNEL_OK")
</pallas_src>

<mosaic_0001>
module attributes {stable_mosaic.version = 11 : i64} {
  func.func @kernel(%arg0: i32, %arg1: memref<8x512xf32, #tpu.memory_space<vmem>>, %arg2: memref<8x256xf32, #tpu.memory_space<vmem>>, %arg3: memref<8x1xf32, #tpu.memory_space<vmem>>, %arg4: memref<8x256xf32, #tpu.memory_space<vmem>>, %arg5: memref<8x1xf32, #tpu.memory_space<vmem>>, %arg6: memref<224x512xf32, #tpu.memory_space<vmem>>, %arg7: memref<512x128xf32, #tpu.memory_space<vmem>>, %arg8: memref<8x128xf32, #tpu.memory_space<vmem>>, %arg9: memref<256x512xf32, #tpu.memory_space<vmem>>) attributes {dimension_semantics = [#tpu.dimension_semantics<arbitrary>], iteration_bounds = array<i64: 1>, scalar_prefetch = 0 : i64, scratch_operands = 1 : i64, tpu.core_type = #tpu.core_type<tc>, window_params = [{pipeline_mode = #tpu.pipeline_mode<synchronous>, transform_indices = @transform_0, window_bounds = array<i64: 8, 512>}, {pipeline_mode = #tpu.pipeline_mode<synchronous>, transform_indices = @transform_1, window_bounds = array<i64: 8, 256>}, {pipeline_mode = #tpu.pipeline_mode<synchronous>, transform_indices = @transform_2, window_bounds = array<i64: 8, 1>}, {pipeline_mode = #tpu.pipeline_mode<synchronous>, transform_indices = @transform_3, window_bounds = array<i64: 8, 256>}, {pipeline_mode = #tpu.pipeline_mode<synchronous>, transform_indices = @transform_4, window_bounds = array<i64: 8, 1>}, {pipeline_mode = #tpu.pipeline_mode<synchronous>, transform_indices = @transform_5, window_bounds = array<i64: 224, 512>}, {pipeline_mode = #tpu.pipeline_mode<synchronous>, transform_indices = @transform_6, window_bounds = array<i64: 512, 128>}, {pipeline_mode = #tpu.pipeline_mode<synchronous>, transform_indices = @transform_7, window_bounds = array<i64: 8, 128>}]} {
    %c0 = arith.constant 0 : index
    %c0_0 = arith.constant 0 : index
    %0 = vector.load %arg1[%c0, %c0_0] : memref<8x512xf32, #tpu.memory_space<vmem>>, vector<8x512xf32>
    %cst = arith.constant 0.000000e+00 : f32
    %1 = vector.broadcast %cst : f32 to vector<40x512xf32>
    %c216 = arith.constant 216 : index
    %c0_1 = arith.constant 0 : index
    %2 = vector.load %arg9[%c216, %c0_1] : memref<256x512xf32, #tpu.memory_space<vmem>>, vector<40x512xf32>
    tpu.vector_store %arg9[%c216, %c0_1], %1 {strides = array<i32>} : memref<256x512xf32, #tpu.memory_space<vmem>>, vector<40x512xf32>,
    %c0_2 = arith.constant 0 : index
    %c0_3 = arith.constant 0 : index
    %3 = vector.load %arg2[%c0_2, %c0_3] : memref<8x256xf32, #tpu.memory_space<vmem>>, vector<8x256xf32>
    %c0_4 = arith.constant 0 : index
    %c0_5 = arith.constant 0 : index
    %4 = vector.load %arg3[%c0_4, %c0_5] : memref<8x1xf32, #tpu.memory_space<vmem>>, vector<8x1xf32>
    %c73_i32 = arith.constant 73 : i32
    %5 = tpu.dynamic_rotate %0 by %c73_i32 dim 1 : vector<8x512xf32>, i32 -> vector<8x512xf32>
    %c0_6 = arith.constant 0 : index
    %c0_7 = arith.constant 0 : index
    %6 = vector.load %arg6[%c0_6, %c0_7] : memref<224x512xf32, #tpu.memory_space<vmem>>, vector<8x512xf32>
    %7 = arith.mulf %5, %6 : vector<8x512xf32>
    %c0_8 = arith.constant 0 : index
    %c0_9 = arith.constant 0 : index
    %8 = vector.load %arg9[%c0_8, %c0_9] : memref<256x512xf32, #tpu.memory_space<vmem>>, vector<8x512xf32>
    tpu.vector_store %arg9[%c0_8, %c0_9], %7 {strides = array<i32>} : memref<256x512xf32, #tpu.memory_space<vmem>>, vector<8x512xf32>,
    %c72_i32 = arith.constant 72 : i32
    %9 = tpu.dynamic_rotate %0 by %c72_i32 dim 1 : vector<8x512xf32>, i32 -> vector<8x512xf32>
    %c8 = arith.constant 8 : index
    %c0_10 = arith.constant 0 : index
    %10 = vector.load %arg6[%c8, %c0_10] : memref<224x512xf32, #tpu.memory_space<vmem>>, vector<8x512xf32>
    %11 = arith.mulf %9, %10 : vector<8x512xf32>
    %c8_11 = arith.constant 8 : index
    %c0_12 = arith.constant 0 : index
    %12 = vector.load %arg9[%c8_11, %c0_12] : memref<256x512xf32, #tpu.memory_space<vmem>>, vector<8x512xf32>
    tpu.vector_store %arg9[%c8_11, %c0_12], %11 {strides = array<i32>} : memref<256x512xf32, #tpu.memory_space<vmem>>, vector<8x512xf32>,
    %c71_i32 = arith.constant 71 : i32
    %13 = tpu.dynamic_rotate %0 by %c71_i32 dim 1 : vector<8x512xf32>, i32 -> vector<8x512xf32>
    %c16 = arith.constant 16 : index
    %c0_13 = arith.constant 0 : index
    %14 = vector.load %arg6[%c16, %c0_13] : memref<224x512xf32, #tpu.memory_space<vmem>>, vector<8x512xf32>
    %15 = arith.mulf %13, %14 : vector<8x512xf32>
    %c16_14 = arith.constant 16 : index
    %c0_15 = arith.constant 0 : index
    %16 = vector.load %arg9[%c16_14, %c0_15] : memref<256x512xf32, #tpu.memory_space<vmem>>, vector<8x512xf32>
    tpu.vector_store %arg9[%c16_14, %c0_15], %15 {strides = array<i32>} : memref<256x512xf32, #tpu.memory_space<vmem>>, vector<8x512xf32>,
    %c65_i32 = arith.constant 65 : i32
    %17 = tpu.dynamic_rotate %0 by %c65_i32 dim 1 : vector<8x512xf32>, i32 -> vector<8x512xf32>
    %c24 = arith.constant 24 : index
    %c0_16 = arith.constant 0 : index
    %18 = vector.load %arg6[%c24, %c0_16] : memref<224x512xf32, #tpu.memory_space<vmem>>, vector<8x512xf32>
    %19 = arith.mulf %17, %18 : vector<8x512xf32>
    %c24_17 = arith.constant 24 : index
    %c0_18 = arith.constant 0 : index
    %20 = vector.load %arg9[%c24_17, %c0_18] : memref<256x512xf32, #tpu.memory_space<vmem>>, vector<8x512xf32>
    tpu.vector_store %arg9[%c24_17, %c0_18], %19 {strides = array<i32>} : memref<256x512xf32, #tpu.memory_space<vmem>>, vector<8x512xf32>,
    %c64_i32 = arith.constant 64 : i32
    %21 = tpu.dynamic_rotate %0 by %c64_i32 dim 1 : vector<8x512xf32>, i32 -> vector<8x512xf32>
    %c32 = arith.constant 32 : index
    %c0_19 = arith.constant 0 : index
    %22 = vector.load %arg6[%c32, %c0_19] : memref<224x512xf32, #tpu.memory_space<vmem>>, vector<8x512xf32>
    %23 = arith.mulf %21, %22 : vector<8x512xf32>
    %c32_20 = arith.constant 32 : index
    %c0_21 = arith.constant 0 : index
    %24 = vector.load %arg9[%c32_20, %c0_21] : memref<256x512xf32, #tpu.memory_space<vmem>>, vector<8x512xf32>
    tpu.vector_store %arg9[%c32_20, %c0_21], %23 {strides = array<i32>} : memref<256x512xf32, #tpu.memory_space<vmem>>, vector<8x512xf32>,
    %c63_i32 = arith.constant 63 : i32
    %25 = tpu.dynamic_rotate %0 by %c63_i32 dim 1 : vector<8x512xf32>, i32 -> vector<8x512xf32>
    %c40 = arith.constant 40 : index
    %c0_22 = arith.constant 0 : index
    %26 = vector.load %arg6[%c40, %c0_22] : memref<224x512xf32, #tpu.memory_space<vmem>>, vector<8x512xf32>
    %27 = arith.mulf %25, %26 : vector<8x512xf32>
    %c40_23 = arith.constant 40 : index
    %c0_24 = arith.constant 0 : index
    %28 = vector.load %arg9[%c40_23, %c0_24] : memref<256x512xf32, #tpu.memory_space<vmem>>, vector<8x512xf32>
    tpu.vector_store %arg9[%c40_23, %c0_24], %27 {strides = array<i32>} : memref<256x512xf32, #tpu.memory_space<vmem>>, vector<8x512xf32>,
    %c57_i32 = arith.constant 57 : i32
    %29 = tpu.dynamic_rotate %0 by %c57_i32 dim 1 : vector<8x512xf32>, i32 -> vector<8x512xf32>
    %c48 = arith.constant 48 : index
    %c0_25 = arith.constant 0 : index
    %30 = vector.load %arg6[%c48, %c0_25] : memref<224x512xf32, #tpu.memory_space<vmem>>, vector<8x512xf32>
    %31 = arith.mulf %29, %30 : vector<8x512xf32>
    %c48_26 = arith.constant 48 : index
    %c0_27 = arith.constant 0 : index
    %32 = vector.load %arg9[%c48_26, %c0_27] : memref<256x512xf32, #tpu.memory_space<vmem>>, vector<8x512xf32>
    tpu.vector_store %arg9[%c48_26, %c0_27], %31 {strides = array<i32>} : memref<256x512xf32, #tpu.memory_space<vmem>>, vector<8x512xf32>,
    %c56_i32 = arith.constant 56 : i32
    %33 = tpu.dynamic_rotate %0 by %c56_i32 dim 1 : vector<8x512xf32>, i32 -> vector<8x512xf32>
    %c56 = arith.constant 56 : index
    %c0_28 = arith.constant 0 : index
    %34 = vector.load %arg6[%c56, %c0_28] : memref<224x512xf32, #tpu.memory_space<vmem>>, vector<8x512xf32>
    %35 = arith.mulf %33, %34 : vector<8x512xf32>
    %c56_29 = arith.constant 56 : index
    %c0_30 = arith.constant 0 : index
    %36 = vector.load %arg9[%c56_29, %c0_30] : memref<256x512xf32, #tpu.memory_space<vmem>>, vector<8x512xf32>
    tpu.vector_store %arg9[%c56_29, %c0_30], %35 {strides = array<i32>} : memref<256x512xf32, #tpu.memory_space<vmem>>, vector<8x512xf32>,
    %c55_i32 = arith.constant 55 : i32
    %37 = tpu.dynamic_rotate %0 by %c55_i32 dim 1 : vector<8x512xf32>, i32 -> vector<8x512xf32>
    %c64 = arith.constant 64 : index
    %c0_31 = arith.constant 0 : index
    %38 = vector.load %arg6[%c64, %c0_31] : memref<224x512xf32, #tpu.memory_space<vmem>>, vector<8x512xf32>
    %39 = arith.mulf %37, %38 : vector<8x512xf32>
    %c64_32 = arith.constant 64 : index
    %c0_33 = arith.constant 0 : index
    %40 = vector.load %arg9[%c64_32, %c0_33] : memref<256x512xf32, #tpu.memory_space<vmem>>, vector<8x512xf32>
    tpu.vector_store %arg9[%c64_32, %c0_33], %39 {strides = array<i32>} : memref<256x512xf32, #tpu.memory_space<vmem>>, vector<8x512xf32>,
    %c9_i32 = arith.constant 9 : i32
    %41 = tpu.dynamic_rotate %0 by %c9_i32 dim 1 : vector<8x512xf32>, i32 -> vector<8x512xf32>
    %c72 = arith.constant 72 : index
    %c0_34 = arith.constant 0 : index
    %42 = vector.load %arg6[%c72, %c0_34] : memref<224x512xf32, #tpu.memory_space<vmem>>, vector<8x512xf32>
    %43 = arith.mulf %41, %42 : vector<8x512xf32>
    %c72_35 = arith.constant 72 : index
    %c0_36 = arith.constant 0 : index
    %44 = vector.load %arg9[%c72_35, %c0_36] : memref<256x512xf32, #tpu.memory_space<vmem>>, vector<8x512xf32>
    tpu.vector_store %arg9[%c72_35, %c0_36], %43 {strides = array<i32>} : memref<256x512xf32, #tpu.memory_space<vmem>>, vector<8x512xf32>,
    %c8_i32 = arith.constant 8 : i32
    %45 = tpu.dynamic_rotate %0 by %c8_i32 dim 1 : vector<8x512xf32>, i32 -> vector<8x512xf32>
    %c80 = arith.constant 80 : index
    %c0_37 = arith.constant 0 : index
    %46 = vector.load %arg6[%c80, %c0_37] : memref<224x512xf32, #tpu.memory_space<vmem>>, vector<8x512xf32>
    %47 = arith.mulf %45, %46 : vector<8x512xf32>
    %c80_38 = arith.constant 80 : index
    %c0_39 = arith.constant 0 : index
    %48 = vector.load %arg9[%c80_38, %c0_39] : memref<256x512xf32, #tpu.memory_space<vmem>>, vector<8x512xf32>
    tpu.vector_store %arg9[%c80_38, %c0_39], %47 {strides = array<i32>} : memref<256x512xf32, #tpu.memory_space<vmem>>, vector<8x512xf32>,
    %c7_i32 = arith.constant 7 : i32
    %49 = tpu.dynamic_rotate %0 by %c7_i32 dim 1 : vector<8x512xf32>, i32 -> vector<8x512xf32>
    %c88 = arith.constant 88 : index
    %c0_40 = arith.constant 0 : index
    %50 = vector.load %arg6[%c88, %c0_40] : memref<224x512xf32, #tpu.memory_space<vmem>>, vector<8x512xf32>
    %51 = arith.mulf %49, %50 : vector<8x512xf32>
    %c88_41 = arith.constant 88 : index
    %c0_42 = arith.constant 0 : index
    %52 = vector.load %arg9[%c88_41, %c0_42] : memref<256x512xf32, #tpu.memory_space<vmem>>, vector<8x512xf32>
    tpu.vector_store %arg9[%c88_41, %c0_42], %51 {strides = array<i32>} : memref<256x512xf32, #tpu.memory_space<vmem>>, vector<8x512xf32>,
    %c1_i32 = arith.constant 1 : i32
    %53 = tpu.dynamic_rotate %0 by %c1_i32 dim 1 : vector<8x512xf32>, i32 -> vector<8x512xf32>
    %c96 = arith.constant 96 : index
    %c0_43 = arith.constant 0 : index
    %54 = vector.load %arg6[%c96, %c0_43] : memref<224x512xf32, #tpu.memory_space<vmem>>, vector<8x512xf32>
    %55 = arith.mulf %53, %54 : vector<8x512xf32>
    %c96_44 = arith.constant 96 : index
    %c0_45 = arith.constant 0 : index
    %56 = vector.load %arg9[%c96_44, %c0_45] : memref<256x512xf32, #tpu.memory_space<vmem>>, vector<8x512xf32>
    tpu.vector_store %arg9[%c96_44, %c0_45], %55 {strides = array<i32>} : memref<256x512xf32, #tpu.memory_space<vmem>>, vector<8x512xf32>,
    %c104 = arith.constant 104 : index
    %c0_46 = arith.constant 0 : index
    %57 = vector.load %arg6[%c104, %c0_46] : memref<224x512xf32, #tpu.memory_space<vmem>>, vector<8x512xf32>
    %58 = arith.mulf %0, %57 : vector<8x512xf32>
    %c104_47 = arith.constant 104 : index
    %c0_48 = arith.constant 0 : index
    %59 = vector.load %arg9[%c104_47, %c0_48] : memref<256x512xf32, #tpu.memory_space<vmem>>, vector<8x512xf32>
    tpu.vector_store %arg9[%c104_47, %c0_48], %58 {strides = array<i32>} : memref<256x512xf32, #tpu.memory_space<vmem>>, vector<8x512xf32>,
    %c511_i32 = arith.constant 511 : i32
    %60 = tpu.dynamic_rotate %0 by %c511_i32 dim 1 : vector<8x512xf32>, i32 -> vector<8x512xf32>
    %c112 = arith.constant 112 : index
    %c0_49 = arith.constant 0 : index
    %61 = vector.load %arg6[%c112, %c0_49] : memref<224x512xf32, #tpu.memory_space<vmem>>, vector<8x512xf32>
    %62 = arith.mulf %60, %61 : vector<8x512xf32>
    %c112_50 = arith.constant 112 : index
    %c0_51 = arith.constant 0 : index
    %63 = vector.load %arg9[%c112_50, %c0_51] : memref<256x512xf32, #tpu.memory_space<vmem>>, vector<8x512xf32>
    tpu.vector_store %arg9[%c112_50, %c0_51], %62 {strides = array<i32>} : memref<256x512xf32, #tpu.memory_space<vmem>>, vector<8x512xf32>,
    %c505_i32 = arith.constant 505 : i32
    %64 = tpu.dynamic_rotate %0 by %c505_i32 dim 1 : vector<8x512xf32>, i32 -> vector<8x512xf32>
    %c120 = arith.constant 120 : index
    %c0_52 = arith.constant 0 : index
    %65 = vector.load %arg6[%c120, %c0_52] : memref<224x512xf32, #tpu.memory_space<vmem>>, vector<8x512xf32>
    %66 = arith.mulf %64, %65 : vector<8x512xf32>
    %c120_53 = arith.constant 120 : index
    %c0_54 = arith.constant 0 : index
    %67 = vector.load %arg9[%c120_53, %c0_54] : memref<256x512xf32, #tpu.memory_space<vmem>>, vector<8x512xf32>
    tpu.vector_store %arg9[%c120_53, %c0_54], %66 {strides = array<i32>} : memref<256x512xf32, #tpu.memory_space<vmem>>, vector<8x512xf32>,
    %c504_i32 = arith.constant 504 : i32
    %68 = tpu.dynamic_rotate %0 by %c504_i32 dim 1 : vector<8x512xf32>, i32 -> vector<8x512xf32>
    %c128 = arith.constant 128 : index
    %c0_55 = arith.constant 0 : index
    %69 = vector.load %arg6[%c128, %c0_55] : memref<224x512xf32, #tpu.memory_space<vmem>>, vector<8x512xf32>
    %70 = arith.mulf %68, %69 : vector<8x512xf32>
    %c128_56 = arith.constant 128 : index
    %c0_57 = arith.constant 0 : index
    %71 = vector.load %arg9[%c128_56, %c0_57] : memref<256x512xf32, #tpu.memory_space<vmem>>, vector<8x512xf32>
    tpu.vector_store %arg9[%c128_56, %c0_57], %70 {strides = array<i32>} : memref<256x512xf32, #tpu.memory_space<vmem>>, vector<8x512xf32>,
    %c503_i32 = arith.constant 503 : i32
    %72 = tpu.dynamic_rotate %0 by %c503_i32 dim 1 : vector<8x512xf32>, i32 -> vector<8x512xf32>
    %c136 = arith.constant 136 : index
    %c0_58 = arith.constant 0 : index
    %73 = vector.load %arg6[%c136, %c0_58] : memref<224x512xf32, #tpu.memory_space<vmem>>, vector<8x512xf32>
    %74 = arith.mulf %72, %73 : vector<8x512xf32>
    %c136_59 = arith.constant 136 : index
    %c0_60 = arith.constant 0 : index
    %75 = vector.load %arg9[%c136_59, %c0_60] : memref<256x512xf32, #tpu.memory_space<vmem>>, vector<8x512xf32>
    tpu.vector_store %arg9[%c136_59, %c0_60], %74 {strides = array<i32>} : memref<256x512xf32, #tpu.memory_space<vmem>>, vector<8x512xf32>,
    %c457_i32 = arith.constant 457 : i32
    %76 = tpu.dynamic_rotate %0 by %c457_i32 dim 1 : vector<8x512xf32>, i32 -> vector<8x512xf32>
    %c144 = arith.constant 144 : index
    %c0_61 = arith.constant 0 : index
    %77 = vector.load %arg6[%c144, %c0_61] : memref<224x512xf32, #tpu.memory_space<vmem>>, vector<8x512xf32>
    %78 = arith.mulf %76, %77 : vector<8x512xf32>
    %c144_62 = arith.constant 144 : index
    %c0_63 = arith.constant 0 : index
    %79 = vector.load %arg9[%c144_62, %c0_63] : memref<256x512xf32, #tpu.memory_space<vmem>>, vector<8x512xf32>
    tpu.vector_store %arg9[%c144_62, %c0_63], %78 {strides = array<i32>} : memref<256x512xf32, #tpu.memory_space<vmem>>, vector<8x512xf32>,
    %c456_i32 = arith.constant 456 : i32
    %80 = tpu.dynamic_rotate %0 by %c456_i32 dim 1 : vector<8x512xf32>, i32 -> vector<8x512xf32>
    %c152 = arith.constant 152 : index
    %c0_64 = arith.constant 0 : index
    %81 = vector.load %arg6[%c152, %c0_64] : memref<224x512xf32, #tpu.memory_space<vmem>>, vector<8x512xf32>
    %82 = arith.mulf %80, %81 : vector<8x512xf32>
    %c152_65 = arith.constant 152 : index
    %c0_66 = arith.constant 0 : index
    %83 = vector.load %arg9[%c152_65, %c0_66] : memref<256x512xf32, #tpu.memory_space<vmem>>, vector<8x512xf32>
    tpu.vector_store %arg9[%c152_65, %c0_66], %82 {strides = array<i32>} : memref<256x512xf32, #tpu.memory_space<vmem>>, vector<8x512xf32>,
    %c455_i32 = arith.constant 455 : i32
    %84 = tpu.dynamic_rotate %0 by %c455_i32 dim 1 : vector<8x512xf32>, i32 -> vector<8x512xf32>
    %c160 = arith.constant 160 : index
    %c0_67 = arith.constant 0 : index
    %85 = vector.load %arg6[%c160, %c0_67] : memref<224x512xf32, #tpu.memory_space<vmem>>, vector<8x512xf32>
    %86 = arith.mulf %84, %85 : vector<8x512xf32>
    %c160_68 = arith.constant 160 : index
    %c0_69 = arith.constant 0 : index
    %87 = vector.load %arg9[%c160_68, %c0_69] : memref<256x512xf32, #tpu.memory_space<vmem>>, vector<8x512xf32>
    tpu.vector_store %arg9[%c160_68, %c0_69], %86 {strides = array<i32>} : memref<256x512xf32, #tpu.memory_space<vmem>>, vector<8x512xf32>,
    %c449_i32 = arith.constant 449 : i32
    %88 = tpu.dynamic_rotate %0 by %c449_i32 dim 1 : vector<8x512xf32>, i32 -> vector<8x512xf32>
    %c168 = arith.constant 168 : index
    %c0_70 = arith.constant 0 : index
    %89 = vector.load %arg6[%c168, %c0_70] : memref<224x512xf32, #tpu.memory_space<vmem>>, vector<8x512xf32>
    %90 = arith.mulf %88, %89 : vector<8x512xf32>
    %c168_71 = arith.constant 168 : index
    %c0_72 = arith.constant 0 : index
    %91 = vector.load %arg9[%c168_71, %c0_72] : memref<256x512xf32, #tpu.memory_space<vmem>>, vector<8x512xf32>
    tpu.vector_store %arg9[%c168_71, %c0_72], %90 {strides = array<i32>} : memref<256x512xf32, #tpu.memory_space<vmem>>, vector<8x512xf32>,
    %c448_i32 = arith.constant 448 : i32
    %92 = tpu.dynamic_rotate %0 by %c448_i32 dim 1 : vector<8x512xf32>, i32 -> vector<8x512xf32>
    %c176 = arith.constant 176 : index
    %c0_73 = arith.constant 0 : index
    %93 = vector.load %arg6[%c176, %c0_73] : memref<224x512xf32, #tpu.memory_space<vmem>>, vector<8x512xf32>
    %94 = arith.mulf %92, %93 : vector<8x512xf32>
    %c176_74 = arith.constant 176 : index
    %c0_75 = arith.constant 0 : index
    %95 = vector.load %arg9[%c176_74, %c0_75] : memref<256x512xf32, #tpu.memory_space<vmem>>, vector<8x512xf32>
    tpu.vector_store %arg9[%c176_74, %c0_75], %94 {strides = array<i32>} : memref<256x512xf32, #tpu.memory_space<vmem>>, vector<8x512xf32>,
    %c447_i32 = arith.constant 447 : i32
    %96 = tpu.dynamic_rotate %0 by %c447_i32 dim 1 : vector<8x512xf32>, i32 -> vector<8x512xf32>
    %c184 = arith.constant 184 : index
    %c0_76 = arith.constant 0 : index
    %97 = vector.load %arg6[%c184, %c0_76] : memref<224x512xf32, #tpu.memory_space<vmem>>, vector<8x512xf32>
    %98 = arith.mulf %96, %97 : vector<8x512xf32>
    %c184_77 = arith.constant 184 : index
    %c0_78 = arith.constant 0 : index
    %99 = vector.load %arg9[%c184_77, %c0_78] : memref<256x512xf32, #tpu.memory_space<vmem>>, vector<8x512xf32>
    tpu.vector_store %arg9[%c184_77, %c0_78], %98 {strides = array<i32>} : memref<256x512xf32, #tpu.memory_space<vmem>>, vector<8x512xf32>,
    %c441_i32 = arith.constant 441 : i32
    %100 = tpu.dynamic_rotate %0 by %c441_i32 dim 1 : vector<8x512xf32>, i32 -> vector<8x512xf32>
    %c192 = arith.constant 192 : index
    %c0_79 = arith.constant 0 : index
    %101 = vector.load %arg6[%c192, %c0_79] : memref<224x512xf32, #tpu.memory_space<vmem>>, vector<8x512xf32>
    %102 = arith.mulf %100, %101 : vector<8x512xf32>
    %c192_80 = arith.constant 192 : index
    %c0_81 = arith.constant 0 : index
    %103 = vector.load %arg9[%c192_80, %c0_81] : memref<256x512xf32, #tpu.memory_space<vmem>>, vector<8x512xf32>
    tpu.vector_store %arg9[%c192_80, %c0_81], %102 {strides = array<i32>} : memref<256x512xf32, #tpu.memory_space<vmem>>, vector<8x512xf32>,
    %c440_i32 = arith.constant 440 : i32
    %104 = tpu.dynamic_rotate %0 by %c440_i32 dim 1 : vector<8x512xf32>, i32 -> vector<8x512xf32>
    %c200 = arith.constant 200 : index
    %c0_82 = arith.constant 0 : index
    %105 = vector.load %arg6[%c200, %c0_82] : memref<224x512xf32, #tpu.memory_space<vmem>>, vector<8x512xf32>
    %106 = arith.mulf %104, %105 : vector<8x512xf32>
    %c200_83 = arith.constant 200 : index
    %c0_84 = arith.constant 0 : index
    %107 = vector.load %arg9[%c200_83, %c0_84] : memref<256x512xf32, #tpu.memory_space<vmem>>, vector<8x512xf32>
    tpu.vector_store %arg9[%c200_83, %c0_84], %106 {strides = array<i32>} : memref<256x512xf32, #tpu.memory_space<vmem>>, vector<8x512xf32>,
    %c439_i32 = arith.constant 439 : i32
    %108 = tpu.dynamic_rotate %0 by %c439_i32 dim 1 : vector<8x512xf32>, i32 -> vector<8x512xf32>
    %c208 = arith.constant 208 : index
    %c0_85 = arith.constant 0 : index
    %109 = vector.load %arg6[%c208, %c0_85] : memref<224x512xf32, #tpu.memory_space<vmem>>, vector<8x512xf32>
    %110 = arith.mulf %108, %109 : vector<8x512xf32>
    %c208_86 = arith.constant 208 : index
    %c0_87 = arith.constant 0 : index
    %111 = vector.load %arg9[%c208_86, %c0_87] : memref<256x512xf32, #tpu.memory_space<vmem>>, vector<8x512xf32>
    tpu.vector_store %arg9[%c208_86, %c0_87], %110 {strides = array<i32>} : memref<256x512xf32, #tpu.memory_space<vmem>>, vector<8x512xf32>,
    %c0_88 = arith.constant 0 : index
    %c0_89 = arith.constant 0 : index
    %112 = vector.load %arg9[%c0_88, %c0_89] : memref<256x512xf32, #tpu.memory_space<vmem>>, vector<256x512xf32>
    %cst_90 = arith.constant dense<0.000000e+00> : vector<8x512xf32>
    %113 = tpu.matmul %3, %112, %cst_90 {dimension_numbers = #tpu.dot_dimension_numbers<[1], [0], [0], [1], [0, 0, 1, 1], [], []>} : vector<8x256xf32>, vector<256x512xf32>, vector<8x512xf32> -> vector<8x512xf32>
    %114 = vector.broadcast %4 : vector<8x1xf32> to vector<8x512xf32>
    %115 = arith.addf %113, %114 : vector<8x512xf32>
    %cst_91 = arith.constant 2.000000e+01 : f32
    %116 = vector.broadcast %cst_91 : f32 to vector<8x512xf32>
    %117 = arith.cmpf ogt, %115, %116 : vector<8x512xf32>
    %cst_92 = arith.constant 2.000000e+01 : f32
    %118 = vector.broadcast %cst_92 : f32 to vector<8x512xf32>
    %119 = arith.minimumf %115, %118 : vector<8x512xf32>
    %120 = math.exp %119 : vector<8x512xf32>
    %cst_93 = arith.constant 1.000000e+00 : f32
    %121 = vector.broadcast %cst_93 : f32 to vector<8x512xf32>
    %122 = arith.addf %121, %120 : vector<8x512xf32>
    %123 = math.log %122 : vector<8x512xf32>
    %124 = arith.select %117, %115, %123 : vector<8x512xi1>, vector<8x512xf32>
    %125 = math.tanh %124 : vector<8x512xf32>
    %126 = arith.mulf %115, %125 : vector<8x512xf32>
    %c0_94 = arith.constant 0 : index
    %c0_95 = arith.constant 0 : index
    %127 = vector.load %arg4[%c0_94, %c0_95] : memref<8x256xf32, #tpu.memory_space<vmem>>, vector<8x256xf32>
    %c0_96 = arith.constant 0 : index
    %c0_97 = arith.constant 0 : index
    %128 = vector.load %arg5[%c0_96, %c0_97] : memref<8x1xf32, #tpu.memory_space<vmem>>, vector<8x1xf32>
    %c73_i32_98 = arith.constant 73 : i32
    %129 = tpu.dynamic_rotate %126 by %c73_i32_98 dim 1 : vector<8x512xf32>, i32 -> vector<8x512xf32>
    %c0_99 = arith.constant 0 : index
    %c0_100 = arith.constant 0 : index
    %130 = vector.load %arg6[%c0_99, %c0_100] : memref<224x512xf32, #tpu.memory_space<vmem>>, vector<8x512xf32>
    %131 = arith.mulf %129, %130 : vector<8x512xf32>
    %c0_101 = arith.constant 0 : index
    %c0_102 = arith.constant 0 : index
    %132 = vector.load %arg9[%c0_101, %c0_102] : memref<256x512xf32, #tpu.memory_space<vmem>>, vector<8x512xf32>
    tpu.vector_store %arg9[%c0_101, %c0_102], %131 {strides = array<i32>} : memref<256x512xf32, #tpu.memory_space<vmem>>, vector<8x512xf32>,
    %c72_i32_103 = arith.constant 72 : i32
    %133 = tpu.dynamic_rotate %126 by %c72_i32_103 dim 1 : vector<8x512xf32>, i32 -> vector<8x512xf32>
    %c8_104 = arith.constant 8 : index
    %c0_105 = arith.constant 0 : index
    %134 = vector.load %arg6[%c8_104, %c0_105] : memref<224x512xf32, #tpu.memory_space<vmem>>, vector<8x512xf32>
    %135 = arith.mulf %133, %134 : vector<8x512xf32>
    %c8_106 = arith.constant 8 : index
    %c0_107 = arith.constant 0 : index
    %136 = vector.load %arg9[%c8_106, %c0_107] : memref<256x512xf32, #tpu.memory_space<vmem>>, vector<8x512xf32>
    tpu.vector_store %arg9[%c8_106, %c0_107], %135 {strides = array<i32>} : memref<256x512xf32, #tpu.memory_space<vmem>>, vector<8x512xf32>,
    %c71_i32_108 = arith.constant 71 : i32
    %137 = tpu.dynamic_rotate %126 by %c71_i32_108 dim 1 : vector<8x512xf32>, i32 -> vector<8x512xf32>
    %c16_109 = arith.constant 16 : index
    %c0_110 = arith.constant 0 : index
    %138 = vector.load %arg6[%c16_109, %c0_110] : memref<224x512xf32, #tpu.memory_space<vmem>>, vector<8x512xf32>
    %139 = arith.mulf %137, %138 : vector<8x512xf32>
    %c16_111 = arith.constant 16 : index
    %c0_112 = arith.constant 0 : index
    %140 = vector.load %arg9[%c16_111, %c0_112] : memref<256x512xf32, #tpu.memory_space<vmem>>, vector<8x512xf32>
    tpu.vector_store %arg9[%c16_111, %c0_112], %139 {strides = array<i32>} : memref<256x512xf32, #tpu.memory_space<vmem>>, vector<8x512xf32>,
    %c65_i32_113 = arith.constant 65 : i32
    %141 = tpu.dynamic_rotate %126 by %c65_i32_113 dim 1 : vector<8x512xf32>, i32 -> vector<8x512xf32>
    %c24_114 = arith.constant 24 : index
    %c0_115 = arith.constant 0 : index
    %142 = vector.load %arg6[%c24_114, %c0_115] : memref<224x512xf32, #tpu.memory_space<vmem>>, vector<8x512xf32>
    %143 = arith.mulf %141, %142 : vector<8x512xf32>
    %c24_116 = arith.constant 24 : index
    %c0_117 = arith.constant 0 : index
    %144 = vector.load %arg9[%c24_116, %c0_117] : memref<256x512xf32, #tpu.memory_space<vmem>>, vector<8x512xf32>
    tpu.vector_store %arg9[%c24_116, %c0_117], %143 {strides = array<i32>} : memref<256x512xf32, #tpu.memory_space<vmem>>, vector<8x512xf32>,
    %c64_i32_118 = arith.constant 64 : i32
    %145 = tpu.dynamic_rotate %126 by %c64_i32_118 dim 1 : vector<8x512xf32>, i32 -> vector<8x512xf32>
    %c32_119 = arith.constant 32 : index
    %c0_120 = arith.constant 0 : index
    %146 = vector.load %arg6[%c32_119, %c0_120] : memref<224x512xf32, #tpu.memory_space<vmem>>, vector<8x512xf32>
    %147 = arith.mulf %145, %146 : vector<8x512xf32>
    %c32_121 = arith.constant 32 : index
    %c0_122 = arith.constant 0 : index
    %148 = vector.load %arg9[%c32_121, %c0_122] : memref<256x512xf32, #tpu.memory_space<vmem>>, vector<8x512xf32>
    tpu.vector_store %arg9[%c32_121, %c0_122], %147 {strides = array<i32>} : memref<256x512xf32, #tpu.memory_space<vmem>>, vector<8x512xf32>,
    %c63_i32_123 = arith.constant 63 : i32
    %149 = tpu.dynamic_rotate %126 by %c63_i32_123 dim 1 : vector<8x512xf32>, i32 -> vector<8x512xf32>
    %c40_124 = arith.constant 40 : index
    %c0_125 = arith.constant 0 : index
    %150 = vector.load %arg6[%c40_124, %c0_125] : memref<224x512xf32, #tpu.memory_space<vmem>>, vector<8x512xf32>
    %151 = arith.mulf %149, %150 : vector<8x512xf32>
    %c40_126 = arith.constant 40 : index
    %c0_127 = arith.constant 0 : index
    %152 = vector.load %arg9[%c40_126, %c0_127] : memref<256x512xf32, #tpu.memory_space<vmem>>, vector<8x512xf32>
    tpu.vector_store %arg9[%c40_126, %c0_127], %151 {strides = array<i32>} : memref<256x512xf32, #tpu.memory_space<vmem>>, vector<8x512xf32>,
    %c57_i32_128 = arith.constant 57 : i32
    %153 = tpu.dynamic_rotate %126 by %c57_i32_128 dim 1 : vector<8x512xf32>, i32 -> vector<8x512xf32>
    %c48_129 = arith.constant 48 : index
    %c0_130 = arith.constant 0 : index
    %154 = vector.load %arg6[%c48_129, %c0_130] : memref<224x512xf32, #tpu.memory_space<vmem>>, vector<8x512xf32>
    %155 = arith.mulf %153, %154 : vector<8x512xf32>
    %c48_131 = arith.constant 48 : index
    %c0_132 = arith.constant 0 : index
    %156 = vector.load %arg9[%c48_131, %c0_132] : memref<256x512xf32, #tpu.memory_space<vmem>>, vector<8x512xf32>
    tpu.vector_store %arg9[%c48_131, %c0_132], %155 {strides = array<i32>} : memref<256x512xf32, #tpu.memory_space<vmem>>, vector<8x512xf32>,
    %c56_i32_133 = arith.constant 56 : i32
    %157 = tpu.dynamic_rotate %126 by %c56_i32_133 dim 1 : vector<8x512xf32>, i32 -> vector<8x512xf32>
    %c56_134 = arith.constant 56 : index
    %c0_135 = arith.constant 0 : index
    %158 = vector.load %arg6[%c56_134, %c0_135] : memref<224x512xf32, #tpu.memory_space<vmem>>, vector<8x512xf32>
    %159 = arith.mulf %157, %158 : vector<8x512xf32>
    %c56_136 = arith.constant 56 : index
    %c0_137 = arith.constant 0 : index
    %160 = vector.load %arg9[%c56_136, %c0_137] : memref<256x512xf32, #tpu.memory_space<vmem>>, vector<8x512xf32>
    tpu.vector_store %arg9[%c56_136, %c0_137], %159 {strides = array<i32>} : memref<256x512xf32, #tpu.memory_space<vmem>>, vector<8x512xf32>,
    %c55_i32_138 = arith.constant 55 : i32
    %161 = tpu.dynamic_rotate %126 by %c55_i32_138 dim 1 : vector<8x512xf32>, i32 -> vector<8x512xf32>
    %c64_139 = arith.constant 64 : index
    %c0_140 = arith.constant 0 : index
    %162 = vector.load %arg6[%c64_139, %c0_140] : memref<224x512xf32, #tpu.memory_space<vmem>>, vector<8x512xf32>
    %163 = arith.mulf %161, %162 : vector<8x512xf32>
    %c64_141 = arith.constant 64 : index
    %c0_142 = arith.constant 0 : index
    %164 = vector.load %arg9[%c64_141, %c0_142] : memref<256x512xf32, #tpu.memory_space<vmem>>, vector<8x512xf32>
    tpu.vector_store %arg9[%c64_141, %c0_142], %163 {strides = array<i32>} : memref<256x512xf32, #tpu.memory_space<vmem>>, vector<8x512xf32>,
    %c9_i32_143 = arith.constant 9 : i32
    %165 = tpu.dynamic_rotate %126 by %c9_i32_143 dim 1 : vector<8x512xf32>, i32 -> vector<8x512xf32>
    %c72_144 = arith.constant 72 : index
    %c0_145 = arith.constant 0 : index
    %166 = vector.load %arg6[%c72_144, %c0_145] : memref<224x512xf32, #tpu.memory_space<vmem>>, vector<8x512xf32>
    %167 = arith.mulf %165, %166 : vector<8x512xf32>
    %c72_146 = arith.constant 72 : index
    %c0_147 = arith.constant 0 : index
    %168 = vector.load %arg9[%c72_146, %c0_147] : memref<256x512xf32, #tpu.memory_space<vmem>>, vector<8x512xf32>
    tpu.vector_store %arg9[%c72_146, %c0_147], %167 {strides = array<i32>} : memref<256x512xf32, #tpu.memory_space<vmem>>, vector<8x512xf32>,
    %c8_i32_148 = arith.constant 8 : i32
    %169 = tpu.dynamic_rotate %126 by %c8_i32_148 dim 1 : vector<8x512xf32>, i32 -> vector<8x512xf32>
    %c80_149 = arith.constant 80 : index
    %c0_150 = arith.constant 0 : index
    %170 = vector.load %arg6[%c80_149, %c0_150] : memref<224x512xf32, #tpu.memory_space<vmem>>, vector<8x512xf32>
    %171 = arith.mulf %169, %170 : vector<8x512xf32>
    %c80_151 = arith.constant 80 : index
    %c0_152 = arith.constant 0 : index
    %172 = vector.load %arg9[%c80_151, %c0_152] : memref<256x512xf32, #tpu.memory_space<vmem>>, vector<8x512xf32>
    tpu.vector_store %arg9[%c80_151, %c0_152], %171 {strides = array<i32>} : memref<256x512xf32, #tpu.memory_space<vmem>>, vector<8x512xf32>,
    %c7_i32_153 = arith.constant 7 : i32
    %173 = tpu.dynamic_rotate %126 by %c7_i32_153 dim 1 : vector<8x512xf32>, i32 -> vector<8x512xf32>
    %c88_154 = arith.constant 88 : index
    %c0_155 = arith.constant 0 : index
    %174 = vector.load %arg6[%c88_154, %c0_155] : memref<224x512xf32, #tpu.memory_space<vmem>>, vector<8x512xf32>
    %175 = arith.mulf %173, %174 : vector<8x512xf32>
    %c88_156 = arith.constant 88 : index
    %c0_157 = arith.constant 0 : index
    %176 = vector.load %arg9[%c88_156, %c0_157] : memref<256x512xf32, #tpu.memory_space<vmem>>, vector<8x512xf32>
    tpu.vector_store %arg9[%c88_156, %c0_157], %175 {strides = array<i32>} : memref<256x512xf32, #tpu.memory_space<vmem>>, vector<8x512xf32>,
    %c1_i32_158 = arith.constant 1 : i32
    %177 = tpu.dynamic_rotate %126 by %c1_i32_158 dim 1 : vector<8x512xf32>, i32 -> vector<8x512xf32>
    %c96_159 = arith.constant 96 : index
    %c0_160 = arith.constant 0 : index
    %178 = vector.load %arg6[%c96_159, %c0_160] : memref<224x512xf32, #tpu.memory_space<vmem>>, vector<8x512xf32>
    %179 = arith.mulf %177, %178 : vector<8x512xf32>
    %c96_161 = arith.constant 96 : index
    %c0_162 = arith.constant 0 : index
    %180 = vector.load %arg9[%c96_161, %c0_162] : memref<256x512xf32, #tpu.memory_space<vmem>>, vector<8x512xf32>
    tpu.vector_store %arg9[%c96_161, %c0_162], %179 {strides = array<i32>} : memref<256x512xf32, #tpu.memory_space<vmem>>, vector<8x512xf32>,
    %c104_163 = arith.constant 104 : index
    %c0_164 = arith.constant 0 : index
    %181 = vector.load %arg6[%c104_163, %c0_164] : memref<224x512xf32, #tpu.memory_space<vmem>>, vector<8x512xf32>
    %182 = arith.mulf %126, %181 : vector<8x512xf32>
    %c104_165 = arith.constant 104 : index
    %c0_166 = arith.constant 0 : index
    %183 = vector.load %arg9[%c104_165, %c0_166] : memref<256x512xf32, #tpu.memory_space<vmem>>, vector<8x512xf32>
    tpu.vector_store %arg9[%c104_165, %c0_166], %182 {strides = array<i32>} : memref<256x512xf32, #tpu.memory_space<vmem>>, vector<8x512xf32>,
    %c511_i32_167 = arith.constant 511 : i32
    %184 = tpu.dynamic_rotate %126 by %c511_i32_167 dim 1 : vector<8x512xf32>, i32 -> vector<8x512xf32>
    %c112_168 = arith.constant 112 : index
    %c0_169 = arith.constant 0 : index
    %185 = vector.load %arg6[%c112_168, %c0_169] : memref<224x512xf32, #tpu.memory_space<vmem>>, vector<8x512xf32>
    %186 = arith.mulf %184, %185 : vector<8x512xf32>
    %c112_170 = arith.constant 112 : index
    %c0_171 = arith.constant 0 : index
    %187 = vector.load %arg9[%c112_170, %c0_171] : memref<256x512xf32, #tpu.memory_space<vmem>>, vector<8x512xf32>
    tpu.vector_store %arg9[%c112_170, %c0_171], %186 {strides = array<i32>} : memref<256x512xf32, #tpu.memory_space<vmem>>, vector<8x512xf32>,
    %c505_i32_172 = arith.constant 505 : i32
    %188 = tpu.dynamic_rotate %126 by %c505_i32_172 dim 1 : vector<8x512xf32>, i32 -> vector<8x512xf32>
    %c120_173 = arith.constant 120 : index
    %c0_174 = arith.constant 0 : index
    %189 = vector.load %arg6[%c120_173, %c0_174] : memref<224x512xf32, #tpu.memory_space<vmem>>, vector<8x512xf32>
    %190 = arith.mulf %188, %189 : vector<8x512xf32>
    %c120_175 = arith.constant 120 : index
    %c0_176 = arith.constant 0 : index
    %191 = vector.load %arg9[%c120_175, %c0_176] : memref<256x512xf32, #tpu.memory_space<vmem>>, vector<8x512xf32>
    tpu.vector_store %arg9[%c120_175, %c0_176], %190 {strides = array<i32>} : memref<256x512xf32, #tpu.memory_space<vmem>>, vector<8x512xf32>,
    %c504_i32_177 = arith.constant 504 : i32
    %192 = tpu.dynamic_rotate %126 by %c504_i32_177 dim 1 : vector<8x512xf32>, i32 -> vector<8x512xf32>
    %c128_178 = arith.constant 128 : index
    %c0_179 = arith.constant 0 : index
    %193 = vector.load %arg6[%c128_178, %c0_179] : memref<224x512xf32, #tpu.memory_space<vmem>>, vector<8x512xf32>
    %194 = arith.mulf %192, %193 : vector<8x512xf32>
    %c128_180 = arith.constant 128 : index
    %c0_181 = arith.constant 0 : index
    %195 = vector.load %arg9[%c128_180, %c0_181] : memref<256x512xf32, #tpu.memory_space<vmem>>, vector<8x512xf32>
    tpu.vector_store %arg9[%c128_180, %c0_181], %194 {strides = array<i32>} : memref<256x512xf32, #tpu.memory_space<vmem>>, vector<8x512xf32>,
    %c503_i32_182 = arith.constant 503 : i32
    %196 = tpu.dynamic_rotate %126 by %c503_i32_182 dim 1 : vector<8x512xf32>, i32 -> vector<8x512xf32>
    %c136_183 = arith.constant 136 : index
    %c0_184 = arith.constant 0 : index
    %197 = vector.load %arg6[%c136_183, %c0_184] : memref<224x512xf32, #tpu.memory_space<vmem>>, vector<8x512xf32>
    %198 = arith.mulf %196, %197 : vector<8x512xf32>
    %c136_185 = arith.constant 136 : index
    %c0_186 = arith.constant 0 : index
    %199 = vector.load %arg9[%c136_185, %c0_186] : memref<256x512xf32, #tpu.memory_space<vmem>>, vector<8x512xf32>
    tpu.vector_store %arg9[%c136_185, %c0_186], %198 {strides = array<i32>} : memref<256x512xf32, #tpu.memory_space<vmem>>, vector<8x512xf32>,
    %c457_i32_187 = arith.constant 457 : i32
    %200 = tpu.dynamic_rotate %126 by %c457_i32_187 dim 1 : vector<8x512xf32>, i32 -> vector<8x512xf32>
    %c144_188 = arith.constant 144 : index
    %c0_189 = arith.constant 0 : index
    %201 = vector.load %arg6[%c144_188, %c0_189] : memref<224x512xf32, #tpu.memory_space<vmem>>, vector<8x512xf32>
    %202 = arith.mulf %200, %201 : vector<8x512xf32>
    %c144_190 = arith.constant 144 : index
    %c0_191 = arith.constant 0 : index
    %203 = vector.load %arg9[%c144_190, %c0_191] : memref<256x512xf32, #tpu.memory_space<vmem>>, vector<8x512xf32>
    tpu.vector_store %arg9[%c144_190, %c0_191], %202 {strides = array<i32>} : memref<256x512xf32, #tpu.memory_space<vmem>>, vector<8x512xf32>,
    %c456_i32_192 = arith.constant 456 : i32
    %204 = tpu.dynamic_rotate %126 by %c456_i32_192 dim 1 : vector<8x512xf32>, i32 -> vector<8x512xf32>
    %c152_193 = arith.constant 152 : index
    %c0_194 = arith.constant 0 : index
    %205 = vector.load %arg6[%c152_193, %c0_194] : memref<224x512xf32, #tpu.memory_space<vmem>>, vector<8x512xf32>
    %206 = arith.mulf %204, %205 : vector<8x512xf32>
    %c152_195 = arith.constant 152 : index
    %c0_196 = arith.constant 0 : index
    %207 = vector.load %arg9[%c152_195, %c0_196] : memref<256x512xf32, #tpu.memory_space<vmem>>, vector<8x512xf32>
    tpu.vector_store %arg9[%c152_195, %c0_196], %206 {strides = array<i32>} : memref<256x512xf32, #tpu.memory_space<vmem>>, vector<8x512xf32>,
    %c455_i32_197 = arith.constant 455 : i32
    %208 = tpu.dynamic_rotate %126 by %c455_i32_197 dim 1 : vector<8x512xf32>, i32 -> vector<8x512xf32>
    %c160_198 = arith.constant 160 : index
    %c0_199 = arith.constant 0 : index
    %209 = vector.load %arg6[%c160_198, %c0_199] : memref<224x512xf32, #tpu.memory_space<vmem>>, vector<8x512xf32>
    %210 = arith.mulf %208, %209 : vector<8x512xf32>
    %c160_200 = arith.constant 160 : index
    %c0_201 = arith.constant 0 : index
    %211 = vector.load %arg9[%c160_200, %c0_201] : memref<256x512xf32, #tpu.memory_space<vmem>>, vector<8x512xf32>
    tpu.vector_store %arg9[%c160_200, %c0_201], %210 {strides = array<i32>} : memref<256x512xf32, #tpu.memory_space<vmem>>, vector<8x512xf32>,
    %c449_i32_202 = arith.constant 449 : i32
    %212 = tpu.dynamic_rotate %126 by %c449_i32_202 dim 1 : vector<8x512xf32>, i32 -> vector<8x512xf32>
    %c168_203 = arith.constant 168 : index
    %c0_204 = arith.constant 0 : index
    %213 = vector.load %arg6[%c168_203, %c0_204] : memref<224x512xf32, #tpu.memory_space<vmem>>, vector<8x512xf32>
    %214 = arith.mulf %212, %213 : vector<8x512xf32>
    %c168_205 = arith.constant 168 : index
    %c0_206 = arith.constant 0 : index
    %215 = vector.load %arg9[%c168_205, %c0_206] : memref<256x512xf32, #tpu.memory_space<vmem>>, vector<8x512xf32>
    tpu.vector_store %arg9[%c168_205, %c0_206], %214 {strides = array<i32>} : memref<256x512xf32, #tpu.memory_space<vmem>>, vector<8x512xf32>,
    %c448_i32_207 = arith.constant 448 : i32
    %216 = tpu.dynamic_rotate %126 by %c448_i32_207 dim 1 : vector<8x512xf32>, i32 -> vector<8x512xf32>
    %c176_208 = arith.constant 176 : index
    %c0_209 = arith.constant 0 : index
    %217 = vector.load %arg6[%c176_208, %c0_209] : memref<224x512xf32, #tpu.memory_space<vmem>>, vector<8x512xf32>
    %218 = arith.mulf %216, %217 : vector<8x512xf32>
    %c176_210 = arith.constant 176 : index
    %c0_211 = arith.constant 0 : index
    %219 = vector.load %arg9[%c176_210, %c0_211] : memref<256x512xf32, #tpu.memory_space<vmem>>, vector<8x512xf32>
    tpu.vector_store %arg9[%c176_210, %c0_211], %218 {strides = array<i32>} : memref<256x512xf32, #tpu.memory_space<vmem>>, vector<8x512xf32>,
    %c447_i32_212 = arith.constant 447 : i32
    %220 = tpu.dynamic_rotate %126 by %c447_i32_212 dim 1 : vector<8x512xf32>, i32 -> vector<8x512xf32>
    %c184_213 = arith.constant 184 : index
    %c0_214 = arith.constant 0 : index
    %221 = vector.load %arg6[%c184_213, %c0_214] : memref<224x512xf32, #tpu.memory_space<vmem>>, vector<8x512xf32>
    %222 = arith.mulf %220, %221 : vector<8x512xf32>
    %c184_215 = arith.constant 184 : index
    %c0_216 = arith.constant 0 : index
    %223 = vector.load %arg9[%c184_215, %c0_216] : memref<256x512xf32, #tpu.memory_space<vmem>>, vector<8x512xf32>
    tpu.vector_store %arg9[%c184_215, %c0_216], %222 {strides = array<i32>} : memref<256x512xf32, #tpu.memory_space<vmem>>, vector<8x512xf32>,
    %c441_i32_217 = arith.constant 441 : i32
    %224 = tpu.dynamic_rotate %126 by %c441_i32_217 dim 1 : vector<8x512xf32>, i32 -> vector<8x512xf32>
    %c192_218 = arith.constant 192 : index
    %c0_219 = arith.constant 0 : index
    %225 = vector.load %arg6[%c192_218, %c0_219] : memref<224x512xf32, #tpu.memory_space<vmem>>, vector<8x512xf32>
    %226 = arith.mulf %224, %225 : vector<8x512xf32>
    %c192_220 = arith.constant 192 : index
    %c0_221 = arith.constant 0 : index
    %227 = vector.load %arg9[%c192_220, %c0_221] : memref<256x512xf32, #tpu.memory_space<vmem>>, vector<8x512xf32>
    tpu.vector_store %arg9[%c192_220, %c0_221], %226 {strides = array<i32>} : memref<256x512xf32, #tpu.memory_space<vmem>>, vector<8x512xf32>,
    %c440_i32_222 = arith.constant 440 : i32
    %228 = tpu.dynamic_rotate %126 by %c440_i32_222 dim 1 : vector<8x512xf32>, i32 -> vector<8x512xf32>
    %c200_223 = arith.constant 200 : index
    %c0_224 = arith.constant 0 : index
    %229 = vector.load %arg6[%c200_223, %c0_224] : memref<224x512xf32, #tpu.memory_space<vmem>>, vector<8x512xf32>
    %230 = arith.mulf %228, %229 : vector<8x512xf32>
    %c200_225 = arith.constant 200 : index
    %c0_226 = arith.constant 0 : index
    %231 = vector.load %arg9[%c200_225, %c0_226] : memref<256x512xf32, #tpu.memory_space<vmem>>, vector<8x512xf32>
    tpu.vector_store %arg9[%c200_225, %c0_226], %230 {strides = array<i32>} : memref<256x512xf32, #tpu.memory_space<vmem>>, vector<8x512xf32>,
    %c439_i32_227 = arith.constant 439 : i32
    %232 = tpu.dynamic_rotate %126 by %c439_i32_227 dim 1 : vector<8x512xf32>, i32 -> vector<8x512xf32>
    %c208_228 = arith.constant 208 : index
    %c0_229 = arith.constant 0 : index
    %233 = vector.load %arg6[%c208_228, %c0_229] : memref<224x512xf32, #tpu.memory_space<vmem>>, vector<8x512xf32>
    %234 = arith.mulf %232, %233 : vector<8x512xf32>
    %c208_230 = arith.constant 208 : index
    %c0_231 = arith.constant 0 : index
    %235 = vector.load %arg9[%c208_230, %c0_231] : memref<256x512xf32, #tpu.memory_space<vmem>>, vector<8x512xf32>
    tpu.vector_store %arg9[%c208_230, %c0_231], %234 {strides = array<i32>} : memref<256x512xf32, #tpu.memory_space<vmem>>, vector<8x512xf32>,
    %c0_232 = arith.constant 0 : index
    %c0_233 = arith.constant 0 : index
    %236 = vector.load %arg9[%c0_232, %c0_233] : memref<256x512xf32, #tpu.memory_space<vmem>>, vector<256x512xf32>
    %cst_234 = arith.constant dense<0.000000e+00> : vector<8x512xf32>
    %237 = tpu.matmul %127, %236, %cst_234 {dimension_numbers = #tpu.dot_dimension_numbers<[1], [0], [0], [1], [0, 0, 1, 1], [], []>} : vector<8x256xf32>, vector<256x512xf32>, vector<8x512xf32> -> vector<8x512xf32>
    %238 = vector.broadcast %128 : vector<8x1xf32> to vector<8x512xf32>
    %239 = arith.addf %237, %238 : vector<8x512xf32>
    %cst_235 = arith.constant 2.000000e+01 : f32
    %240 = vector.broadcast %cst_235 : f32 to vector<8x512xf32>
    %241 = arith.cmpf ogt, %239, %240 : vector<8x512xf32>
    %cst_236 = arith.constant 2.000000e+01 : f32
    %242 = vector.broadcast %cst_236 : f32 to vector<8x512xf32>
    %243 = arith.minimumf %239, %242 : vector<8x512xf32>
    %244 = math.exp %243 : vector<8x512xf32>
    %cst_237 = arith.constant 1.000000e+00 : f32
    %245 = vector.broadcast %cst_237 : f32 to vector<8x512xf32>
    %246 = arith.addf %245, %244 : vector<8x512xf32>
    %247 = math.log %246 : vector<8x512xf32>
    %248 = arith.select %241, %239, %247 : vector<8x512xi1>, vector<8x512xf32>
    %249 = math.tanh %248 : vector<8x512xf32>
    %250 = arith.mulf %239, %249 : vector<8x512xf32>
    %251 = arith.addf %0, %250 : vector<8x512xf32>
    %c511_i32_238 = arith.constant 511 : i32
    %252 = tpu.dynamic_rotate %251 by %c511_i32_238 dim 1 : vector<8x512xf32>, i32 -> vector<8x512xf32>
    %253 = arith.maximumf %251, %252 : vector<8x512xf32>
    %c510_i32 = arith.constant 510 : i32
    %254 = tpu.dynamic_rotate %253 by %c510_i32 dim 1 : vector<8x512xf32>, i32 -> vector<8x512xf32>
    %255 = arith.maximumf %253, %254 : vector<8x512xf32>
    %c504_i32_239 = arith.constant 504 : i32
    %256 = tpu.dynamic_rotate %255 by %c504_i32_239 dim 1 : vector<8x512xf32>, i32 -> vector<8x512xf32>
    %257 = arith.maximumf %255, %256 : vector<8x512xf32>
    %c496_i32 = arith.constant 496 : i32
    %258 = tpu.dynamic_rotate %257 by %c496_i32 dim 1 : vector<8x512xf32>, i32 -> vector<8x512xf32>
    %259 = arith.maximumf %257, %258 : vector<8x512xf32>
    %c448_i32_240 = arith.constant 448 : i32
    %260 = tpu.dynamic_rotate %259 by %c448_i32_240 dim 1 : vector<8x512xf32>, i32 -> vector<8x512xf32>
    %261 = arith.maximumf %259, %260 : vector<8x512xf32>
    %c384_i32 = arith.constant 384 : i32
    %262 = tpu.dynamic_rotate %261 by %c384_i32 dim 1 : vector<8x512xf32>, i32 -> vector<8x512xf32>
    %263 = arith.maximumf %261, %262 : vector<8x512xf32>
    %c216_241 = arith.constant 216 : index
    %c0_242 = arith.constant 0 : index
    %264 = vector.load %arg6[%c216_241, %c0_242] : memref<224x512xf32, #tpu.memory_space<vmem>>, vector<8x512xf32>
    %265 = arith.mulf %263, %264 : vector<8x512xf32>
    %cst_243 = arith.constant dense<0.000000e+00> : vector<8xf32>
    %266 = vector.multi_reduction <add>, %265, %cst_243 [1] : vector<8x512xf32> to vector<8xf32>
    %267 = vector.shape_cast %266 : vector<8xf32> to vector<8x1xf32>
    %cst_244 = arith.constant 1.250000e-01 : f32
    %268 = vector.broadcast %cst_244 : f32 to vector<8x1xf32>
    %269 = arith.mulf %267, %268 : vector<8x1xf32>
    %270 = vector.broadcast %269 : vector<8x1xf32> to vector<8x512xf32>
    %271 = arith.subf %263, %270 : vector<8x512xf32>
    %272 = arith.mulf %271, %264 : vector<8x512xf32>
    %273 = arith.mulf %272, %272 : vector<8x512xf32>
    %cst_245 = arith.constant dense<0.000000e+00> : vector<8xf32>
    %274 = vector.multi_reduction <add>, %273, %cst_245 [1] : vector<8x512xf32> to vector<8xf32>
    %275 = vector.shape_cast %274 : vector<8xf32> to vector<8x1xf32>
    %cst_246 = arith.constant 1.250000e-01 : f32
    %276 = vector.broadcast %cst_246 : f32 to vector<8x1xf32>
    %277 = arith.mulf %275, %276 : vector<8x1xf32>
    %278 = vector.broadcast %269 : vector<8x1xf32> to vector<8x512xf32>
    %279 = arith.subf %263, %278 : vector<8x512xf32>
    %cst_247 = arith.constant 9.99999974E-6 : f32
    %280 = vector.broadcast %cst_247 : f32 to vector<8x1xf32>
    %281 = arith.addf %277, %280 : vector<8x1xf32>
    %282 = math.rsqrt %281 : vector<8x1xf32>
    %283 = vector.broadcast %282 : vector<8x1xf32> to vector<8x512xf32>
    %284 = arith.mulf %279, %283 : vector<8x512xf32>
    %c0_248 = arith.constant 0 : index
    %c0_249 = arith.constant 0 : index
    %285 = vector.load %arg7[%c0_248, %c0_249] : memref<512x128xf32, #tpu.memory_space<vmem>>, vector<512x128xf32>
    %cst_250 = arith.constant dense<0.000000e+00> : vector<8x128xf32>
    %286 = tpu.matmul %284, %285, %cst_250 {dimension_numbers = #tpu.dot_dimension_numbers<[1], [0], [0], [1], [0, 0, 1, 1], [], []>} : vector<8x512xf32>, vector<512x128xf32>, vector<8x128xf32> -> vector<8x128xf32>
    %c0_251 = arith.constant 0 : index
    %c0_252 = arith.constant 0 : index
    %287 = vector.load %arg8[%c0_251, %c0_252] : memref<8x128xf32, #tpu.memory_space<vmem>>, vector<8x128xf32>
    tpu.vector_store %arg8[%c0_251, %c0_252], %286 {strides = array<i32>} : memref<8x128xf32, #tpu.memory_space<vmem>>, vector<8x128xf32>,
    return
  }
  func.func @transform_0(%arg0: i32) -> (i32, i32) {
    %c0_i32 = arith.constant 0 : i32
    %c0_i32_0 = arith.constant 0 : i32
    %c0_i32_1 = arith.constant 0 : i32
    return %c0_i32, %c0_i32_0 : i32, i32
  }
  func.func @transform_1(%arg0: i32) -> (i32, i32) {
    %c0_i32 = arith.constant 0 : i32
    %c0_i32_0 = arith.constant 0 : i32
    %c0_i32_1 = arith.constant 0 : i32
    return %c0_i32, %c0_i32_0 : i32, i32
  }
  func.func @transform_2(%arg0: i32) -> (i32, i32) {
    %c0_i32 = arith.constant 0 : i32
    %c0_i32_0 = arith.constant 0 : i32
    %c0_i32_1 = arith.constant 0 : i32
    return %c0_i32, %c0_i32_0 : i32, i32
  }
  func.func @transform_3(%arg0: i32) -> (i32, i32) {
    %c0_i32 = arith.constant 0 : i32
    %c0_i32_0 = arith.constant 0 : i32
    %c0_i32_1 = arith.constant 0 : i32
    return %c0_i32, %c0_i32_0 : i32, i32
  }
  func.func @transform_4(%arg0: i32) -> (i32, i32) {
    %c0_i32 = arith.constant 0 : i32
    %c0_i32_0 = arith.constant 0 : i32
    %c0_i32_1 = arith.constant 0 : i32
    return %c0_i32, %c0_i32_0 : i32, i32
  }
  func.func @transform_5(%arg0: i32) -> (i32, i32) {
    %c0_i32 = arith.constant 0 : i32
    %c0_i32_0 = arith.constant 0 : i32
    %c0_i32_1 = arith.constant 0 : i32
    return %c0_i32, %c0_i32_0 : i32, i32
  }
  func.func @transform_6(%arg0: i32) -> (i32, i32) {
    %c0_i32 = arith.constant 0 : i32
    %c0_i32_0 = arith.constant 0 : i32
    %c0_i32_1 = arith.constant 0 : i32
    return %c0_i32, %c0_i32_0 : i32, i32
  }
  func.func @transform_7(%arg0: i32) -> (i32, i32) {
    %c0_i32 = arith.constant 0 : i32
    %c0_i32_0 = arith.constant 0 : i32
    %c0_i32_1 = arith.constant 0 : i32
    return %c0_i32, %c0_i32_0 : i32, i32
  }
}

</mosaic_0001>

<llo_original>
// kernel: tpu_custom_call.1
$region0: #{tpu_custom_call.1}
  #allocation0 [shape = 'u32[]', space=smem, size = 0x4, offset = 0x4, fixed_abs, tag = 'smem constant byte address 0x4 - core index']
  #allocation1 [shape = 'u32[144,128]{1,0:T(1,128)}', space=vmem, size = 0x12000, scoped, tag = 'internal scratch']
  #allocation2 [shape = 'f32[256,512]{1,0:T(8,128)}', space=vmem, size = 0x80000, scoped, tag = 'scratch operand']
  %s0 = inlined_call_operand.hbm [shape: f32[8,512], index: 0, kind: input, shape index: {}]
  %s1 = inlined_call_operand.vmem [shape: f32[8,256], index: 1, kind: input, shape index: {}]
  %s2 = inlined_call_operand.vmem [shape: f32[8,1], index: 2, kind: input, shape index: {}]
  %s3 = inlined_call_operand.hbm [shape: f32[8,256], index: 3, kind: input, shape index: {}]
  %s4 = inlined_call_operand.vmem [shape: f32[8,1], index: 4, kind: input, shape index: {}]
  %s5 = inlined_call_operand.hbm [shape: f32[224,512], index: 5, kind: input, shape index: {}]
  %s6 = inlined_call_operand.hbm [shape: f32[512,128], index: 6, kind: input, shape index: {}]
  %s7 = inlined_call_operand.hbm [shape: f32[8,128], index: 7, kind: output, shape index: {}]
  %s8 = sld [smem:[#allocation0]]
  $region54: #{tpu_custom_call.1} parent=0
    _
  %s10 = ssub.s32 1, %s8
  %s11 = scalar_select 0, %s10, %s8
  $region1: #{tpu_custom_call.1} parent=0
    #allocation3 [shape = 'u8[16384]{0}', space=vmem, size = 0x4000, scoped, tag = 'input window, operand 0, single buffered']
    #allocation4 [shape = 's32[1]{0}', space=sflag, size = 0x4, scoped, tag = 'scoped memory for tpu_custom_call.1']
    #allocation5 [shape = 's32[1]{0}', space=sflag, size = 0x4, scoped, tag = 'scoped memory for tpu_custom_call.1']
    #allocation6 [shape = 'u8[8192]{0}', space=vmem, size = 0x2000, scoped, tag = 'input window, operand 3, single buffered']
    #allocation7 [shape = 's32[1]{0}', space=sflag, size = 0x4, scoped, tag = 'scoped memory for tpu_custom_call.1']
    #allocation8 [shape = 'u8[458752]{0}', space=vmem, size = 0x70000, scoped, tag = 'input window, operand 5, single buffered']
    #allocation9 [shape = 'u8[262144]{0}', space=vmem, size = 0x40000, scoped, tag = 'input window, operand 6, single buffered']
    #allocation10 [shape = 's32[1]{0}', space=sflag, size = 0x4, scoped, tag = 'scoped memory for tpu_custom_call.1']
    #allocation11 [shape = 'u8[4096]{0}', space=vmem, size = 0x1000, scoped, tag = 'output window, operand 0, single buffered']
    %12 = vsyncpa [#allocation4], 0
    %13 = vsyncpa [#allocation7], 0
    %14 = vsyncpa [#allocation10], 0
    %15 = vsyncpa [#allocation5], 0
    // Predicated region
    $region2: #{tpu_custom_call.1} parent=1 // pred_check
      _
    $region3: #{tpu_custom_call.1} parent=1 // pred_check_branch
      %17 = sbr.rel (0) target = $region5
    $region4: #{tpu_custom_call.1} parent=1 // pred_region
      %s19 = ssub.s32 512, 512
      %20 = vsyncadd [#allocation4], %s19
      %s22 = sshll.u32 [#allocation3], 4
      %s23 = int_to_ptr.vmem [resolvable:$true] %s22
      %25 = dma.hbm_to_vmem [thread:$0]  %s0, 512, %s23, [#allocation4]
    $region5: #{tpu_custom_call.1} parent=1 // pred_fallthru
      _
    // Predicated region
    $region6: #{tpu_custom_call.1} parent=1 // pred_check
      _
    $region7: #{tpu_custom_call.1} parent=1 // pred_check_branch
      %27 = sbr.rel (0) target = $region9
    $region8: #{tpu_custom_call.1} parent=1 // pred_region
      _
    $region9: #{tpu_custom_call.1} parent=1 // pred_fallthru
      _
    // Predicated region
    $region10: #{tpu_custom_call.1} parent=1 // pred_check
      _
    $region11: #{tpu_custom_call.1} parent=1 // pred_check_branch
      %29 = sbr.rel (0) target = $region13
    $region12: #{tpu_custom_call.1} parent=1 // pred_region
      _
    $region13: #{tpu_custom_call.1} parent=1 // pred_fallthru
      _
    // Predicated region
    $region14: #{tpu_custom_call.1} parent=1 // pred_check
      _
    $region15: #{tpu_custom_call.1} parent=1 // pred_check_branch
      %31 = sbr.rel (0) target = $region17
    $region16: #{tpu_custom_call.1} parent=1 // pred_region
      %s33 = ssub.s32 256, 256
      %34 = vsyncadd [#allocation7], %s33
      %s36 = sshll.u32 [#allocation6], 4
      %s37 = int_to_ptr.vmem [resolvable:$true] %s36
      %39 = dma.hbm_to_vmem [thread:$0]  %s3, 256, %s37, [#allocation7]
    $region17: #{tpu_custom_call.1} parent=1 // pred_fallthru
      _
    // Predicated region
    $region18: #{tpu_custom_call.1} parent=1 // pred_check
      _
    $region19: #{tpu_custom_call.1} parent=1 // pred_check_branch
      %41 = sbr.rel (0) target = $region21
    $region20: #{tpu_custom_call.1} parent=1 // pred_region
      _
    $region21: #{tpu_custom_call.1} parent=1 // pred_fallthru
      _
    // Predicated region
    $region22: #{tpu_custom_call.1} parent=1 // pred_check
      _
    $region23: #{tpu_custom_call.1} parent=1 // pred_check_branch
      %43 = sbr.rel (0) target = $region25
    $region24: #{tpu_custom_call.1} parent=1 // pred_region
      %s45 = ssub.s32 14336, 14336
      %46 = vsyncadd [#allocation7], %s45
      %s47 = sshll.u32 [#allocation8], 4
      %s48 = int_to_ptr.vmem [resolvable:$true] %s47
      %53 = dma.hbm_to_vmem [thread:$0]  %s5, 14336, %s48, [#allocation7], 512, 512, 32
    $region25: #{tpu_custom_call.1} parent=1 // pred_fallthru
      _
    // Predicated region
    $region26: #{tpu_custom_call.1} parent=1 // pred_check
      _
    $region27: #{tpu_custom_call.1} parent=1 // pred_check_branch
      %55 = sbr.rel (0) target = $region29
    $region28: #{tpu_custom_call.1} parent=1 // pred_region
      %s57 = ssub.s32 8192, 8192
      %58 = vsyncadd [#allocation10], %s57
      %s59 = sshll.u32 [#allocation9], 4
      %s60 = int_to_ptr.vmem [resolvable:$true] %s59
      %65 = dma.hbm_to_vmem [thread:$0]  %s6, 8192, %s60, [#allocation10], 128, 128, 8
    $region29: #{tpu_custom_call.1} parent=1 // pred_fallthru
      _
    // Predicated region
    $region30: #{tpu_custom_call.1} parent=1 // pred_check
      _
    $region31: #{tpu_custom_call.1} parent=1 // pred_check_branch
      %67 = sbr.rel (0) target = $region33
    $region32: #{tpu_custom_call.1} parent=1 // pred_region
      %68 = dma.done [#allocation4], 512
    $region33: #{tpu_custom_call.1} parent=1 // pred_fallthru
      _
    // Predicated region
    $region34: #{tpu_custom_call.1} parent=1 // pred_check
      _
    $region35: #{tpu_custom_call.1} parent=1 // pred_check_branch
      %70 = sbr.rel (0) target = $region37
    $region36: #{tpu_custom_call.1} parent=1 // pred_region
      %71 = dma.done [#allocation7], 256
    $region37: #{tpu_custom_call.1} parent=1 // pred_fallthru
      _
    // Predicated region
    $region38: #{tpu_custom_call.1} parent=1 // pred_check
      _
    $region39: #{tpu_custom_call.1} parent=1 // pred_check_branch
      %73 = sbr.rel (0) target = $region41
    $region40: #{tpu_custom_call.1} parent=1 // pred_region
      %74 = dma.done [#allocation7], 14336
    $region41: #{tpu_custom_call.1} parent=1 // pred_fallthru
      _
    // Predicated region
    $region42: #{tpu_custom_call.1} parent=1 // pred_check
      _
    $region43: #{tpu_custom_call.1} parent=1 // pred_check_branch
      %76 = sbr.rel (0) target = $region45
    $region44: #{tpu_custom_call.1} parent=1 // pred_region
      %77 = dma.done [#allocation10], 8192
    $region45: #{tpu_custom_call.1} parent=1 // pred_fallthru
      _
    %v78 = vld [vmem:[#allocation3] sm:$0xff]
    %v79 = vld [vmem:[#allocation3 + $0x8] sm:$0xff]
    %v80 = vld [vmem:[#allocation3 + $0x10] sm:$0xff]
    %v81 = vld [vmem:[#allocation3 + $0x18] sm:$0xff]
    %82 = vst [vmem:[#allocation2 + $0x360] sm:$0xff] 0.0
    %83 = vst [vmem:[#allocation2 + $0x368] sm:$0xff] 0.0
    %84 = vst [vmem:[#allocation2 + $0x370] sm:$0xff] 0.0
    %85 = vst [vmem:[#allocation2 + $0x378] sm:$0xff] 0.0
    %86 = vst [vmem:[#allocation2 + $0x380] sm:$0xff] 0.0
    %87 = vst [vmem:[#allocation2 + $0x388] sm:$0xff] 0.0
    %88 = vst [vmem:[#allocation2 + $0x390] sm:$0xff] 0.0
    %89 = vst [vmem:[#allocation2 + $0x398] sm:$0xff] 0.0
    %90 = vst [vmem:[#allocation2 + $0x3a0] sm:$0xff] 0.0
    %91 = vst [vmem:[#allocation2 + $0x3a8] sm:$0xff] 0.0
    %92 = vst [vmem:[#allocation2 + $0x3b0] sm:$0xff] 0.0
    %93 = vst [vmem:[#allocation2 + $0x3b8] sm:$0xff] 0.0
    %94 = vst [vmem:[#allocation2 + $0x3c0] sm:$0xff] 0.0
    %95 = vst [vmem:[#allocation2 + $0x3c8] sm:$0xff] 0.0
    %96 = vst [vmem:[#allocation2 + $0x3d0] sm:$0xff] 0.0
    %97 = vst [vmem:[#allocation2 + $0x3d8] sm:$0xff] 0.0
    %98 = vst [vmem:[#allocation2 + $0x3e0] sm:$0xff] 0.0
    %99 = vst [vmem:[#allocation2 + $0x3e8] sm:$0xff] 0.0
    %100 = vst [vmem:[#allocation2 + $0x3f0] sm:$0xff] 0.0
    %101 = vst [vmem:[#allocation2 + $0x3f8] sm:$0xff] 0.0
    %v102 = vld [vmem:[%s1] sm:$0xff]
    %v103 = vld [vmem:[%s1 + $0x8] sm:$0xff]
    %v104 = vld [vmem:[%s2] sm:$0xff]
    %105 = vrot.lane.b32.xlu0 %v78, 73
    %v106 = vpop.permute.xlu0 %105
    %107 = vrot.lane.b32.xlu0 %v79, 73
    %v108 = vpop.permute.xlu0 %107
    %109 = vrot.lane.b32.xlu0 %v80, 73
    %v110 = vpop.permute.xlu0 %109
    %111 = vrot.lane.b32.xlu0 %v81, 73
    %v112 = vpop.permute.xlu0 %111
    %v113 = vlaneseq
    %v114 = vand.u32 %v113, 127
    %vm115 = vcmp.lt.s32.totalorder %v114, 73
    %v116 = vsel %vm115, %v110, %v112
    %v117 = vsel %vm115, %v108, %v110
    %v118 = vsel %vm115, %v106, %v108
    %v119 = vsel %vm115, %v112, %v106
    %v120 = vld [vmem:[#allocation8] sm:$0xff]
    %v121 = vld [vmem:[#allocation8 + $0x8] sm:$0xff]
    %v122 = vld [vmem:[#allocation8 + $0x10] sm:$0xff]
    %v123 = vld [vmem:[#allocation8 + $0x18] sm:$0xff]
    %v124 = vmul.f32 %v119, %v120
    %v125 = vmul.f32 %v118, %v121
    %v126 = vmul.f32 %v117, %v122
    %v127 = vmul.f32 %v116, %v123
    %128 = vst [vmem:[#allocation2] sm:$0xff] %v124
    %129 = vst [vmem:[#allocation2 + $0x8] sm:$0xff] %v125
    %130 = vst [vmem:[#allocation2 + $0x10] sm:$0xff] %v126
    %131 = vst [vmem:[#allocation2 + $0x18] sm:$0xff] %v127
    %132 = vrot.lane.b32.xlu0 %v78, 72
    %v133 = vpop.permute.xlu0 %132
    %134 = vrot.lane.b32.xlu0 %v79, 72
    %v135 = vpop.permute.xlu0 %134
    %136 = vrot.lane.b32.xlu0 %v80, 72
    %v137 = vpop.permute.xlu0 %136
    %138 = vrot.lane.b32.xlu0 %v81, 72
    %v139 = vpop.permute.xlu0 %138
    %vm140 = vcmp.lt.s32.totalorder %v114, 72
    %v141 = vsel %vm140, %v137, %v139
    %v142 = vsel %vm140, %v135, %v137
    %v143 = vsel %vm140, %v133, %v135
    %v144 = vsel %vm140, %v139, %v133
    %v145 = vld [vmem:[#allocation8 + $0x20] sm:$0xff]
    %v146 = vld [vmem:[#allocation8 + $0x28] sm:$0xff]
    %v147 = vld [vmem:[#allocation8 + $0x30] sm:$0xff]
    %v148 = vld [vmem:[#allocation8 + $0x38] sm:$0xff]
    %v149 = vmul.f32 %v144, %v145
    %v150 = vmul.f32 %v143, %v146
    %v151 = vmul.f32 %v142, %v147
    %v152 = vmul.f32 %v141, %v148
    %153 = vst [vmem:[#allocation2 + $0x20] sm:$0xff] %v149
    %154 = vst [vmem:[#allocation2 + $0x28] sm:$0xff] %v150
    %155 = vst [vmem:[#allocation2 + $0x30] sm:$0xff] %v151
    %156 = vst [vmem:[#allocation2 + $0x38] sm:$0xff] %v152
    %157 = vrot.lane.b32.xlu0 %v78, 71
    %v158 = vpop.permute.xlu0 %157
    %159 = vrot.lane.b32.xlu0 %v79, 71
    %v160 = vpop.permute.xlu0 %159
    %161 = vrot.lane.b32.xlu0 %v80, 71
    %v162 = vpop.permute.xlu0 %161
    %163 = vrot.lane.b32.xlu0 %v81, 71
    %v164 = vpop.permute.xlu0 %163
    %vm165 = vcmp.lt.s32.totalorder %v114, 71
    %v166 = vsel %vm165, %v162, %v164
    %v167 = vsel %vm165, %v160, %v162
    %v168 = vsel %vm165, %v158, %v160
    %v169 = vsel %vm165, %v164, %v158
    %v170 = vld [vmem:[#allocation8 + $0x40] sm:$0xff]
    %v171 = vld [vmem:[#allocation8 + $0x48] sm:$0xff]
    %v172 = vld [vmem:[#allocation8 + $0x50] sm:$0xff]
    %v173 = vld [vmem:[#allocation8 + $0x58] sm:$0xff]
    %v174 = vmul.f32 %v169, %v170
    %v175 = vmul.f32 %v168, %v171
    %v176 = vmul.f32 %v167, %v172
    %v177 = vmul.f32 %v166, %v173
    %178 = vst [vmem:[#allocation2 + $0x40] sm:$0xff] %v174
    %179 = vst [vmem:[#allocation2 + $0x48] sm:$0xff] %v175
    %180 = vst [vmem:[#allocation2 + $0x50] sm:$0xff] %v176
    %181 = vst [vmem:[#allocation2 + $0x58] sm:$0xff] %v177
    %182 = vrot.lane.b32.xlu0 %v78, 65
    %v183 = vpop.permute.xlu0 %182
    %184 = vrot.lane.b32.xlu0 %v79, 65
    %v185 = vpop.permute.xlu0 %184
    %186 = vrot.lane.b32.xlu0 %v80, 65
    %v187 = vpop.permute.xlu0 %186
    %188 = vrot.lane.b32.xlu0 %v81, 65
    %v189 = vpop.permute.xlu0 %188
    %vm190 = vcmp.lt.s32.totalorder %v114, 65
    %v191 = vsel %vm190, %v187, %v189
    %v192 = vsel %vm190, %v185, %v187
    %v193 = vsel %vm190, %v183, %v185
    %v194 = vsel %vm190, %v189, %v183
    %v195 = vld [vmem:[#allocation8 + $0x60] sm:$0xff]
    %v196 = vld [vmem:[#allocation8 + $0x68] sm:$0xff]
    %v197 = vld [vmem:[#allocation8 + $0x70] sm:$0xff]
    %v198 = vld [vmem:[#allocation8 + $0x78] sm:$0xff]
    %v199 = vmul.f32 %v194, %v195
    %v200 = vmul.f32 %v193, %v196
    %v201 = vmul.f32 %v192, %v197
    %v202 = vmul.f32 %v191, %v198
    %203 = vst [vmem:[#allocation2 + $0x60] sm:$0xff] %v199
    %204 = vst [vmem:[#allocation2 + $0x68] sm:$0xff] %v200
    %205 = vst [vmem:[#allocation2 + $0x70] sm:$0xff] %v201
    %206 = vst [vmem:[#allocation2 + $0x78] sm:$0xff] %v202
    %207 = vrot.lane.b32.xlu0 %v78, 64
    %v208 = vpop.permute.xlu0 %207
    %209 = vrot.lane.b32.xlu0 %v79, 64
    %v210 = vpop.permute.xlu0 %209
    %211 = vrot.lane.b32.xlu0 %v80, 64
    %v212 = vpop.permute.xlu0 %211
    %213 = vrot.lane.b32.xlu0 %v81, 64
    %v214 = vpop.permute.xlu0 %213
    %vm215 = vcmp.lt.s32.totalorder %v114, 64
    %v216 = vsel %vm215, %v212, %v214
    %v217 = vsel %vm215, %v210, %v212
    %v218 = vsel %vm215, %v208, %v210
    %v219 = vsel %vm215, %v214, %v208
    %v220 = vld [vmem:[#allocation8 + $0x80] sm:$0xff]
    %v221 = vld [vmem:[#allocation8 + $0x88] sm:$0xff]
    %v222 = vld [vmem:[#allocation8 + $0x90] sm:$0xff]
    %v223 = vld [vmem:[#allocation8 + $0x98] sm:$0xff]
    %v224 = vmul.f32 %v219, %v220
    %v225 = vmul.f32 %v218, %v221
    %v226 = vmul.f32 %v217, %v222
    %v227 = vmul.f32 %v216, %v223
    %228 = vst [vmem:[#allocation2 + $0x80] sm:$0xff] %v224
    %229 = vst [vmem:[#allocation2 + $0x88] sm:$0xff] %v225
    %230 = vst [vmem:[#allocation2 + $0x90] sm:$0xff] %v226
    %231 = vst [vmem:[#allocation2 + $0x98] sm:$0xff] %v227
    %232 = vrot.lane.b32.xlu0 %v78, 63
    %v233 = vpop.permute.xlu0 %232
    %234 = vrot.lane.b32.xlu0 %v79, 63
    %v235 = vpop.permute.xlu0 %234
    %236 = vrot.lane.b32.xlu0 %v80, 63
    %v237 = vpop.permute.xlu0 %236
    %238 = vrot.lane.b32.xlu0 %v81, 63
    %v239 = vpop.permute.xlu0 %238
    %vm240 = vcmp.lt.s32.totalorder %v114, 63
    %v241 = vsel %vm240, %v237, %v239
    %v242 = vsel %vm240, %v235, %v237
    %v243 = vsel %vm240, %v233, %v235
    %v244 = vsel %vm240, %v239, %v233
    %v245 = vld [vmem:[#allocation8 + $0xa0] sm:$0xff]
    %v246 = vld [vmem:[#allocation8 + $0xa8] sm:$0xff]
    %v247 = vld [vmem:[#allocation8 + $0xb0] sm:$0xff]
    %v248 = vld [vmem:[#allocation8 + $0xb8] sm:$0xff]
    %v249 = vmul.f32 %v244, %v245
    %v250 = vmul.f32 %v243, %v246
    %v251 = vmul.f32 %v242, %v247
    %v252 = vmul.f32 %v241, %v248
    %253 = vst [vmem:[#allocation2 + $0xa0] sm:$0xff] %v249
    %254 = vst [vmem:[#allocation2 + $0xa8] sm:$0xff] %v250
    %255 = vst [vmem:[#allocation2 + $0xb0] sm:$0xff] %v251
    %256 = vst [vmem:[#allocation2 + $0xb8] sm:$0xff] %v252
    %257 = vrot.lane.b32.xlu0 %v78, 57
    %v258 = vpop.permute.xlu0 %257
    %259 = vrot.lane.b32.xlu0 %v79, 57
    %v260 = vpop.permute.xlu0 %259
    %261 = vrot.lane.b32.xlu0 %v80, 57
    %v262 = vpop.permute.xlu0 %261
    %263 = vrot.lane.b32.xlu0 %v81, 57
    %v264 = vpop.permute.xlu0 %263
    %vm265 = vcmp.lt.s32.totalorder %v114, 57
    %v266 = vsel %vm265, %v262, %v264
    %v267 = vsel %vm265, %v260, %v262
    %v268 = vsel %vm265, %v258, %v260
    %v269 = vsel %vm265, %v264, %v258
    %v270 = vld [vmem:[#allocation8 + $0xc0] sm:$0xff]
    %v271 = vld [vmem:[#allocation8 + $0xc8] sm:$0xff]
    %v272 = vld [vmem:[#allocation8 + $0xd0] sm:$0xff]
    %v273 = vld [vmem:[#allocation8 + $0xd8] sm:$0xff]
    %v274 = vmul.f32 %v269, %v270
    %v275 = vmul.f32 %v268, %v271
    %v276 = vmul.f32 %v267, %v272
    %v277 = vmul.f32 %v266, %v273
    %278 = vst [vmem:[#allocation2 + $0xc0] sm:$0xff] %v274
    %279 = vst [vmem:[#allocation2 + $0xc8] sm:$0xff] %v275
    %280 = vst [vmem:[#allocation2 + $0xd0] sm:$0xff] %v276
    %281 = vst [vmem:[#allocation2 + $0xd8] sm:$0xff] %v277
    %282 = vrot.lane.b32.xlu0 %v78, 56
    %v283 = vpop.permute.xlu0 %282
    %284 = vrot.lane.b32.xlu0 %v79, 56
    %v285 = vpop.permute.xlu0 %284
    %286 = vrot.lane.b32.xlu0 %v80, 56
    %v287 = vpop.permute.xlu0 %286
    %288 = vrot.lane.b32.xlu0 %v81, 56
    %v289 = vpop.permute.xlu0 %288
    %vm290 = vcmp.lt.s32.totalorder %v114, 56
    %v291 = vsel %vm290, %v287, %v289
    %v292 = vsel %vm290, %v285, %v287
    %v293 = vsel %vm290, %v283, %v285
    %v294 = vsel %vm290, %v289, %v283
    %v295 = vld [vmem:[#allocation8 + $0xe0] sm:$0xff]
    %v296 = vld [vmem:[#allocation8 + $0xe8] sm:$0xff]
    %v297 = vld [vmem:[#allocation8 + $0xf0] sm:$0xff]
    %v298 = vld [vmem:[#allocation8 + $0xf8] sm:$0xff]
    %v299 = vmul.f32 %v294, %v295
    %v300 = vmul.f32 %v293, %v296
    %v301 = vmul.f32 %v292, %v297
    %v302 = vmul.f32 %v291, %v298
    %303 = vst [vmem:[#allocation2 + $0xe0] sm:$0xff] %v299
    %304 = vst [vmem:[#allocation2 + $0xe8] sm:$0xff] %v300
    %305 = vst [vmem:[#allocation2 + $0xf0] sm:$0xff] %v301
    %306 = vst [vmem:[#allocation2 + $0xf8] sm:$0xff] %v302
    %307 = vrot.lane.b32.xlu0 %v78, 55
    %v308 = vpop.permute.xlu0 %307
    %309 = vrot.lane.b32.xlu0 %v79, 55
    %v310 = vpop.permute.xlu0 %309
    %311 = vrot.lane.b32.xlu0 %v80, 55
    %v312 = vpop.permute.xlu0 %311
    %313 = vrot.lane.b32.xlu0 %v81, 55
    %v314 = vpop.permute.xlu0 %313
    %vm315 = vcmp.lt.s32.totalorder %v114, 55
    %v316 = vsel %vm315, %v312, %v314
    %v317 = vsel %vm315, %v310, %v312
    %v318 = vsel %vm315, %v308, %v310
    %v319 = vsel %vm315, %v314, %v308
    %v320 = vld [vmem:[#allocation8 + $0x100] sm:$0xff]
    %v321 = vld [vmem:[#allocation8 + $0x108] sm:$0xff]
    %v322 = vld [vmem:[#allocation8 + $0x110] sm:$0xff]
    %v323 = vld [vmem:[#allocation8 + $0x118] sm:$0xff]
    %v324 = vmul.f32 %v319, %v320
    %v325 = vmul.f32 %v318, %v321
    %v326 = vmul.f32 %v317, %v322
    %v327 = vmul.f32 %v316, %v323
    %328 = vst [vmem:[#allocation2 + $0x100] sm:$0xff] %v324
    %329 = vst [vmem:[#allocation2 + $0x108] sm:$0xff] %v325
    %330 = vst [vmem:[#allocation2 + $0x110] sm:$0xff] %v326
    %331 = vst [vmem:[#allocation2 + $0x118] sm:$0xff] %v327
    %332 = vrot.lane.b32.xlu0 %v78, 9
    %v333 = vpop.permute.xlu0 %332
    %334 = vrot.lane.b32.xlu0 %v79, 9
    %v335 = vpop.permute.xlu0 %334
    %336 = vrot.lane.b32.xlu0 %v80, 9
    %v337 = vpop.permute.xlu0 %336
    %338 = vrot.lane.b32.xlu0 %v81, 9
    %v339 = vpop.permute.xlu0 %338
    %vm340 = vcmp.lt.s32.totalorder %v114, 9
    %v341 = vsel %vm340, %v337, %v339
    %v342 = vsel %vm340, %v335, %v337
    %v343 = vsel %vm340, %v333, %v335
    %v344 = vsel %vm340, %v339, %v333
    %v345 = vld [vmem:[#allocation8 + $0x120] sm:$0xff]
    %v346 = vld [vmem:[#allocation8 + $0x128] sm:$0xff]
    %v347 = vld [vmem:[#allocation8 + $0x130] sm:$0xff]
    %v348 = vld [vmem:[#allocation8 + $0x138] sm:$0xff]
    %v349 = vmul.f32 %v344, %v345
    %v350 = vmul.f32 %v343, %v346
    %v351 = vmul.f32 %v342, %v347
    %v352 = vmul.f32 %v341, %v348
    %353 = vst [vmem:[#allocation2 + $0x120] sm:$0xff] %v349
    %354 = vst [vmem:[#allocation2 + $0x128] sm:$0xff] %v350
    %355 = vst [vmem:[#allocation2 + $0x130] sm:$0xff] %v351
    %356 = vst [vmem:[#allocation2 + $0x138] sm:$0xff] %v352
    %357 = vrot.lane.b32.xlu0 %v78, 8
    %v358 = vpop.permute.xlu0 %357
    %359 = vrot.lane.b32.xlu0 %v79, 8
    %v360 = vpop.permute.xlu0 %359
    %361 = vrot.lane.b32.xlu0 %v80, 8
    %v362 = vpop.permute.xlu0 %361
    %363 = vrot.lane.b32.xlu0 %v81, 8
    %v364 = vpop.permute.xlu0 %363
    %vm365 = vcmp.lt.s32.totalorder %v114, 8
    %v366 = vsel %vm365, %v362, %v364
    %v367 = vsel %vm365, %v360, %v362
    %v368 = vsel %vm365, %v358, %v360
    %v369 = vsel %vm365, %v364, %v358
    %v370 = vld [vmem:[#allocation8 + $0x140] sm:$0xff]
    %v371 = vld [vmem:[#allocation8 + $0x148] sm:$0xff]
    %v372 = vld [vmem:[#allocation8 + $0x150] sm:$0xff]
    %v373 = vld [vmem:[#allocation8 + $0x158] sm:$0xff]
    %v374 = vmul.f32 %v369, %v370
    %v375 = vmul.f32 %v368, %v371
    %v376 = vmul.f32 %v367, %v372
    %v377 = vmul.f32 %v366, %v373
    %378 = vst [vmem:[#allocation2 + $0x140] sm:$0xff] %v374
    %379 = vst [vmem:[#allocation2 + $0x148] sm:$0xff] %v375
    %380 = vst [vmem:[#allocation2 + $0x150] sm:$0xff] %v376
    %381 = vst [vmem:[#allocation2 + $0x158] sm:$0xff] %v377
    %382 = vrot.lane.b32.xlu0 %v78, 7
    %v383 = vpop.permute.xlu0 %382
    %384 = vrot.lane.b32.xlu0 %v79, 7
    %v385 = vpop.permute.xlu0 %384
    %386 = vrot.lane.b32.xlu0 %v80, 7
    %v387 = vpop.permute.xlu0 %386
    %388 = vrot.lane.b32.xlu0 %v81, 7
    %v389 = vpop.permute.xlu0 %388
    %vm390 = vcmp.lt.s32.totalorder %v114, 7
    %v391 = vsel %vm390, %v387, %v389
    %v392 = vsel %vm390, %v385, %v387
    %v393 = vsel %vm390, %v383, %v385
    %v394 = vsel %vm390, %v389, %v383
    %v395 = vld [vmem:[#allocation8 + $0x160] sm:$0xff]
    %v396 = vld [vmem:[#allocation8 + $0x168] sm:$0xff]
    %v397 = vld [vmem:[#allocation8 + $0x170] sm:$0xff]
    %v398 = vld [vmem:[#allocation8 + $0x178] sm:$0xff]
    %v399 = vmul.f32 %v394, %v395
    %v400 = vmul.f32 %v393, %v396
    %v401 = vmul.f32 %v392, %v397
    %v402 = vmul.f32 %v391, %v398
    %403 = vst [vmem:[#allocation2 + $0x160] sm:$0xff] %v399
    %404 = vst [vmem:[#allocation2 + $0x168] sm:$0xff] %v400
    %405 = vst [vmem:[#allocation2 + $0x170] sm:$0xff] %v401
    %406 = vst [vmem:[#allocation2 + $0x178] sm:$0xff] %v402
    %407 = vrot.lane.b32.xlu0 %v78, 1
    %v408 = vpop.permute.xlu0 %407
    %409 = vrot.lane.b32.xlu0 %v79, 1
    %v410 = vpop.permute.xlu0 %409
    %411 = vrot.lane.b32.xlu0 %v80, 1
    %v412 = vpop.permute.xlu0 %411
    %413 = vrot.lane.b32.xlu0 %v81, 1
    %v414 = vpop.permute.xlu0 %413
    %vm415 = vcmp.lt.s32.totalorder %v114, 1
    %v416 = vsel %vm415, %v412, %v414
    %v417 = vsel %vm415, %v410, %v412
    %v418 = vsel %vm415, %v408, %v410
    %v419 = vsel %vm415, %v414, %v408
    %v420 = vld [vmem:[#allocation8 + $0x180] sm:$0xff]
    %v421 = vld [vmem:[#allocation8 + $0x188] sm:$0xff]
    %v422 = vld [vmem:[#allocation8 + $0x190] sm:$0xff]
    %v423 = vld [vmem:[#allocation8 + $0x198] sm:$0xff]
    %v424 = vmul.f32 %v419, %v420
    %v425 = vmul.f32 %v418, %v421
    %v426 = vmul.f32 %v417, %v422
    %v427 = vmul.f32 %v416, %v423
    %428 = vst [vmem:[#allocation2 + $0x180] sm:$0xff] %v424
    %429 = vst [vmem:[#allocation2 + $0x188] sm:$0xff] %v425
    %430 = vst [vmem:[#allocation2 + $0x190] sm:$0xff] %v426
    %431 = vst [vmem:[#allocation2 + $0x198] sm:$0xff] %v427
    %v432 = vld [vmem:[#allocation8 + $0x1a0] sm:$0xff]
    %v433 = vld [vmem:[#allocation8 + $0x1a8] sm:$0xff]
    %v434 = vld [vmem:[#allocation8 + $0x1b0] sm:$0xff]
    %v435 = vld [vmem:[#allocation8 + $0x1b8] sm:$0xff]
    %v436 = vmul.f32 %v78, %v432
    %v437 = vmul.f32 %v79, %v433
    %v438 = vmul.f32 %v80, %v434
    %v439 = vmul.f32 %v81, %v435
    %440 = vst [vmem:[#allocation2 + $0x1a0] sm:$0xff] %v436
    %441 = vst [vmem:[#allocation2 + $0x1a8] sm:$0xff] %v437
    %442 = vst [vmem:[#allocation2 + $0x1b0] sm:$0xff] %v438
    %443 = vst [vmem:[#allocation2 + $0x1b8] sm:$0xff] %v439
    %444 = vrot.lane.b32.xlu0 %v78, 127
    %v445 = vpop.permute.xlu0 %444
    %446 = vrot.lane.b32.xlu0 %v79, 127
    %v447 = vpop.permute.xlu0 %446
    %448 = vrot.lane.b32.xlu0 %v80, 127
    %v449 = vpop.permute.xlu0 %448
    %450 = vrot.lane.b32.xlu0 %v81, 127
    %v451 = vpop.permute.xlu0 %450
    %vm452 = vcmp.lt.s32.totalorder %v114, 127
    %v453 = vsel %vm452, %v449, %v451
    %v454 = vsel %vm452, %v447, %v449
    %v455 = vsel %vm452, %v445, %v447
    %v456 = vsel %vm452, %v451, %v445
    %v457 = vld [vmem:[#allocation8 + $0x1c0] sm:$0xff]
    %v458 = vld [vmem:[#allocation8 + $0x1c8] sm:$0xff]
    %v459 = vld [vmem:[#allocation8 + $0x1d0] sm:$0xff]
    %v460 = vld [vmem:[#allocation8 + $0x1d8] sm:$0xff]
    %v461 = vmul.f32 %v455, %v457
    %v462 = vmul.f32 %v454, %v458
    %v463 = vmul.f32 %v453, %v459
    %v464 = vmul.f32 %v456, %v460
    %465 = vst [vmem:[#allocation2 + $0x1c0] sm:$0xff] %v461
    %466 = vst [vmem:[#allocation2 + $0x1c8] sm:$0xff] %v462
    %467 = vst [vmem:[#allocation2 + $0x1d0] sm:$0xff] %v463
    %468 = vst [vmem:[#allocation2 + $0x1d8] sm:$0xff] %v464
    %469 = vrot.lane.b32.xlu0 %v78, 121
    %v470 = vpop.permute.xlu0 %469
    %471 = vrot.lane.b32.xlu0 %v79, 121
    %v472 = vpop.permute.xlu0 %471
    %473 = vrot.lane.b32.xlu0 %v80, 121
    %v474 = vpop.permute.xlu0 %473
    %475 = vrot.lane.b32.xlu0 %v81, 121
    %v476 = vpop.permute.xlu0 %475
    %vm477 = vcmp.lt.s32.totalorder %v114, 121
    %v478 = vsel %vm477, %v474, %v476
    %v479 = vsel %vm477, %v472, %v474
    %v480 = vsel %vm477, %v470, %v472
    %v481 = vsel %vm477, %v476, %v470
    %v482 = vld [vmem:[#allocation8 + $0x1e0] sm:$0xff]
    %v483 = vld [vmem:[#allocation8 + $0x1e8] sm:$0xff]
    %v484 = vld [vmem:[#allocation8 + $0x1f0] sm:$0xff]
    %v485 = vld [vmem:[#allocation8 + $0x1f8] sm:$0xff]
    %v486 = vmul.f32 %v480, %v482
    %v487 = vmul.f32 %v479, %v483
    %v488 = vmul.f32 %v478, %v484
    %v489 = vmul.f32 %v481, %v485
    %490 = vst [vmem:[#allocation2 + $0x1e0] sm:$0xff] %v486
    %491 = vst [vmem:[#allocation2 + $0x1e8] sm:$0xff] %v487
    %492 = vst [vmem:[#allocation2 + $0x1f0] sm:$0xff] %v488
    %493 = vst [vmem:[#allocation2 + $0x1f8] sm:$0xff] %v489
    %494 = vrot.lane.b32.xlu0 %v78, 120
    %v495 = vpop.permute.xlu0 %494
    %496 = vrot.lane.b32.xlu0 %v79, 120
    %v497 = vpop.permute.xlu0 %496
    %498 = vrot.lane.b32.xlu0 %v80, 120
    %v499 = vpop.permute.xlu0 %498
    %500 = vrot.lane.b32.xlu0 %v81, 120
    %v501 = vpop.permute.xlu0 %500
    %vm502 = vcmp.lt.s32.totalorder %v114, 120
    %v503 = vsel %vm502, %v499, %v501
    %v504 = vsel %vm502, %v497, %v499
    %v505 = vsel %vm502, %v495, %v497
    %v506 = vsel %vm502, %v501, %v495
    %v507 = vld [vmem:[#allocation8 + $0x200] sm:$0xff]
    %v508 = vld [vmem:[#allocation8 + $0x208] sm:$0xff]
    %v509 = vld [vmem:[#allocation8 + $0x210] sm:$0xff]
    %v510 = vld [vmem:[#allocation8 + $0x218] sm:$0xff]
    %v511 = vmul.f32 %v505, %v507
    %v512 = vmul.f32 %v504, %v508
    %v513 = vmul.f32 %v503, %v509
    %v514 = vmul.f32 %v506, %v510
    %515 = vst [vmem:[#allocation2 + $0x200] sm:$0xff] %v511
    %516 = vst [vmem:[#allocation2 + $0x208] sm:$0xff] %v512
    %517 = vst [vmem:[#allocation2 + $0x210] sm:$0xff] %v513
    %518 = vst [vmem:[#allocation2 + $0x218] sm:$0xff] %v514
    %519 = vrot.lane.b32.xlu0 %v78, 119
    %v520 = vpop.permute.xlu0 %519
    %521 = vrot.lane.b32.xlu0 %v79, 119
    %v522 = vpop.permute.xlu0 %521
    %523 = vrot.lane.b32.xlu0 %v80, 119
    %v524 = vpop.permute.xlu0 %523
    %525 = vrot.lane.b32.xlu0 %v81, 119
    %v526 = vpop.permute.xlu0 %525
    %vm527 = vcmp.lt.s32.totalorder %v114, 119
    %v528 = vsel %vm527, %v524, %v526
    %v529 = vsel %vm527, %v522, %v524
    %v530 = vsel %vm527, %v520, %v522
    %v531 = vsel %vm527, %v526, %v520
    %v532 = vld [vmem:[#allocation8 + $0x220] sm:$0xff]
    %v533 = vld [vmem:[#allocation8 + $0x228] sm:$0xff]
    %v534 = vld [vmem:[#allocation8 + $0x230] sm:$0xff]
    %v535 = vld [vmem:[#allocation8 + $0x238] sm:$0xff]
    %v536 = vmul.f32 %v530, %v532
    %v537 = vmul.f32 %v529, %v533
    %v538 = vmul.f32 %v528, %v534
    %v539 = vmul.f32 %v531, %v535
    %540 = vst [vmem:[#allocation2 + $0x220] sm:$0xff] %v536
    %541 = vst [vmem:[#allocation2 + $0x228] sm:$0xff] %v537
    %542 = vst [vmem:[#allocation2 + $0x230] sm:$0xff] %v538
    %543 = vst [vmem:[#allocation2 + $0x238] sm:$0xff] %v539
    %v544 = vld [vmem:[#allocation8 + $0x240] sm:$0xff]
    %v545 = vld [vmem:[#allocation8 + $0x248] sm:$0xff]
    %v546 = vld [vmem:[#allocation8 + $0x250] sm:$0xff]
    %v547 = vld [vmem:[#allocation8 + $0x258] sm:$0xff]
    %v548 = vmul.f32 %v118, %v544
    %v549 = vmul.f32 %v117, %v545
    %v550 = vmul.f32 %v116, %v546
    %v551 = vmul.f32 %v119, %v547
    %552 = vst [vmem:[#allocation2 + $0x240] sm:$0xff] %v548
    %553 = vst [vmem:[#allocation2 + $0x248] sm:$0xff] %v549
    %554 = vst [vmem:[#allocation2 + $0x250] sm:$0xff] %v550
    %555 = vst [vmem:[#allocation2 + $0x258] sm:$0xff] %v551
    %v556 = vld [vmem:[#allocation8 + $0x260] sm:$0xff]
    %v557 = vld [vmem:[#allocation8 + $0x268] sm:$0xff]
    %v558 = vld [vmem:[#allocation8 + $0x270] sm:$0xff]
    %v559 = vld [vmem:[#allocation8 + $0x278] sm:$0xff]
    %v560 = vmul.f32 %v143, %v556
    %v561 = vmul.f32 %v142, %v557
    %v562 = vmul.f32 %v141, %v558
    %v563 = vmul.f32 %v144, %v559
    %564 = vst [vmem:[#allocation2 + $0x260] sm:$0xff] %v560
    %565 = vst [vmem:[#allocation2 + $0x268] sm:$0xff] %v561
    %566 = vst [vmem:[#allocation2 + $0x270] sm:$0xff] %v562
    %567 = vst [vmem:[#allocation2 + $0x278] sm:$0xff] %v563
    %v568 = vld [vmem:[#allocation8 + $0x280] sm:$0xff]
    %v569 = vld [vmem:[#allocation8 + $0x288] sm:$0xff]
    %v570 = vld [vmem:[#allocation8 + $0x290] sm:$0xff]
    %v571 = vld [vmem:[#allocation8 + $0x298] sm:$0xff]
    %v572 = vmul.f32 %v168, %v568
    %v573 = vmul.f32 %v167, %v569
    %v574 = vmul.f32 %v166, %v570
    %v575 = vmul.f32 %v169, %v571
    %576 = vst [vmem:[#allocation2 + $0x280] sm:$0xff] %v572
    %577 = vst [vmem:[#allocation2 + $0x288] sm:$0xff] %v573
    %578 = vst [vmem:[#allocation2 + $0x290] sm:$0xff] %v574
    %579 = vst [vmem:[#allocation2 + $0x298] sm:$0xff] %v575
    %v580 = vld [vmem:[#allocation8 + $0x2a0] sm:$0xff]
    %v581 = vld [vmem:[#allocation8 + $0x2a8] sm:$0xff]
    %v582 = vld [vmem:[#allocation8 + $0x2b0] sm:$0xff]
    %v583 = vld [vmem:[#allocation8 + $0x2b8] sm:$0xff]
    %v584 = vmul.f32 %v193, %v580
    %v585 = vmul.f32 %v192, %v581
    %v586 = vmul.f32 %v191, %v582
    %v587 = vmul.f32 %v194, %v583
    %588 = vst [vmem:[#allocation2 + $0x2a0] sm:$0xff] %v584
    %589 = vst [vmem:[#allocation2 + $0x2a8] sm:$0xff] %v585
    %590 = vst [vmem:[#allocation2 + $0x2b0] sm:$0xff] %v586
    %591 = vst [vmem:[#allocation2 + $0x2b8] sm:$0xff] %v587
    %v592 = vld [vmem:[#allocation8 + $0x2c0] sm:$0xff]
    %v593 = vld [vmem:[#allocation8 + $0x2c8] sm:$0xff]
    %v594 = vld [vmem:[#allocation8 + $0x2d0] sm:$0xff]
    %v595 = vld [vmem:[#allocation8 + $0x2d8] sm:$0xff]
    %v596 = vmul.f32 %v218, %v592
    %v597 = vmul.f32 %v217, %v593
    %v598 = vmul.f32 %v216, %v594
    %v599 = vmul.f32 %v219, %v595
    %600 = vst [vmem:[#allocation2 + $0x2c0] sm:$0xff] %v596
    %601 = vst [vmem:[#allocation2 + $0x2c8] sm:$0xff] %v597
    %602 = vst [vmem:[#allocation2 + $0x2d0] sm:$0xff] %v598
    %603 = vst [vmem:[#allocation2 + $0x2d8] sm:$0xff] %v599
    %v604 = vld [vmem:[#allocation8 + $0x2e0] sm:$0xff]
    %v605 = vld [vmem:[#allocation8 + $0x2e8] sm:$0xff]
    %v606 = vld [vmem:[#allocation8 + $0x2f0] sm:$0xff]
    %v607 = vld [vmem:[#allocation8 + $0x2f8] sm:$0xff]
    %v608 = vmul.f32 %v243, %v604
    %v609 = vmul.f32 %v242, %v605
    %v610 = vmul.f32 %v241, %v606
    %v611 = vmul.f32 %v244, %v607
    %612 = vst [vmem:[#allocation2 + $0x2e0] sm:$0xff] %v608
    %613 = vst [vmem:[#allocation2 + $0x2e8] sm:$0xff] %v609
    %614 = vst [vmem:[#allocation2 + $0x2f0] sm:$0xff] %v610
    %615 = vst [vmem:[#allocation2 + $0x2f8] sm:$0xff] %v611
    %v616 = vld [vmem:[#allocation8 + $0x300] sm:$0xff]
    %v617 = vld [vmem:[#allocation8 + $0x308] sm:$0xff]
    %v618 = vld [vmem:[#allocation8 + $0x310] sm:$0xff]
    %v619 = vld [vmem:[#allocation8 + $0x318] sm:$0xff]
    %v620 = vmul.f32 %v268, %v616
    %v621 = vmul.f32 %v267, %v617
    %v622 = vmul.f32 %v266, %v618
    %v623 = vmul.f32 %v269, %v619
    %624 = vst [vmem:[#allocation2 + $0x300] sm:$0xff] %v620
    %625 = vst [vmem:[#allocation2 + $0x308] sm:$0xff] %v621
    %626 = vst [vmem:[#allocation2 + $0x310] sm:$0xff] %v622
    %627 = vst [vmem:[#allocation2 + $0x318] sm:$0xff] %v623
    %v628 = vld [vmem:[#allocation8 + $0x320] sm:$0xff]
    %v629 = vld [vmem:[#allocation8 + $0x328] sm:$0xff]
    %v630 = vld [vmem:[#allocation8 + $0x330] sm:$0xff]
    %v631 = vld [vmem:[#allocation8 + $0x338] sm:$0xff]
    %v632 = vmul.f32 %v293, %v628
    %v633 = vmul.f32 %v292, %v629
    %v634 = vmul.f32 %v291, %v630
    %v635 = vmul.f32 %v294, %v631
    %636 = vst [vmem:[#allocation2 + $0x320] sm:$0xff] %v632
    %637 = vst [vmem:[#allocation2 + $0x328] sm:$0xff] %v633
    %638 = vst [vmem:[#allocation2 + $0x330] sm:$0xff] %v634
    %639 = vst [vmem:[#allocation2 + $0x338] sm:$0xff] %v635
    %v640 = vld [vmem:[#allocation8 + $0x340] sm:$0xff]
    %v641 = vld [vmem:[#allocation8 + $0x348] sm:$0xff]
    %v642 = vld [vmem:[#allocation8 + $0x350] sm:$0xff]
    %v643 = vld [vmem:[#allocation8 + $0x358] sm:$0xff]
    %v644 = vmul.f32 %v318, %v640
    %v645 = vmul.f32 %v317, %v641
    %v646 = vmul.f32 %v316, %v642
    %v647 = vmul.f32 %v319, %v643
    %648 = vst [vmem:[#allocation2 + $0x340] sm:$0xff] %v644
    %649 = vst [vmem:[#allocation2 + $0x348] sm:$0xff] %v645
    %650 = vst [vmem:[#allocation2 + $0x350] sm:$0xff] %v646
    %651 = vst [vmem:[#allocation2 + $0x358] sm:$0xff] %v647
    %v652 = vld [vmem:[#allocation2] sm:$0xff]
    %v653 = vld [vmem:[#allocation2 + $0x8] sm:$0xff]
    %v654 = vld [vmem:[#allocation2 + $0x10] sm:$0xff]
    %v655 = vld [vmem:[#allocation2 + $0x18] sm:$0xff]
    %v656 = vld [vmem:[#allocation2 + $0x20] sm:$0xff]
    %v657 = vld [vmem:[#allocation2 + $0x28] sm:$0xff]
    %v658 = vld [vmem:[#allocation2 + $0x30] sm:$0xff]
    %v659 = vld [vmem:[#allocation2 + $0x38] sm:$0xff]
    %v660 = vld [vmem:[#allocation2 + $0x40] sm:$0xff]
    %v661 = vld [vmem:[#allocation2 + $0x48] sm:$0xff]
    %v662 = vld [vmem:[#allocation2 + $0x50] sm:$0xff]
    %v663 = vld [vmem:[#allocation2 + $0x58] sm:$0xff]
    %v664 = vld [vmem:[#allocation2 + $0x60] sm:$0xff]
    %v665 = vld [vmem:[#allocation2 + $0x68] sm:$0xff]
    %v666 = vld [vmem:[#allocation2 + $0x70] sm:$0xff]
    %v667 = vld [vmem:[#allocation2 + $0x78] sm:$0xff]
    %v668 = vld [vmem:[#allocation2 + $0x80] sm:$0xff]
    %v669 = vld [vmem:[#allocation2 + $0x88] sm:$0xff]
    %v670 = vld [vmem:[#allocation2 + $0x90] sm:$0xff]
    %v671 = vld [vmem:[#allocation2 + $0x98] sm:$0xff]
    %v672 = vld [vmem:[#allocation2 + $0xa0] sm:$0xff]
    %v673 = vld [vmem:[#allocation2 + $0xa8] sm:$0xff]
    %v674 = vld [vmem:[#allocation2 + $0xb0] sm:$0xff]
    %v675 = vld [vmem:[#allocation2 + $0xb8] sm:$0xff]
    %v676 = vld [vmem:[#allocation2 + $0xc0] sm:$0xff]
    %v677 = vld [vmem:[#allocation2 + $0xc8] sm:$0xff]
    %v678 = vld [vmem:[#allocation2 + $0xd0] sm:$0xff]
    %v679 = vld [vmem:[#allocation2 + $0xd8] sm:$0xff]
    %v680 = vld [vmem:[#allocation2 + $0xe0] sm:$0xff]
    %v681 = vld [vmem:[#allocation2 + $0xe8] sm:$0xff]
    %v682 = vld [vmem:[#allocation2 + $0xf0] sm:$0xff]
    %v683 = vld [vmem:[#allocation2 + $0xf8] sm:$0xff]
    %v684 = vld [vmem:[#allocation2 + $0x100] sm:$0xff]
    %v685 = vld [vmem:[#allocation2 + $0x108] sm:$0xff]
    %v686 = vld [vmem:[#allocation2 + $0x110] sm:$0xff]
    %v687 = vld [vmem:[#allocation2 + $0x118] sm:$0xff]
    %v688 = vld [vmem:[#allocation2 + $0x120] sm:$0xff]
    %v689 = vld [vmem:[#allocation2 + $0x128] sm:$0xff]
    %v690 = vld [vmem:[#allocation2 + $0x130] sm:$0xff]
    %v691 = vld [vmem:[#allocation2 + $0x138] sm:$0xff]
    %v692 = vld [vmem:[#allocation2 + $0x140] sm:$0xff]
    %v693 = vld [vmem:[#allocation2 + $0x148] sm:$0xff]
    %v694 = vld [vmem:[#allocation2 + $0x150] sm:$0xff]
    %v695 = vld [vmem:[#allocation2 + $0x158] sm:$0xff]
    %v696 = vld [vmem:[#allocation2 + $0x160] sm:$0xff]
    %v697 = vld [vmem:[#allocation2 + $0x168] sm:$0xff]
    %v698 = vld [vmem:[#allocation2 + $0x170] sm:$0xff]
    %v699 = vld [vmem:[#allocation2 + $0x178] sm:$0xff]
    %v700 = vld [vmem:[#allocation2 + $0x180] sm:$0xff]
    %v701 = vld [vmem:[#allocation2 + $0x188] sm:$0xff]
    %v702 = vld [vmem:[#allocation2 + $0x190] sm:$0xff]
    %v703 = vld [vmem:[#allocation2 + $0x198] sm:$0xff]
    %v704 = vld [vmem:[#allocation2 + $0x1a0] sm:$0xff]
    %v705 = vld [vmem:[#allocation2 + $0x1a8] sm:$0xff]
    %v706 = vld [vmem:[#allocation2 + $0x1b0] sm:$0xff]
    %v707 = vld [vmem:[#allocation2 + $0x1b8] sm:$0xff]
    %v708 = vld [vmem:[#allocation2 + $0x1c0] sm:$0xff]
    %v709 = vld [vmem:[#allocation2 + $0x1c8] sm:$0xff]
    %v710 = vld [vmem:[#allocation2 + $0x1d0] sm:$0xff]
    %v711 = vld [vmem:[#allocation2 + $0x1d8] sm:$0xff]
    %v712 = vld [vmem:[#allocation2 + $0x1e0] sm:$0xff]
    %v713 = vld [vmem:[#allocation2 + $0x1e8] sm:$0xff]
    %v714 = vld [vmem:[#allocation2 + $0x1f0] sm:$0xff]
    %v715 = vld [vmem:[#allocation2 + $0x1f8] sm:$0xff]
    %v716 = vld [vmem:[#allocation2 + $0x200] sm:$0xff]
    %v717 = vld [vmem:[#allocation2 + $0x208] sm:$0xff]
    %v718 = vld [vmem:[#allocation2 + $0x210] sm:$0xff]
    %v719 = vld [vmem:[#allocation2 + $0x218] sm:$0xff]
    %v720 = vld [vmem:[#allocation2 + $0x220] sm:$0xff]
    %v721 = vld [vmem:[#allocation2 + $0x228] sm:$0xff]
    %v722 = vld [vmem:[#allocation2 + $0x230] sm:$0xff]
    %v723 = vld [vmem:[#allocation2 + $0x238] sm:$0xff]
    %v724 = vld [vmem:[#allocation2 + $0x240] sm:$0xff]
    %v725 = vld [vmem:[#allocation2 + $0x248] sm:$0xff]
    %v726 = vld [vmem:[#allocation2 + $0x250] sm:$0xff]
    %v727 = vld [vmem:[#allocation2 + $0x258] sm:$0xff]
    %v728 = vld [vmem:[#allocation2 + $0x260] sm:$0xff]
    %v729 = vld [vmem:[#allocation2 + $0x268] sm:$0xff]
    %v730 = vld [vmem:[#allocation2 + $0x270] sm:$0xff]
    %v731 = vld [vmem:[#allocation2 + $0x278] sm:$0xff]
    %v732 = vld [vmem:[#allocation2 + $0x280] sm:$0xff]
    %v733 = vld [vmem:[#allocation2 + $0x288] sm:$0xff]
    %v734 = vld [vmem:[#allocation2 + $0x290] sm:$0xff]
    %v735 = vld [vmem:[#allocation2 + $0x298] sm:$0xff]
    %v736 = vld [vmem:[#allocation2 + $0x2a0] sm:$0xff]
    %v737 = vld [vmem:[#allocation2 + $0x2a8] sm:$0xff]
    %v738 = vld [vmem:[#allocation2 + $0x2b0] sm:$0xff]
    %v739 = vld [vmem:[#allocation2 + $0x2b8] sm:$0xff]
    %v740 = vld [vmem:[#allocation2 + $0x2c0] sm:$0xff]
    %v741 = vld [vmem:[#allocation2 + $0x2c8] sm:$0xff]
    %v742 = vld [vmem:[#allocation2 + $0x2d0] sm:$0xff]
    %v743 = vld [vmem:[#allocation2 + $0x2d8] sm:$0xff]
    %v744 = vld [vmem:[#allocation2 + $0x2e0] sm:$0xff]
    %v745 = vld [vmem:[#allocation2 + $0x2e8] sm:$0xff]
    %v746 = vld [vmem:[#allocation2 + $0x2f0] sm:$0xff]
    %v747 = vld [vmem:[#allocation2 + $0x2f8] sm:$0xff]
    %v748 = vld [vmem:[#allocation2 + $0x300] sm:$0xff]
    %v749 = vld [vmem:[#allocation2 + $0x308] sm:$0xff]
    %v750 = vld [vmem:[#allocation2 + $0x310] sm:$0xff]
    %v751 = vld [vmem:[#allocation2 + $0x318] sm:$0xff]
    %v752 = vld [vmem:[#allocation2 + $0x320] sm:$0xff]
    %v753 = vld [vmem:[#allocation2 + $0x328] sm:$0xff]
    %v754 = vld [vmem:[#allocation2 + $0x330] sm:$0xff]
    %v755 = vld [vmem:[#allocation2 + $0x338] sm:$0xff]
    %v756 = vld [vmem:[#allocation2 + $0x340] sm:$0xff]
    %v757 = vld [vmem:[#allocation2 + $0x348] sm:$0xff]
    %v758 = vld [vmem:[#allocation2 + $0x350] sm:$0xff]
    %v759 = vld [vmem:[#allocation2 + $0x358] sm:$0xff]
    %v760 = vld [vmem:[#allocation2 + $0x360] sm:$0xff]
    %v761 = vld [vmem:[#allocation2 + $0x368] sm:$0xff]
    %v762 = vld [vmem:[#allocation2 + $0x370] sm:$0xff]
    %v763 = vld [vmem:[#allocation2 + $0x378] sm:$0xff]
    %v764 = vld [vmem:[#allocation2 + $0x380] sm:$0xff]
    %v765 = vld [vmem:[#allocation2 + $0x388] sm:$0xff]
    %v766 = vld [vmem:[#allocation2 + $0x390] sm:$0xff]
    %v767 = vld [vmem:[#allocation2 + $0x398] sm:$0xff]
    %v768 = vld [vmem:[#allocation2 + $0x3a0] sm:$0xff]
    %v769 = vld [vmem:[#allocation2 + $0x3a8] sm:$0xff]
    %v770 = vld [vmem:[#allocation2 + $0x3b0] sm:$0xff]
    %v771 = vld [vmem:[#allocation2 + $0x3b8] sm:$0xff]
    %v772 = vld [vmem:[#allocation2 + $0x3c0] sm:$0xff]
    %v773 = vld [vmem:[#allocation2 + $0x3c8] sm:$0xff]
    %v774 = vld [vmem:[#allocation2 + $0x3d0] sm:$0xff]
    %v775 = vld [vmem:[#allocation2 + $0x3d8] sm:$0xff]
    %v776 = vld [vmem:[#allocation2 + $0x3e0] sm:$0xff]
    %v777 = vld [vmem:[#allocation2 + $0x3e8] sm:$0xff]
    %v778 = vld [vmem:[#allocation2 + $0x3f0] sm:$0xff]
    %v779 = vld [vmem:[#allocation2 + $0x3f8] sm:$0xff]
    %781 = vset.pattern.permute.xlu0 0
    %782 = vperm.xlu0 %781, %v104
    %v783 = vpop.permute.xlu0 %782
    %785 = vmatprep.subr.mxu0 %v713
    %786 = vmatpush1.msra.mxu0 %v712
    %787 = vmatprep.subr.mxu0 %v709
    %788 = vmatpush1.msra.mxu0 %v708
    %789 = vmatprep.subr.mxu0 %v705
    %790 = vmatpush1.msra.mxu0 %v704
    %791 = vmatprep.subr.mxu0 %v701
    %792 = vmatpush1.msra.mxu0 %v700
    %793 = vmatprep.subr.mxu0 %v697
    %794 = vmatpush1.msra.mxu0 %v696
    %795 = vmatprep.subr.mxu0 %v693
    %796 = vmatpush1.msra.mxu0 %v692
    %797 = vmatprep.subr.mxu0 %v689
    %798 = vmatpush1.msra.mxu0 %v688
    %799 = vmatprep.subr.mxu0 %v685
    %800 = vmatpush1.msra.mxu0 %v684
    %801 = vmatprep.subr.mxu0 %v681
    %802 = vmatpush1.msra.mxu0 %v680
    %803 = vmatprep.subr.mxu0 %v677
    %804 = vmatpush1.msra.mxu0 %v676
    %805 = vmatprep.subr.mxu0 %v673
    %806 = vmatpush1.msra.mxu0 %v672
    %807 = vmatprep.subr.mxu0 %v669
    %808 = vmatpush1.msra.mxu0 %v668
    %809 = vmatprep.subr.mxu0 %v665
    %810 = vmatpush1.msra.mxu0 %v664
    %811 = vmatprep.subr.mxu0 %v661
    %812 = vmatpush1.msra.mxu0 %v660
    %813 = vmatprep.subr.mxu0 %v657
    %814 = vmatpush1.msra.mxu0 %v656
    %815 = vmatprep.subr.mxu0 %v653
    %816 = vmatpush1.msra.mxu0 %v652
    %817 = vmatprep.subr.mxu0 %v777
    %818 = vmatpush2.msra.mxu0 %v776
    %819 = vmatprep.subr.mxu0 %v773
    %820 = vmatpush2.msra.mxu0 %v772
    %821 = vmatprep.subr.mxu0 %v769
    %822 = vmatpush2.msra.mxu0 %v768
    %823 = vmatprep.subr.mxu0 %v765
    %824 = vmatpush2.msra.mxu0 %v764
    %825 = vmatprep.subr.mxu0 %v761
    %826 = vmatpush2.msra.mxu0 %v760
    %827 = vmatprep.subr.mxu0 %v757
    %828 = vmatpush2.msra.mxu0 %v756
    %829 = vmatprep.subr.mxu0 %v753
    %830 = vmatpush2.msra.mxu0 %v752
    %831 = vmatprep.subr.mxu0 %v749
    %832 = vmatpush2.msra.mxu0 %v748
    %833 = vmatprep.subr.mxu0 %v745
    %834 = vmatpush2.msra.mxu0 %v744
    %835 = vmatprep.subr.mxu0 %v741
    %836 = vmatpush2.msra.mxu0 %v740
    %837 = vmatprep.subr.mxu0 %v737
    %838 = vmatpush2.msra.mxu0 %v736
    %839 = vmatprep.subr.mxu0 %v733
    %840 = vmatpush2.msra.mxu0 %v732
    %841 = vmatprep.subr.mxu0 %v729
    %842 = vmatpush2.msra.mxu0 %v728
    %843 = vmatprep.subr.mxu0 %v725
    %844 = vmatpush2.msra.mxu0 %v724
    %845 = vmatprep.subr.mxu0 %v721
    %846 = vmatpush2.msra.mxu0 %v720
    %847 = vmatprep.subr.mxu0 %v717
    %848 = vmatpush2.msra.mxu0 %v716
    %849 = vmatprep.mubr.f32.mxu0 %v103
    %850 = vmatmul.mubr.f32.gmra.mxu0 %v102
    %v851 = vpop.f32.mrf.mxu0
    %v852 = vadd.f32 %v783, %v851
    %v853 = vpop.f32.mrf.mxu0
    %v854 = vadd.f32 %v783, %v853
    %855 = vdwg.mxu0
    %856 = vmatprep.subr.mxu0 %v715
    %857 = vmatpush1.msra.mxu0 %v714
    %858 = vmatprep.subr.mxu0 %v711
    %859 = vmatpush1.msra.mxu0 %v710
    %860 = vmatprep.subr.mxu0 %v707
    %861 = vmatpush1.msra.mxu0 %v706
    %862 = vmatprep.subr.mxu0 %v703
    %863 = vmatpush1.msra.mxu0 %v702
    %864 = vmatprep.subr.mxu0 %v699
    %865 = vmatpush1.msra.mxu0 %v698
    %866 = vmatprep.subr.mxu0 %v695
    %867 = vmatpush1.msra.mxu0 %v694
    %868 = vmatprep.subr.mxu0 %v691
    %869 = vmatpush1.msra.mxu0 %v690
    %870 = vmatprep.subr.mxu0 %v687
    %871 = vmatpush1.msra.mxu0 %v686
    %872 = vmatprep.subr.mxu0 %v683
    %873 = vmatpush1.msra.mxu0 %v682
    %874 = vmatprep.subr.mxu0 %v679
    %875 = vmatpush1.msra.mxu0 %v678
    %876 = vmatprep.subr.mxu0 %v675
    %877 = vmatpush1.msra.mxu0 %v674
    %878 = vmatprep.subr.mxu0 %v671
    %879 = vmatpush1.msra.mxu0 %v670
    %880 = vmatprep.subr.mxu0 %v667
    %881 = vmatpush1.msra.mxu0 %v666
    %882 = vmatprep.subr.mxu0 %v663
    %883 = vmatpush1.msra.mxu0 %v662
    %884 = vmatprep.subr.mxu0 %v659
    %885 = vmatpush1.msra.mxu0 %v658
    %886 = vmatprep.subr.mxu0 %v655
    %887 = vmatpush1.msra.mxu0 %v654
    %888 = vmatprep.subr.mxu0 %v779
    %889 = vmatpush2.msra.mxu0 %v778
    %890 = vmatprep.subr.mxu0 %v775
    %891 = vmatpush2.msra.mxu0 %v774
    %892 = vmatprep.subr.mxu0 %v771
    %893 = vmatpush2.msra.mxu0 %v770
    %894 = vmatprep.subr.mxu0 %v767
    %895 = vmatpush2.msra.mxu0 %v766
    %896 = vmatprep.subr.mxu0 %v763
    %897 = vmatpush2.msra.mxu0 %v762
    %898 = vmatprep.subr.mxu0 %v759
    %899 = vmatpush2.msra.mxu0 %v758
    %900 = vmatprep.subr.mxu0 %v755
    %901 = vmatpush2.msra.mxu0 %v754
    %902 = vmatprep.subr.mxu0 %v751
    %903 = vmatpush2.msra.mxu0 %v750
    %904 = vmatprep.subr.mxu0 %v747
    %905 = vmatpush2.msra.mxu0 %v746
    %906 = vmatprep.subr.mxu0 %v743
    %907 = vmatpush2.msra.mxu0 %v742
    %908 = vmatprep.subr.mxu0 %v739
    %909 = vmatpush2.msra.mxu0 %v738
    %910 = vmatprep.subr.mxu0 %v735
    %911 = vmatpush2.msra.mxu0 %v734
    %912 = vmatprep.subr.mxu0 %v731
    %913 = vmatpush2.msra.mxu0 %v730
    %914 = vmatprep.subr.mxu0 %v727
    %915 = vmatpush2.msra.mxu0 %v726
    %916 = vmatprep.subr.mxu0 %v723
    %917 = vmatpush2.msra.mxu0 %v722
    %918 = vmatprep.subr.mxu0 %v719
    %919 = vmatpush2.msra.mxu0 %v718
    %920 = vmatprep.mubr.f32.mxu0 %v103
    %921 = vmatmul.mubr.f32.gmra.mxu0 %v102
    %v922 = vpop.f32.mrf.mxu0
    %v923 = vadd.f32 %v783, %v922
    %v924 = vpop.f32.mrf.mxu0
    %v925 = vadd.f32 %v783, %v924
    %926 = vdwg.mxu0
    %vm927 = vcmp.gt.f32.partialorder %v852, 20.0
    %vm928 = vcmp.gt.f32.partialorder %v854, 20.0
    %vm929 = vcmp.gt.f32.partialorder %v923, 20.0
    %vm930 = vcmp.gt.f32.partialorder %v925, 20.0
    %v931 = vmin.f32 %v852, 20.0
    %v932 = vmin.f32 %v854, 20.0
    %v933 = vmin.f32 %v923, 20.0
    %v934 = vmin.f32 %v925, 20.0
    %v935 = vmul.f32 %v931, 1.442695
    %v936 = vpow.pop %v935
    %v937 = vmul.f32 %v932, 1.442695
    %v938 = vpow.pop %v937
    %v939 = vmul.f32 %v933, 1.442695
    %v940 = vpow.pop %v939
    %v941 = vmul.f32 %v934, 1.442695
    %v942 = vpow.pop %v941
    %v943 = vadd.f32 %v936, 1.0
    %v944 = vadd.f32 %v938, 1.0
    %v945 = vadd.f32 %v940, 1.0
    %v946 = vadd.f32 %v942, 1.0
    %v947 = vlog2.pop %v943
    %v948 = vmul.f32 %v947, 0.6931472
    %v949 = vlog2.pop %v944
    %v950 = vmul.f32 %v949, 0.6931472
    %v951 = vlog2.pop %v945
    %v952 = vmul.f32 %v951, 0.6931472
    %v953 = vlog2.pop %v946
    %v954 = vmul.f32 %v953, 0.6931472
    %v955 = vsel %vm927, %v852, %v948
    %v956 = vsel %vm928, %v854, %v950
    %v957 = vsel %vm929, %v923, %v952
    %v958 = vsel %vm930, %v925, %v954
    %v959 = vtanh.pop %v955
    %v960 = vtanh.pop %v956
    %v961 = vtanh.pop %v957
    %v962 = vtanh.pop %v958
    %v963 = vmul.f32 %v852, %v959
    %v964 = vmul.f32 %v854, %v960
    %v965 = vmul.f32 %v923, %v961
    %v966 = vmul.f32 %v925, %v962
    %v967 = vld [vmem:[#allocation6] sm:$0xff]
    %v968 = vld [vmem:[#allocation6 + $0x8] sm:$0xff]
    %v969 = vld [vmem:[%s4] sm:$0xff]
    %970 = vrot.lane.b32.xlu0 %v963, 73
    %v971 = vpop.permute.xlu0 %970
    %972 = vrot.lane.b32.xlu0 %v964, 73
    %v973 = vpop.permute.xlu0 %972
    %974 = vrot.lane.b32.xlu0 %v965, 73
    %v975 = vpop.permute.xlu0 %974
    %976 = vrot.lane.b32.xlu0 %v966, 73
    %v977 = vpop.permute.xlu0 %976
    %v978 = vsel %vm115, %v975, %v977
    %v979 = vsel %vm115, %v973, %v975
    %v980 = vsel %vm115, %v971, %v973
    %v981 = vsel %vm115, %v977, %v971
    %v982 = vld [vmem:[#allocation8] sm:$0xff]
    %v983 = vld [vmem:[#allocation8 + $0x8] sm:$0xff]
    %v984 = vld [vmem:[#allocation8 + $0x10] sm:$0xff]
    %v985 = vld [vmem:[#allocation8 + $0x18] sm:$0xff]
    %v986 = vmul.f32 %v981, %v982
    %v987 = vmul.f32 %v980, %v983
    %v988 = vmul.f32 %v979, %v984
    %v989 = vmul.f32 %v978, %v985
    %990 = vst [vmem:[#allocation2] sm:$0xff] %v986
    %991 = vst [vmem:[#allocation2 + $0x8] sm:$0xff] %v987
    %992 = vst [vmem:[#allocation2 + $0x10] sm:$0xff] %v988
    %993 = vst [vmem:[#allocation2 + $0x18] sm:$0xff] %v989
    %994 = vrot.lane.b32.xlu0 %v963, 72
    %v995 = vpop.permute.xlu0 %994
    %996 = vrot.lane.b32.xlu0 %v964, 72
    %v997 = vpop.permute.xlu0 %996
    %998 = vrot.lane.b32.xlu0 %v965, 72
    %v999 = vpop.permute.xlu0 %998
    %1000 = vrot.lane.b32.xlu0 %v966, 72
    %v1001 = vpop.permute.xlu0 %1000
    %v1002 = vsel %vm140, %v999, %v1001
    %v1003 = vsel %vm140, %v997, %v999
    %v1004 = vsel %vm140, %v995, %v997
    %v1005 = vsel %vm140, %v1001, %v995
    %v1006 = vld [vmem:[#allocation8 + $0x20] sm:$0xff]
    %v1007 = vld [vmem:[#allocation8 + $0x28] sm:$0xff]
    %v1008 = vld [vmem:[#allocation8 + $0x30] sm:$0xff]
    %v1009 = vld [vmem:[#allocation8 + $0x38] sm:$0xff]
    %v1010 = vmul.f32 %v1005, %v1006
    %v1011 = vmul.f32 %v1004, %v1007
    %v1012 = vmul.f32 %v1003, %v1008
    %v1013 = vmul.f32 %v1002, %v1009
    %1014 = vst [vmem:[#allocation2 + $0x20] sm:$0xff] %v1010
    %1015 = vst [vmem:[#allocation2 + $0x28] sm:$0xff] %v1011
    %1016 = vst [vmem:[#allocation2 + $0x30] sm:$0xff] %v1012
    %1017 = vst [vmem:[#allocation2 + $0x38] sm:$0xff] %v1013
    %1018 = vrot.lane.b32.xlu0 %v963, 71
    %v1019 = vpop.permute.xlu0 %1018
    %1020 = vrot.lane.b32.xlu0 %v964, 71
    %v1021 = vpop.permute.xlu0 %1020
    %1022 = vrot.lane.b32.xlu0 %v965, 71
    %v1023 = vpop.permute.xlu0 %1022
    %1024 = vrot.lane.b32.xlu0 %v966, 71
    %v1025 = vpop.permute.xlu0 %1024
    %v1026 = vsel %vm165, %v1023, %v1025
    %v1027 = vsel %vm165, %v1021, %v1023
    %v1028 = vsel %vm165, %v1019, %v1021
    %v1029 = vsel %vm165, %v1025, %v1019
    %v1030 = vld [vmem:[#allocation8 + $0x40] sm:$0xff]
    %v1031 = vld [vmem:[#allocation8 + $0x48] sm:$0xff]
    %v1032 = vld [vmem:[#allocation8 + $0x50] sm:$0xff]
    %v1033 = vld [vmem:[#allocation8 + $0x58] sm:$0xff]
    %v1034 = vmul.f32 %v1029, %v1030
    %v1035 = vmul.f32 %v1028, %v1031
    %v1036 = vmul.f32 %v1027, %v1032
    %v1037 = vmul.f32 %v1026, %v1033
    %1038 = vst [vmem:[#allocation2 + $0x40] sm:$0xff] %v1034
    %1039 = vst [vmem:[#allocation2 + $0x48] sm:$0xff] %v1035
    %1040 = vst [vmem:[#allocation2 + $0x50] sm:$0xff] %v1036
    %1041 = vst [vmem:[#allocation2 + $0x58] sm:$0xff] %v1037
    %1042 = vrot.lane.b32.xlu0 %v963, 65
    %v1043 = vpop.permute.xlu0 %1042
    %1044 = vrot.lane.b32.xlu0 %v964, 65
    %v1045 = vpop.permute.xlu0 %1044
    %1046 = vrot.lane.b32.xlu0 %v965, 65
    %v1047 = vpop.permute.xlu0 %1046
    %1048 = vrot.lane.b32.xlu0 %v966, 65
    %v1049 = vpop.permute.xlu0 %1048
    %v1050 = vsel %vm190, %v1047, %v1049
    %v1051 = vsel %vm190, %v1045, %v1047
    %v1052 = vsel %vm190, %v1043, %v1045
    %v1053 = vsel %vm190, %v1049, %v1043
    %v1054 = vld [vmem:[#allocation8 + $0x60] sm:$0xff]
    %v1055 = vld [vmem:[#allocation8 + $0x68] sm:$0xff]
    %v1056 = vld [vmem:[#allocation8 + $0x70] sm:$0xff]
    %v1057 = vld [vmem:[#allocation8 + $0x78] sm:$0xff]
    %v1058 = vmul.f32 %v1053, %v1054
    %v1059 = vmul.f32 %v1052, %v1055
    %v1060 = vmul.f32 %v1051, %v1056
    %v1061 = vmul.f32 %v1050, %v1057
    %1062 = vst [vmem:[#allocation2 + $0x60] sm:$0xff] %v1058
    %1063 = vst [vmem:[#allocation2 + $0x68] sm:$0xff] %v1059
    %1064 = vst [vmem:[#allocation2 + $0x70] sm:$0xff] %v1060
    %1065 = vst [vmem:[#allocation2 + $0x78] sm:$0xff] %v1061
    %1066 = vrot.lane.b32.xlu0 %v963, 64
    %v1067 = vpop.permute.xlu0 %1066
    %1068 = vrot.lane.b32.xlu0 %v964, 64
    %v1069 = vpop.permute.xlu0 %1068
    %1070 = vrot.lane.b32.xlu0 %v965, 64
    %v1071 = vpop.permute.xlu0 %1070
    %1072 = vrot.lane.b32.xlu0 %v966, 64
    %v1073 = vpop.permute.xlu0 %1072
    %v1074 = vsel %vm215, %v1071, %v1073
    %v1075 = vsel %vm215, %v1069, %v1071
    %v1076 = vsel %vm215, %v1067, %v1069
    %v1077 = vsel %vm215, %v1073, %v1067
    %v1078 = vld [vmem:[#allocation8 + $0x80] sm:$0xff]
    %v1079 = vld [vmem:[#allocation8 + $0x88] sm:$0xff]
    %v1080 = vld [vmem:[#allocation8 + $0x90] sm:$0xff]
    %v1081 = vld [vmem:[#allocation8 + $0x98] sm:$0xff]
    %v1082 = vmul.f32 %v1077, %v1078
    %v1083 = vmul.f32 %v1076, %v1079
    %v1084 = vmul.f32 %v1075, %v1080
    %v1085 = vmul.f32 %v1074, %v1081
    %1086 = vst [vmem:[#allocation2 + $0x80] sm:$0xff] %v1082
    %1087 = vst [vmem:[#allocation2 + $0x88] sm:$0xff] %v1083
    %1088 = vst [vmem:[#allocation2 + $0x90] sm:$0xff] %v1084
    %1089 = vst [vmem:[#allocation2 + $0x98] sm:$0xff] %v1085
    %1090 = vrot.lane.b32.xlu0 %v963, 63
    %v1091 = vpop.permute.xlu0 %1090
    %1092 = vrot.lane.b32.xlu0 %v964, 63
    %v1093 = vpop.permute.xlu0 %1092
    %1094 = vrot.lane.b32.xlu0 %v965, 63
    %v1095 = vpop.permute.xlu0 %1094
    %1096 = vrot.lane.b32.xlu0 %v966, 63
    %v1097 = vpop.permute.xlu0 %1096
    %v1098 = vsel %vm240, %v1095, %v1097
    %v1099 = vsel %vm240, %v1093, %v1095
    %v1100 = vsel %vm240, %v1091, %v1093
    %v1101 = vsel %vm240, %v1097, %v1091
    %v1102 = vld [vmem:[#allocation8 + $0xa0] sm:$0xff]
    %v1103 = vld [vmem:[#allocation8 + $0xa8] sm:$0xff]
    %v1104 = vld [vmem:[#allocation8 + $0xb0] sm:$0xff]
    %v1105 = vld [vmem:[#allocation8 + $0xb8] sm:$0xff]
    %v1106 = vmul.f32 %v1101, %v1102
    %v1107 = vmul.f32 %v1100, %v1103
    %v1108 = vmul.f32 %v1099, %v1104
    %v1109 = vmul.f32 %v1098, %v1105
    %1110 = vst [vmem:[#allocation2 + $0xa0] sm:$0xff] %v1106
    %1111 = vst [vmem:[#allocation2 + $0xa8] sm:$0xff] %v1107
    %1112 = vst [vmem:[#allocation2 + $0xb0] sm:$0xff] %v1108
    %1113 = vst [vmem:[#allocation2 + $0xb8] sm:$0xff] %v1109
    %1114 = vrot.lane.b32.xlu0 %v963, 57
    %v1115 = vpop.permute.xlu0 %1114
    %1116 = vrot.lane.b32.xlu0 %v964, 57
    %v1117 = vpop.permute.xlu0 %1116
    %1118 = vrot.lane.b32.xlu0 %v965, 57
    %v1119 = vpop.permute.xlu0 %1118
    %1120 = vrot.lane.b32.xlu0 %v966, 57
    %v1121 = vpop.permute.xlu0 %1120
    %v1122 = vsel %vm265, %v1119, %v1121
    %v1123 = vsel %vm265, %v1117, %v1119
    %v1124 = vsel %vm265, %v1115, %v1117
    %v1125 = vsel %vm265, %v1121, %v1115
    %v1126 = vld [vmem:[#allocation8 + $0xc0] sm:$0xff]
    %v1127 = vld [vmem:[#allocation8 + $0xc8] sm:$0xff]
    %v1128 = vld [vmem:[#allocation8 + $0xd0] sm:$0xff]
    %v1129 = vld [vmem:[#allocation8 + $0xd8] sm:$0xff]
    %v1130 = vmul.f32 %v1125, %v1126
    %v1131 = vmul.f32 %v1124, %v1127
    %v1132 = vmul.f32 %v1123, %v1128
    %v1133 = vmul.f32 %v1122, %v1129
    %1134 = vst [vmem:[#allocation2 + $0xc0] sm:$0xff] %v1130
    %1135 = vst [vmem:[#allocation2 + $0xc8] sm:$0xff] %v1131
    %1136 = vst [vmem:[#allocation2 + $0xd0] sm:$0xff] %v1132
    %1137 = vst [vmem:[#allocation2 + $0xd8] sm:$0xff] %v1133
    %1138 = vrot.lane.b32.xlu0 %v963, 56
    %v1139 = vpop.permute.xlu0 %1138
    %1140 = vrot.lane.b32.xlu0 %v964, 56
    %v1141 = vpop.permute.xlu0 %1140
    %1142 = vrot.lane.b32.xlu0 %v965, 56
    %v1143 = vpop.permute.xlu0 %1142
    %1144 = vrot.lane.b32.xlu0 %v966, 56
    %v1145 = vpop.permute.xlu0 %1144
    %v1146 = vsel %vm290, %v1143, %v1145
    %v1147 = vsel %vm290, %v1141, %v1143
    %v1148 = vsel %vm290, %v1139, %v1141
    %v1149 = vsel %vm290, %v1145, %v1139
    %v1150 = vld [vmem:[#allocation8 + $0xe0] sm:$0xff]
    %v1151 = vld [vmem:[#allocation8 + $0xe8] sm:$0xff]
    %v1152 = vld [vmem:[#allocation8 + $0xf0] sm:$0xff]
    %v1153 = vld [vmem:[#allocation8 + $0xf8] sm:$0xff]
    %v1154 = vmul.f32 %v1149, %v1150
    %v1155 = vmul.f32 %v1148, %v1151
    %v1156 = vmul.f32 %v1147, %v1152
    %v1157 = vmul.f32 %v1146, %v1153
    %1158 = vst [vmem:[#allocation2 + $0xe0] sm:$0xff] %v1154
    %1159 = vst [vmem:[#allocation2 + $0xe8] sm:$0xff] %v1155
    %1160 = vst [vmem:[#allocation2 + $0xf0] sm:$0xff] %v1156
    %1161 = vst [vmem:[#allocation2 + $0xf8] sm:$0xff] %v1157
    %1162 = vrot.lane.b32.xlu0 %v963, 55
    %v1163 = vpop.permute.xlu0 %1162
    %1164 = vrot.lane.b32.xlu0 %v964, 55
    %v1165 = vpop.permute.xlu0 %1164
    %1166 = vrot.lane.b32.xlu0 %v965, 55
    %v1167 = vpop.permute.xlu0 %1166
    %1168 = vrot.lane.b32.xlu0 %v966, 55
    %v1169 = vpop.permute.xlu0 %1168
    %v1170 = vsel %vm315, %v1167, %v1169
    %v1171 = vsel %vm315, %v1165, %v1167
    %v1172 = vsel %vm315, %v1163, %v1165
    %v1173 = vsel %vm315, %v1169, %v1163
    %v1174 = vld [vmem:[#allocation8 + $0x100] sm:$0xff]
    %v1175 = vld [vmem:[#allocation8 + $0x108] sm:$0xff]
    %v1176 = vld [vmem:[#allocation8 + $0x110] sm:$0xff]
    %v1177 = vld [vmem:[#allocation8 + $0x118] sm:$0xff]
    %v1178 = vmul.f32 %v1173, %v1174
    %v1179 = vmul.f32 %v1172, %v1175
    %v1180 = vmul.f32 %v1171, %v1176
    %v1181 = vmul.f32 %v1170, %v1177
    %1182 = vst [vmem:[#allocation2 + $0x100] sm:$0xff] %v1178
    %1183 = vst [vmem:[#allocation2 + $0x108] sm:$0xff] %v1179
    %1184 = vst [vmem:[#allocation2 + $0x110] sm:$0xff] %v1180
    %1185 = vst [vmem:[#allocation2 + $0x118] sm:$0xff] %v1181
    %1186 = vrot.lane.b32.xlu0 %v963, 9
    %v1187 = vpop.permute.xlu0 %1186
    %1188 = vrot.lane.b32.xlu0 %v964, 9
    %v1189 = vpop.permute.xlu0 %1188
    %1190 = vrot.lane.b32.xlu0 %v965, 9
    %v1191 = vpop.permute.xlu0 %1190
    %1192 = vrot.lane.b32.xlu0 %v966, 9
    %v1193 = vpop.permute.xlu0 %1192
    %v1194 = vsel %vm340, %v1191, %v1193
    %v1195 = vsel %vm340, %v1189, %v1191
    %v1196 = vsel %vm340, %v1187, %v1189
    %v1197 = vsel %vm340, %v1193, %v1187
    %v1198 = vld [vmem:[#allocation8 + $0x120] sm:$0xff]
    %v1199 = vld [vmem:[#allocation8 + $0x128] sm:$0xff]
    %v1200 = vld [vmem:[#allocation8 + $0x130] sm:$0xff]
    %v1201 = vld [vmem:[#allocation8 + $0x138] sm:$0xff]
    %v1202 = vmul.f32 %v1197, %v1198
    %v1203 = vmul.f32 %v1196, %v1199
    %v1204 = vmul.f32 %v1195, %v1200
    %v1205 = vmul.f32 %v1194, %v1201
    %1206 = vst [vmem:[#allocation2 + $0x120] sm:$0xff] %v1202
    %1207 = vst [vmem:[#allocation2 + $0x128] sm:$0xff] %v1203
    %1208 = vst [vmem:[#allocation2 + $0x130] sm:$0xff] %v1204
    %1209 = vst [vmem:[#allocation2 + $0x138] sm:$0xff] %v1205
    %1210 = vrot.lane.b32.xlu0 %v963, 8
    %v1211 = vpop.permute.xlu0 %1210
    %1212 = vrot.lane.b32.xlu0 %v964, 8
    %v1213 = vpop.permute.xlu0 %1212
    %1214 = vrot.lane.b32.xlu0 %v965, 8
    %v1215 = vpop.permute.xlu0 %1214
    %1216 = vrot.lane.b32.xlu0 %v966, 8
    %v1217 = vpop.permute.xlu0 %1216
    %v1218 = vsel %vm365, %v1215, %v1217
    %v1219 = vsel %vm365, %v1213, %v1215
    %v1220 = vsel %vm365, %v1211, %v1213
    %v1221 = vsel %vm365, %v1217, %v1211
    %v1222 = vld [vmem:[#allocation8 + $0x140] sm:$0xff]
    %v1223 = vld [vmem:[#allocation8 + $0x148] sm:$0xff]
    %v1224 = vld [vmem:[#allocation8 + $0x150] sm:$0xff]
    %v1225 = vld [vmem:[#allocation8 + $0x158] sm:$0xff]
    %v1226 = vmul.f32 %v1221, %v1222
    %v1227 = vmul.f32 %v1220, %v1223
    %v1228 = vmul.f32 %v1219, %v1224
    %v1229 = vmul.f32 %v1218, %v1225
    %1230 = vst [vmem:[#allocation2 + $0x140] sm:$0xff] %v1226
    %1231 = vst [vmem:[#allocation2 + $0x148] sm:$0xff] %v1227
    %1232 = vst [vmem:[#allocation2 + $0x150] sm:$0xff] %v1228
    %1233 = vst [vmem:[#allocation2 + $0x158] sm:$0xff] %v1229
    %1234 = vrot.lane.b32.xlu0 %v963, 7
    %v1235 = vpop.permute.xlu0 %1234
    %1236 = vrot.lane.b32.xlu0 %v964, 7
    %v1237 = vpop.permute.xlu0 %1236
    %1238 = vrot.lane.b32.xlu0 %v965, 7
    %v1239 = vpop.permute.xlu0 %1238
    %1240 = vrot.lane.b32.xlu0 %v966, 7
    %v1241 = vpop.permute.xlu0 %1240
    %v1242 = vsel %vm390, %v1239, %v1241
    %v1243 = vsel %vm390, %v1237, %v1239
    %v1244 = vsel %vm390, %v1235, %v1237
    %v1245 = vsel %vm390, %v1241, %v1235
    %v1246 = vld [vmem:[#allocation8 + $0x160] sm:$0xff]
    %v1247 = vld [vmem:[#allocation8 + $0x168] sm:$0xff]
    %v1248 = vld [vmem:[#allocation8 + $0x170] sm:$0xff]
    %v1249 = vld [vmem:[#allocation8 + $0x178] sm:$0xff]
    %v1250 = vmul.f32 %v1245, %v1246
    %v1251 = vmul.f32 %v1244, %v1247
    %v1252 = vmul.f32 %v1243, %v1248
    %v1253 = vmul.f32 %v1242, %v1249
    %1254 = vst [vmem:[#allocation2 + $0x160] sm:$0xff] %v1250
    %1255 = vst [vmem:[#allocation2 + $0x168] sm:$0xff] %v1251
    %1256 = vst [vmem:[#allocation2 + $0x170] sm:$0xff] %v1252
    %1257 = vst [vmem:[#allocation2 + $0x178] sm:$0xff] %v1253
    %1258 = vrot.lane.b32.xlu0 %v963, 1
    %v1259 = vpop.permute.xlu0 %1258
    %1260 = vrot.lane.b32.xlu0 %v964, 1
    %v1261 = vpop.permute.xlu0 %1260
    %1262 = vrot.lane.b32.xlu0 %v965, 1
    %v1263 = vpop.permute.xlu0 %1262
    %1264 = vrot.lane.b32.xlu0 %v966, 1
    %v1265 = vpop.permute.xlu0 %1264
    %v1266 = vsel %vm415, %v1263, %v1265
    %v1267 = vsel %vm415, %v1261, %v1263
    %v1268 = vsel %vm415, %v1259, %v1261
    %v1269 = vsel %vm415, %v1265, %v1259
    %v1270 = vld [vmem:[#allocation8 + $0x180] sm:$0xff]
    %v1271 = vld [vmem:[#allocation8 + $0x188] sm:$0xff]
    %v1272 = vld [vmem:[#allocation8 + $0x190] sm:$0xff]
    %v1273 = vld [vmem:[#allocation8 + $0x198] sm:$0xff]
    %v1274 = vmul.f32 %v1269, %v1270
    %v1275 = vmul.f32 %v1268, %v1271
    %v1276 = vmul.f32 %v1267, %v1272
    %v1277 = vmul.f32 %v1266, %v1273
    %1278 = vst [vmem:[#allocation2 + $0x180] sm:$0xff] %v1274
    %1279 = vst [vmem:[#allocation2 + $0x188] sm:$0xff] %v1275
    %1280 = vst [vmem:[#allocation2 + $0x190] sm:$0xff] %v1276
    %1281 = vst [vmem:[#allocation2 + $0x198] sm:$0xff] %v1277
    %v1282 = vld [vmem:[#allocation8 + $0x1a0] sm:$0xff]
    %v1283 = vld [vmem:[#allocation8 + $0x1a8] sm:$0xff]
    %v1284 = vld [vmem:[#allocation8 + $0x1b0] sm:$0xff]
    %v1285 = vld [vmem:[#allocation8 + $0x1b8] sm:$0xff]
    %v1286 = vmul.f32 %v963, %v1282
    %v1287 = vmul.f32 %v964, %v1283
    %v1288 = vmul.f32 %v965, %v1284
    %v1289 = vmul.f32 %v966, %v1285
    %1290 = vst [vmem:[#allocation2 + $0x1a0] sm:$0xff] %v1286
    %1291 = vst [vmem:[#allocation2 + $0x1a8] sm:$0xff] %v1287
    %1292 = vst [vmem:[#allocation2 + $0x1b0] sm:$0xff] %v1288
    %1293 = vst [vmem:[#allocation2 + $0x1b8] sm:$0xff] %v1289
    %1294 = vrot.lane.b32.xlu0 %v963, 127
    %v1295 = vpop.permute.xlu0 %1294
    %1296 = vrot.lane.b32.xlu0 %v964, 127
    %v1297 = vpop.permute.xlu0 %1296
    %1298 = vrot.lane.b32.xlu0 %v965, 127
    %v1299 = vpop.permute.xlu0 %1298
    %1300 = vrot.lane.b32.xlu0 %v966, 127
    %v1301 = vpop.permute.xlu0 %1300
    %v1302 = vsel %vm452, %v1299, %v1301
    %v1303 = vsel %vm452, %v1297, %v1299
    %v1304 = vsel %vm452, %v1295, %v1297
    %v1305 = vsel %vm452, %v1301, %v1295
    %v1306 = vld [vmem:[#allocation8 + $0x1c0] sm:$0xff]
    %v1307 = vld [vmem:[#allocation8 + $0x1c8] sm:$0xff]
    %v1308 = vld [vmem:[#allocation8 + $0x1d0] sm:$0xff]
    %v1309 = vld [vmem:[#allocation8 + $0x1d8] sm:$0xff]
    %v1310 = vmul.f32 %v1304, %v1306
    %v1311 = vmul.f32 %v1303, %v1307
    %v1312 = vmul.f32 %v1302, %v1308
    %v1313 = vmul.f32 %v1305, %v1309
    %1314 = vst [vmem:[#allocation2 + $0x1c0] sm:$0xff] %v1310
    %1315 = vst [vmem:[#allocation2 + $0x1c8] sm:$0xff] %v1311
    %1316 = vst [vmem:[#allocation2 + $0x1d0] sm:$0xff] %v1312
    %1317 = vst [vmem:[#allocation2 + $0x1d8] sm:$0xff] %v1313
    %1318 = vrot.lane.b32.xlu0 %v963, 121
    %v1319 = vpop.permute.xlu0 %1318
    %1320 = vrot.lane.b32.xlu0 %v964, 121
    %v1321 = vpop.permute.xlu0 %1320
    %1322 = vrot.lane.b32.xlu0 %v965, 121
    %v1323 = vpop.permute.xlu0 %1322
    %1324 = vrot.lane.b32.xlu0 %v966, 121
    %v1325 = vpop.permute.xlu0 %1324
    %v1326 = vsel %vm477, %v1323, %v1325
    %v1327 = vsel %vm477, %v1321, %v1323
    %v1328 = vsel %vm477, %v1319, %v1321
    %v1329 = vsel %vm477, %v1325, %v1319
    %v1330 = vld [vmem:[#allocation8 + $0x1e0] sm:$0xff]
    %v1331 = vld [vmem:[#allocation8 + $0x1e8] sm:$0xff]
    %v1332 = vld [vmem:[#allocation8 + $0x1f0] sm:$0xff]
    %v1333 = vld [vmem:[#allocation8 + $0x1f8] sm:$0xff]
    %v1334 = vmul.f32 %v1328, %v1330
    %v1335 = vmul.f32 %v1327, %v1331
    %v1336 = vmul.f32 %v1326, %v1332
    %v1337 = vmul.f32 %v1329, %v1333
    %1338 = vst [vmem:[#allocation2 + $0x1e0] sm:$0xff] %v1334
    %1339 = vst [vmem:[#allocation2 + $0x1e8] sm:$0xff] %v1335
    %1340 = vst [vmem:[#allocation2 + $0x1f0] sm:$0xff] %v1336
    %1341 = vst [vmem:[#allocation2 + $0x1f8] sm:$0xff] %v1337
    %1342 = vrot.lane.b32.xlu0 %v963, 120
    %v1343 = vpop.permute.xlu0 %1342
    %1344 = vrot.lane.b32.xlu0 %v964, 120
    %v1345 = vpop.permute.xlu0 %1344
    %1346 = vrot.lane.b32.xlu0 %v965, 120
    %v1347 = vpop.permute.xlu0 %1346
    %1348 = vrot.lane.b32.xlu0 %v966, 120
    %v1349 = vpop.permute.xlu0 %1348
    %v1350 = vsel %vm502, %v1347, %v1349
    %v1351 = vsel %vm502, %v1345, %v1347
    %v1352 = vsel %vm502, %v1343, %v1345
    %v1353 = vsel %vm502, %v1349, %v1343
    %v1354 = vld [vmem:[#allocation8 + $0x200] sm:$0xff]
    %v1355 = vld [vmem:[#allocation8 + $0x208] sm:$0xff]
    %v1356 = vld [vmem:[#allocation8 + $0x210] sm:$0xff]
    %v1357 = vld [vmem:[#allocation8 + $0x218] sm:$0xff]
    %v1358 = vmul.f32 %v1352, %v1354
    %v1359 = vmul.f32 %v1351, %v1355
    %v1360 = vmul.f32 %v1350, %v1356
    %v1361 = vmul.f32 %v1353, %v1357
    %1362 = vst [vmem:[#allocation2 + $0x200] sm:$0xff] %v1358
    %1363 = vst [vmem:[#allocation2 + $0x208] sm:$0xff] %v1359
    %1364 = vst [vmem:[#allocation2 + $0x210] sm:$0xff] %v1360
    %1365 = vst [vmem:[#allocation2 + $0x218] sm:$0xff] %v1361
    %1366 = vrot.lane.b32.xlu0 %v963, 119
    %v1367 = vpop.permute.xlu0 %1366
    %1368 = vrot.lane.b32.xlu0 %v964, 119
    %v1369 = vpop.permute.xlu0 %1368
    %1370 = vrot.lane.b32.xlu0 %v965, 119
    %v1371 = vpop.permute.xlu0 %1370
    %1372 = vrot.lane.b32.xlu0 %v966, 119
    %v1373 = vpop.permute.xlu0 %1372
    %v1374 = vsel %vm527, %v1371, %v1373
    %v1375 = vsel %vm527, %v1369, %v1371
    %v1376 = vsel %vm527, %v1367, %v1369
    %v1377 = vsel %vm527, %v1373, %v1367
    %v1378 = vld [vmem:[#allocation8 + $0x220] sm:$0xff]
    %v1379 = vld [vmem:[#allocation8 + $0x228] sm:$0xff]
    %v1380 = vld [vmem:[#allocation8 + $0x230] sm:$0xff]
    %v1381 = vld [vmem:[#allocation8 + $0x238] sm:$0xff]
    %v1382 = vmul.f32 %v1376, %v1378
    %v1383 = vmul.f32 %v1375, %v1379
    %v1384 = vmul.f32 %v1374, %v1380
    %v1385 = vmul.f32 %v1377, %v1381
    %1386 = vst [vmem:[#allocation2 + $0x220] sm:$0xff] %v1382
    %1387 = vst [vmem:[#allocation2 + $0x228] sm:$0xff] %v1383
    %1388 = vst [vmem:[#allocation2 + $0x230] sm:$0xff] %v1384
    %1389 = vst [vmem:[#allocation2 + $0x238] sm:$0xff] %v1385
    %v1390 = vld [vmem:[#allocation8 + $0x240] sm:$0xff]
    %v1391 = vld [vmem:[#allocation8 + $0x248] sm:$0xff]
    %v1392 = vld [vmem:[#allocation8 + $0x250] sm:$0xff]
    %v1393 = vld [vmem:[#allocation8 + $0x258] sm:$0xff]
    %v1394 = vmul.f32 %v980, %v1390
    %v1395 = vmul.f32 %v979, %v1391
    %v1396 = vmul.f32 %v978, %v1392
    %v1397 = vmul.f32 %v981, %v1393
    %1398 = vst [vmem:[#allocation2 + $0x240] sm:$0xff] %v1394
    %1399 = vst [vmem:[#allocation2 + $0x248] sm:$0xff] %v1395
    %1400 = vst [vmem:[#allocation2 + $0x250] sm:$0xff] %v1396
    %1401 = vst [vmem:[#allocation2 + $0x258] sm:$0xff] %v1397
    %v1402 = vld [vmem:[#allocation8 + $0x260] sm:$0xff]
    %v1403 = vld [vmem:[#allocation8 + $0x268] sm:$0xff]
    %v1404 = vld [vmem:[#allocation8 + $0x270] sm:$0xff]
    %v1405 = vld [vmem:[#allocation8 + $0x278] sm:$0xff]
    %v1406 = vmul.f32 %v1004, %v1402
    %v1407 = vmul.f32 %v1003, %v1403
    %v1408 = vmul.f32 %v1002, %v1404
    %v1409 = vmul.f32 %v1005, %v1405
    %1410 = vst [vmem:[#allocation2 + $0x260] sm:$0xff] %v1406
    %1411 = vst [vmem:[#allocation2 + $0x268] sm:$0xff] %v1407
    %1412 = vst [vmem:[#allocation2 + $0x270] sm:$0xff] %v1408
    %1413 = vst [vmem:[#allocation2 + $0x278] sm:$0xff] %v1409
    %v1414 = vld [vmem:[#allocation8 + $0x280] sm:$0xff]
    %v1415 = vld [vmem:[#allocation8 + $0x288] sm:$0xff]
    %v1416 = vld [vmem:[#allocation8 + $0x290] sm:$0xff]
    %v1417 = vld [vmem:[#allocation8 + $0x298] sm:$0xff]
    %v1418 = vmul.f32 %v1028, %v1414
    %v1419 = vmul.f32 %v1027, %v1415
    %v1420 = vmul.f32 %v1026, %v1416
    %v1421 = vmul.f32 %v1029, %v1417
    %1422 = vst [vmem:[#allocation2 + $0x280] sm:$0xff] %v1418
    %1423 = vst [vmem:[#allocation2 + $0x288] sm:$0xff] %v1419
    %1424 = vst [vmem:[#allocation2 + $0x290] sm:$0xff] %v1420
    %1425 = vst [vmem:[#allocation2 + $0x298] sm:$0xff] %v1421
    %v1426 = vld [vmem:[#allocation8 + $0x2a0] sm:$0xff]
    %v1427 = vld [vmem:[#allocation8 + $0x2a8] sm:$0xff]
    %v1428 = vld [vmem:[#allocation8 + $0x2b0] sm:$0xff]
    %v1429 = vld [vmem:[#allocation8 + $0x2b8] sm:$0xff]
    %v1430 = vmul.f32 %v1052, %v1426
    %v1431 = vmul.f32 %v1051, %v1427
    %v1432 = vmul.f32 %v1050, %v1428
    %v1433 = vmul.f32 %v1053, %v1429
    %1434 = vst [vmem:[#allocation2 + $0x2a0] sm:$0xff] %v1430
    %1435 = vst [vmem:[#allocation2 + $0x2a8] sm:$0xff] %v1431
    %1436 = vst [vmem:[#allocation2 + $0x2b0] sm:$0xff] %v1432
    %1437 = vst [vmem:[#allocation2 + $0x2b8] sm:$0xff] %v1433
    %v1438 = vld [vmem:[#allocation8 + $0x2c0] sm:$0xff]
    %v1439 = vld [vmem:[#allocation8 + $0x2c8] sm:$0xff]
    %v1440 = vld [vmem:[#allocation8 + $0x2d0] sm:$0xff]
    %v1441 = vld [vmem:[#allocation8 + $0x2d8] sm:$0xff]
    %v1442 = vmul.f32 %v1076, %v1438
    %v1443 = vmul.f32 %v1075, %v1439
    %v1444 = vmul.f32 %v1074, %v1440
    %v1445 = vmul.f32 %v1077, %v1441
    %1446 = vst [vmem:[#allocation2 + $0x2c0] sm:$0xff] %v1442
    %1447 = vst [vmem:[#allocation2 + $0x2c8] sm:$0xff] %v1443
    %1448 = vst [vmem:[#allocation2 + $0x2d0] sm:$0xff] %v1444
    %1449 = vst [vmem:[#allocation2 + $0x2d8] sm:$0xff] %v1445
    %v1450 = vld [vmem:[#allocation8 + $0x2e0] sm:$0xff]
    %v1451 = vld [vmem:[#allocation8 + $0x2e8] sm:$0xff]
    %v1452 = vld [vmem:[#allocation8 + $0x2f0] sm:$0xff]
    %v1453 = vld [vmem:[#allocation8 + $0x2f8] sm:$0xff]
    %v1454 = vmul.f32 %v1100, %v1450
    %v1455 = vmul.f32 %v1099, %v1451
    %v1456 = vmul.f32 %v1098, %v1452
    %v1457 = vmul.f32 %v1101, %v1453
    %1458 = vst [vmem:[#allocation2 + $0x2e0] sm:$0xff] %v1454
    %1459 = vst [vmem:[#allocation2 + $0x2e8] sm:$0xff] %v1455
    %1460 = vst [vmem:[#allocation2 + $0x2f0] sm:$0xff] %v1456
    %1461 = vst [vmem:[#allocation2 + $0x2f8] sm:$0xff] %v1457
    %v1462 = vld [vmem:[#allocation8 + $0x300] sm:$0xff]
    %v1463 = vld [vmem:[#allocation8 + $0x308] sm:$0xff]
    %v1464 = vld [vmem:[#allocation8 + $0x310] sm:$0xff]
    %v1465 = vld [vmem:[#allocation8 + $0x318] sm:$0xff]
    %v1466 = vmul.f32 %v1124, %v1462
    %v1467 = vmul.f32 %v1123, %v1463
    %v1468 = vmul.f32 %v1122, %v1464
    %v1469 = vmul.f32 %v1125, %v1465
    %1470 = vst [vmem:[#allocation2 + $0x300] sm:$0xff] %v1466
    %1471 = vst [vmem:[#allocation2 + $0x308] sm:$0xff] %v1467
    %1472 = vst [vmem:[#allocation2 + $0x310] sm:$0xff] %v1468
    %1473 = vst [vmem:[#allocation2 + $0x318] sm:$0xff] %v1469
    %v1474 = vld [vmem:[#allocation8 + $0x320] sm:$0xff]
    %v1475 = vld [vmem:[#allocation8 + $0x328] sm:$0xff]
    %v1476 = vld [vmem:[#allocation8 + $0x330] sm:$0xff]
    %v1477 = vld [vmem:[#allocation8 + $0x338] sm:$0xff]
    %v1478 = vmul.f32 %v1148, %v1474
    %v1479 = vmul.f32 %v1147, %v1475
    %v1480 = vmul.f32 %v1146, %v1476
    %v1481 = vmul.f32 %v1149, %v1477
    %1482 = vst [vmem:[#allocation2 + $0x320] sm:$0xff] %v1478
    %1483 = vst [vmem:[#allocation2 + $0x328] sm:$0xff] %v1479
    %1484 = vst [vmem:[#allocation2 + $0x330] sm:$0xff] %v1480
    %1485 = vst [vmem:[#allocation2 + $0x338] sm:$0xff] %v1481
    %v1486 = vld [vmem:[#allocation8 + $0x340] sm:$0xff]
    %v1487 = vld [vmem:[#allocation8 + $0x348] sm:$0xff]
    %v1488 = vld [vmem:[#allocation8 + $0x350] sm:$0xff]
    %v1489 = vld [vmem:[#allocation8 + $0x358] sm:$0xff]
    %v1490 = vmul.f32 %v1172, %v1486
    %v1491 = vmul.f32 %v1171, %v1487
    %v1492 = vmul.f32 %v1170, %v1488
    %v1493 = vmul.f32 %v1173, %v1489
    %1494 = vst [vmem:[#allocation2 + $0x340] sm:$0xff] %v1490
    %1495 = vst [vmem:[#allocation2 + $0x348] sm:$0xff] %v1491
    %1496 = vst [vmem:[#allocation2 + $0x350] sm:$0xff] %v1492
    %1497 = vst [vmem:[#allocation2 + $0x358] sm:$0xff] %v1493
    %v1498 = vld [vmem:[#allocation2] sm:$0xff]
    %v1499 = vld [vmem:[#allocation2 + $0x8] sm:$0xff]
    %v1500 = vld [vmem:[#allocation2 + $0x10] sm:$0xff]
    %v1501 = vld [vmem:[#allocation2 + $0x18] sm:$0xff]
    %v1502 = vld [vmem:[#allocation2 + $0x20] sm:$0xff]
    %v1503 = vld [vmem:[#allocation2 + $0x28] sm:$0xff]
    %v1504 = vld [vmem:[#allocation2 + $0x30] sm:$0xff]
    %v1505 = vld [vmem:[#allocation2 + $0x38] sm:$0xff]
    %v1506 = vld [vmem:[#allocation2 + $0x40] sm:$0xff]
    %v1507 = vld [vmem:[#allocation2 + $0x48] sm:$0xff]
    %v1508 = vld [vmem:[#allocation2 + $0x50] sm:$0xff]
    %v1509 = vld [vmem:[#allocation2 + $0x58] sm:$0xff]
    %v1510 = vld [vmem:[#allocation2 + $0x60] sm:$0xff]
    %v1511 = vld [vmem:[#allocation2 + $0x68] sm:$0xff]
    %v1512 = vld [vmem:[#allocation2 + $0x70] sm:$0xff]
    %v1513 = vld [vmem:[#allocation2 + $0x78] sm:$0xff]
    %v1514 = vld [vmem:[#allocation2 + $0x80] sm:$0xff]
    %v1515 = vld [vmem:[#allocation2 + $0x88] sm:$0xff]
    %v1516 = vld [vmem:[#allocation2 + $0x90] sm:$0xff]
    %v1517 = vld [vmem:[#allocation2 + $0x98] sm:$0xff]
    %v1518 = vld [vmem:[#allocation2 + $0xa0] sm:$0xff]
    %v1519 = vld [vmem:[#allocation2 + $0xa8] sm:$0xff]
    %v1520 = vld [vmem:[#allocation2 + $0xb0] sm:$0xff]
    %v1521 = vld [vmem:[#allocation2 + $0xb8] sm:$0xff]
    %v1522 = vld [vmem:[#allocation2 + $0xc0] sm:$0xff]
    %v1523 = vld [vmem:[#allocation2 + $0xc8] sm:$0xff]
    %v1524 = vld [vmem:[#allocation2 + $0xd0] sm:$0xff]
    %v1525 = vld [vmem:[#allocation2 + $0xd8] sm:$0xff]
    %v1526 = vld [vmem:[#allocation2 + $0xe0] sm:$0xff]
    %v1527 = vld [vmem:[#allocation2 + $0xe8] sm:$0xff]
    %v1528 = vld [vmem:[#allocation2 + $0xf0] sm:$0xff]
    %v1529 = vld [vmem:[#allocation2 + $0xf8] sm:$0xff]
    %v1530 = vld [vmem:[#allocation2 + $0x100] sm:$0xff]
    %v1531 = vld [vmem:[#allocation2 + $0x108] sm:$0xff]
    %v1532 = vld [vmem:[#allocation2 + $0x110] sm:$0xff]
    %v1533 = vld [vmem:[#allocation2 + $0x118] sm:$0xff]
    %v1534 = vld [vmem:[#allocation2 + $0x120] sm:$0xff]
    %v1535 = vld [vmem:[#allocation2 + $0x128] sm:$0xff]
    %v1536 = vld [vmem:[#allocation2 + $0x130] sm:$0xff]
    %v1537 = vld [vmem:[#allocation2 + $0x138] sm:$0xff]
    %v1538 = vld [vmem:[#allocation2 + $0x140] sm:$0xff]
    %v1539 = vld [vmem:[#allocation2 + $0x148] sm:$0xff]
    %v1540 = vld [vmem:[#allocation2 + $0x150] sm:$0xff]
    %v1541 = vld [vmem:[#allocation2 + $0x158] sm:$0xff]
    %v1542 = vld [vmem:[#allocation2 + $0x160] sm:$0xff]
    %v1543 = vld [vmem:[#allocation2 + $0x168] sm:$0xff]
    %v1544 = vld [vmem:[#allocation2 + $0x170] sm:$0xff]
    %v1545 = vld [vmem:[#allocation2 + $0x178] sm:$0xff]
    %v1546 = vld [vmem:[#allocation2 + $0x180] sm:$0xff]
    %v1547 = vld [vmem:[#allocation2 + $0x188] sm:$0xff]
    %v1548 = vld [vmem:[#allocation2 + $0x190] sm:$0xff]
    %v1549 = vld [vmem:[#allocation2 + $0x198] sm:$0xff]
    %v1550 = vld [vmem:[#allocation2 + $0x1a0] sm:$0xff]
    %v1551 = vld [vmem:[#allocation2 + $0x1a8] sm:$0xff]
    %v1552 = vld [vmem:[#allocation2 + $0x1b0] sm:$0xff]
    %v1553 = vld [vmem:[#allocation2 + $0x1b8] sm:$0xff]
    %v1554 = vld [vmem:[#allocation2 + $0x1c0] sm:$0xff]
    %v1555 = vld [vmem:[#allocation2 + $0x1c8] sm:$0xff]
    %v1556 = vld [vmem:[#allocation2 + $0x1d0] sm:$0xff]
    %v1557 = vld [vmem:[#allocation2 + $0x1d8] sm:$0xff]
    %v1558 = vld [vmem:[#allocation2 + $0x1e0] sm:$0xff]
    %v1559 = vld [vmem:[#allocation2 + $0x1e8] sm:$0xff]
    %v1560 = vld [vmem:[#allocation2 + $0x1f0] sm:$0xff]
    %v1561 = vld [vmem:[#allocation2 + $0x1f8] sm:$0xff]
    %v1562 = vld [vmem:[#allocation2 + $0x200] sm:$0xff]
    %v1563 = vld [vmem:[#allocation2 + $0x208] sm:$0xff]
    %v1564 = vld [vmem:[#allocation2 + $0x210] sm:$0xff]
    %v1565 = vld [vmem:[#allocation2 + $0x218] sm:$0xff]
    %v1566 = vld [vmem:[#allocation2 + $0x220] sm:$0xff]
    %v1567 = vld [vmem:[#allocation2 + $0x228] sm:$0xff]
    %v1568 = vld [vmem:[#allocation2 + $0x230] sm:$0xff]
    %v1569 = vld [vmem:[#allocation2 + $0x238] sm:$0xff]
    %v1570 = vld [vmem:[#allocation2 + $0x240] sm:$0xff]
    %v1571 = vld [vmem:[#allocation2 + $0x248] sm:$0xff]
    %v1572 = vld [vmem:[#allocation2 + $0x250] sm:$0xff]
    %v1573 = vld [vmem:[#allocation2 + $0x258] sm:$0xff]
    %v1574 = vld [vmem:[#allocation2 + $0x260] sm:$0xff]
    %v1575 = vld [vmem:[#allocation2 + $0x268] sm:$0xff]
    %v1576 = vld [vmem:[#allocation2 + $0x270] sm:$0xff]
    %v1577 = vld [vmem:[#allocation2 + $0x278] sm:$0xff]
    %v1578 = vld [vmem:[#allocation2 + $0x280] sm:$0xff]
    %v1579 = vld [vmem:[#allocation2 + $0x288] sm:$0xff]
    %v1580 = vld [vmem:[#allocation2 + $0x290] sm:$0xff]
    %v1581 = vld [vmem:[#allocation2 + $0x298] sm:$0xff]
    %v1582 = vld [vmem:[#allocation2 + $0x2a0] sm:$0xff]
    %v1583 = vld [vmem:[#allocation2 + $0x2a8] sm:$0xff]
    %v1584 = vld [vmem:[#allocation2 + $0x2b0] sm:$0xff]
    %v1585 = vld [vmem:[#allocation2 + $0x2b8] sm:$0xff]
    %v1586 = vld [vmem:[#allocation2 + $0x2c0] sm:$0xff]
    %v1587 = vld [vmem:[#allocation2 + $0x2c8] sm:$0xff]
    %v1588 = vld [vmem:[#allocation2 + $0x2d0] sm:$0xff]
    %v1589 = vld [vmem:[#allocation2 + $0x2d8] sm:$0xff]
    %v1590 = vld [vmem:[#allocation2 + $0x2e0] sm:$0xff]
    %v1591 = vld [vmem:[#allocation2 + $0x2e8] sm:$0xff]
    %v1592 = vld [vmem:[#allocation2 + $0x2f0] sm:$0xff]
    %v1593 = vld [vmem:[#allocation2 + $0x2f8] sm:$0xff]
    %v1594 = vld [vmem:[#allocation2 + $0x300] sm:$0xff]
    %v1595 = vld [vmem:[#allocation2 + $0x308] sm:$0xff]
    %v1596 = vld [vmem:[#allocation2 + $0x310] sm:$0xff]
    %v1597 = vld [vmem:[#allocation2 + $0x318] sm:$0xff]
    %v1598 = vld [vmem:[#allocation2 + $0x320] sm:$0xff]
    %v1599 = vld [vmem:[#allocation2 + $0x328] sm:$0xff]
    %v1600 = vld [vmem:[#allocation2 + $0x330] sm:$0xff]
    %v1601 = vld [vmem:[#allocation2 + $0x338] sm:$0xff]
    %v1602 = vld [vmem:[#allocation2 + $0x340] sm:$0xff]
    %v1603 = vld [vmem:[#allocation2 + $0x348] sm:$0xff]
    %v1604 = vld [vmem:[#allocation2 + $0x350] sm:$0xff]
    %v1605 = vld [vmem:[#allocation2 + $0x358] sm:$0xff]
    %v1606 = vld [vmem:[#allocation2 + $0x360] sm:$0xff]
    %v1607 = vld [vmem:[#allocation2 + $0x368] sm:$0xff]
    %v1608 = vld [vmem:[#allocation2 + $0x370] sm:$0xff]
    %v1609 = vld [vmem:[#allocation2 + $0x378] sm:$0xff]
    %v1610 = vld [vmem:[#allocation2 + $0x380] sm:$0xff]
    %v1611 = vld [vmem:[#allocation2 + $0x388] sm:$0xff]
    %v1612 = vld [vmem:[#allocation2 + $0x390] sm:$0xff]
    %v1613 = vld [vmem:[#allocation2 + $0x398] sm:$0xff]
    %v1614 = vld [vmem:[#allocation2 + $0x3a0] sm:$0xff]
    %v1615 = vld [vmem:[#allocation2 + $0x3a8] sm:$0xff]
    %v1616 = vld [vmem:[#allocation2 + $0x3b0] sm:$0xff]
    %v1617 = vld [vmem:[#allocation2 + $0x3b8] sm:$0xff]
    %v1618 = vld [vmem:[#allocation2 + $0x3c0] sm:$0xff]
    %v1619 = vld [vmem:[#allocation2 + $0x3c8] sm:$0xff]
    %v1620 = vld [vmem:[#allocation2 + $0x3d0] sm:$0xff]
    %v1621 = vld [vmem:[#allocation2 + $0x3d8] sm:$0xff]
    %v1622 = vld [vmem:[#allocation2 + $0x3e0] sm:$0xff]
    %v1623 = vld [vmem:[#allocation2 + $0x3e8] sm:$0xff]
    %v1624 = vld [vmem:[#allocation2 + $0x3f0] sm:$0xff]
    %v1625 = vld [vmem:[#allocation2 + $0x3f8] sm:$0xff]
    %1627 = vset.pattern.permute.xlu0 0
    %1628 = vperm.xlu0 %1627, %v969
    %v1629 = vpop.permute.xlu0 %1628
    %1631 = vmatprep.subr.mxu0 %v1559
    %1632 = vmatpush1.msra.mxu0 %v1558
    %1633 = vmatprep.subr.mxu0 %v1555
    %1634 = vmatpush1.msra.mxu0 %v1554
    %1635 = vmatprep.subr.mxu0 %v1551
    %1636 = vmatpush1.msra.mxu0 %v1550
    %1637 = vmatprep.subr.mxu0 %v1547
    %1638 = vmatpush1.msra.mxu0 %v1546
    %1639 = vmatprep.subr.mxu0 %v1543
    %1640 = vmatpush1.msra.mxu0 %v1542
    %1641 = vmatprep.subr.mxu0 %v1539
    %1642 = vmatpush1.msra.mxu0 %v1538
    %1643 = vmatprep.subr.mxu0 %v1535
    %1644 = vmatpush1.msra.mxu0 %v1534
    %1645 = vmatprep.subr.mxu0 %v1531
    %1646 = vmatpush1.msra.mxu0 %v1530
    %1647 = vmatprep.subr.mxu0 %v1527
    %1648 = vmatpush1.msra.mxu0 %v1526
    %1649 = vmatprep.subr.mxu0 %v1523
    %1650 = vmatpush1.msra.mxu0 %v1522
    %1651 = vmatprep.subr.mxu0 %v1519
    %1652 = vmatpush1.msra.mxu0 %v1518
    %1653 = vmatprep.subr.mxu0 %v1515
    %1654 = vmatpush1.msra.mxu0 %v1514
    %1655 = vmatprep.subr.mxu0 %v1511
    %1656 = vmatpush1.msra.mxu0 %v1510
    %1657 = vmatprep.subr.mxu0 %v1507
    %1658 = vmatpush1.msra.mxu0 %v1506
    %1659 = vmatprep.subr.mxu0 %v1503
    %1660 = vmatpush1.msra.mxu0 %v1502
    %1661 = vmatprep.subr.mxu0 %v1499
    %1662 = vmatpush1.msra.mxu0 %v1498
    %1663 = vmatprep.subr.mxu0 %v1623
    %1664 = vmatpush2.msra.mxu0 %v1622
    %1665 = vmatprep.subr.mxu0 %v1619
    %1666 = vmatpush2.msra.mxu0 %v1618
    %1667 = vmatprep.subr.mxu0 %v1615
    %1668 = vmatpush2.msra.mxu0 %v1614
    %1669 = vmatprep.subr.mxu0 %v1611
    %1670 = vmatpush2.msra.mxu0 %v1610
    %1671 = vmatprep.subr.mxu0 %v1607
    %1672 = vmatpush2.msra.mxu0 %v1606
    %1673 = vmatprep.subr.mxu0 %v1603
    %1674 = vmatpush2.msra.mxu0 %v1602
    %1675 = vmatprep.subr.mxu0 %v1599
    %1676 = vmatpush2.msra.mxu0 %v1598
    %1677 = vmatprep.subr.mxu0 %v1595
    %1678 = vmatpush2.msra.mxu0 %v1594
    %1679 = vmatprep.subr.mxu0 %v1591
    %1680 = vmatpush2.msra.mxu0 %v1590
    %1681 = vmatprep.subr.mxu0 %v1587
    %1682 = vmatpush2.msra.mxu0 %v1586
    %1683 = vmatprep.subr.mxu0 %v1583
    %1684 = vmatpush2.msra.mxu0 %v1582
    %1685 = vmatprep.subr.mxu0 %v1579
    %1686 = vmatpush2.msra.mxu0 %v1578
    %1687 = vmatprep.subr.mxu0 %v1575
    %1688 = vmatpush2.msra.mxu0 %v1574
    %1689 = vmatprep.subr.mxu0 %v1571
    %1690 = vmatpush2.msra.mxu0 %v1570
    %1691 = vmatprep.subr.mxu0 %v1567
    %1692 = vmatpush2.msra.mxu0 %v1566
    %1693 = vmatprep.subr.mxu0 %v1563
    %1694 = vmatpush2.msra.mxu0 %v1562
    %1695 = vmatprep.mubr.f32.mxu0 %v968
    %1696 = vmatmul.mubr.f32.gmra.mxu0 %v967
    %v1697 = vpop.f32.mrf.mxu0
    %v1698 = vadd.f32 %v1629, %v1697
    %v1699 = vpop.f32.mrf.mxu0
    %v1700 = vadd.f32 %v1629, %v1699
    %1701 = vdwg.mxu0
    %1702 = vmatprep.subr.mxu0 %v1561
    %1703 = vmatpush1.msra.mxu0 %v1560
    %1704 = vmatprep.subr.mxu0 %v1557
    %1705 = vmatpush1.msra.mxu0 %v1556
    %1706 = vmatprep.subr.mxu0 %v1553
    %1707 = vmatpush1.msra.mxu0 %v1552
    %1708 = vmatprep.subr.mxu0 %v1549
    %1709 = vmatpush1.msra.mxu0 %v1548
    %1710 = vmatprep.subr.mxu0 %v1545
    %1711 = vmatpush1.msra.mxu0 %v1544
    %1712 = vmatprep.subr.mxu0 %v1541
    %1713 = vmatpush1.msra.mxu0 %v1540
    %1714 = vmatprep.subr.mxu0 %v1537
    %1715 = vmatpush1.msra.mxu0 %v1536
    %1716 = vmatprep.subr.mxu0 %v1533
    %1717 = vmatpush1.msra.mxu0 %v1532
    %1718 = vmatprep.subr.mxu0 %v1529
    %1719 = vmatpush1.msra.mxu0 %v1528
    %1720 = vmatprep.subr.mxu0 %v1525
    %1721 = vmatpush1.msra.mxu0 %v1524
    %1722 = vmatprep.subr.mxu0 %v1521
    %1723 = vmatpush1.msra.mxu0 %v1520
    %1724 = vmatprep.subr.mxu0 %v1517
    %1725 = vmatpush1.msra.mxu0 %v1516
    %1726 = vmatprep.subr.mxu0 %v1513
    %1727 = vmatpush1.msra.mxu0 %v1512
    %1728 = vmatprep.subr.mxu0 %v1509
    %1729 = vmatpush1.msra.mxu0 %v1508
    %1730 = vmatprep.subr.mxu0 %v1505
    %1731 = vmatpush1.msra.mxu0 %v1504
    %1732 = vmatprep.subr.mxu0 %v1501
    %1733 = vmatpush1.msra.mxu0 %v1500
    %1734 = vmatprep.subr.mxu0 %v1625
    %1735 = vmatpush2.msra.mxu0 %v1624
    %1736 = vmatprep.subr.mxu0 %v1621
    %1737 = vmatpush2.msra.mxu0 %v1620
    %1738 = vmatprep.subr.mxu0 %v1617
    %1739 = vmatpush2.msra.mxu0 %v1616
    %1740 = vmatprep.subr.mxu0 %v1613
    %1741 = vmatpush2.msra.mxu0 %v1612
    %1742 = vmatprep.subr.mxu0 %v1609
    %1743 = vmatpush2.msra.mxu0 %v1608
    %1744 = vmatprep.subr.mxu0 %v1605
    %1745 = vmatpush2.msra.mxu0 %v1604
    %1746 = vmatprep.subr.mxu0 %v1601
    %1747 = vmatpush2.msra.mxu0 %v1600
    %1748 = vmatprep.subr.mxu0 %v1597
    %1749 = vmatpush2.msra.mxu0 %v1596
    %1750 = vmatprep.subr.mxu0 %v1593
    %1751 = vmatpush2.msra.mxu0 %v1592
    %1752 = vmatprep.subr.mxu0 %v1589
    %1753 = vmatpush2.msra.mxu0 %v1588
    %1754 = vmatprep.subr.mxu0 %v1585
    %1755 = vmatpush2.msra.mxu0 %v1584
    %1756 = vmatprep.subr.mxu0 %v1581
    %1757 = vmatpush2.msra.mxu0 %v1580
    %1758 = vmatprep.subr.mxu0 %v1577
    %1759 = vmatpush2.msra.mxu0 %v1576
    %1760 = vmatprep.subr.mxu0 %v1573
    %1761 = vmatpush2.msra.mxu0 %v1572
    %1762 = vmatprep.subr.mxu0 %v1569
    %1763 = vmatpush2.msra.mxu0 %v1568
    %1764 = vmatprep.subr.mxu0 %v1565
    %1765 = vmatpush2.msra.mxu0 %v1564
    %1766 = vmatprep.mubr.f32.mxu0 %v968
    %1767 = vmatmul.mubr.f32.gmra.mxu0 %v967
    %v1768 = vpop.f32.mrf.mxu0
    %v1769 = vadd.f32 %v1629, %v1768
    %v1770 = vpop.f32.mrf.mxu0
    %v1771 = vadd.f32 %v1629, %v1770
    %1772 = vdwg.mxu0
    %vm1773 = vcmp.gt.f32.partialorder %v1698, 20.0
    %vm1774 = vcmp.gt.f32.partialorder %v1700, 20.0
    %vm1775 = vcmp.gt.f32.partialorder %v1769, 20.0
    %vm1776 = vcmp.gt.f32.partialorder %v1771, 20.0
    %v1777 = vmin.f32 %v1698, 20.0
    %v1778 = vmin.f32 %v1700, 20.0
    %v1779 = vmin.f32 %v1769, 20.0
    %v1780 = vmin.f32 %v1771, 20.0
    %v1781 = vmul.f32 %v1777, 1.442695
    %v1782 = vpow.pop %v1781
    %v1783 = vmul.f32 %v1778, 1.442695
    %v1784 = vpow.pop %v1783
    %v1785 = vmul.f32 %v1779, 1.442695
    %v1786 = vpow.pop %v1785
    %v1787 = vmul.f32 %v1780, 1.442695
    %v1788 = vpow.pop %v1787
    %v1789 = vadd.f32 %v1782, 1.0
    %v1790 = vadd.f32 %v1784, 1.0
    %v1791 = vadd.f32 %v1786, 1.0
    %v1792 = vadd.f32 %v1788, 1.0
    %v1793 = vlog2.pop %v1789
    %v1794 = vmul.f32 %v1793, 0.6931472
    %v1795 = vlog2.pop %v1790
    %v1796 = vmul.f32 %v1795, 0.6931472
    %v1797 = vlog2.pop %v1791
    %v1798 = vmul.f32 %v1797, 0.6931472
    %v1799 = vlog2.pop %v1792
    %v1800 = vmul.f32 %v1799, 0.6931472
    %v1801 = vsel %vm1773, %v1698, %v1794
    %v1802 = vsel %vm1774, %v1700, %v1796
    %v1803 = vsel %vm1775, %v1769, %v1798
    %v1804 = vsel %vm1776, %v1771, %v1800
    %v1805 = vtanh.pop %v1801
    %v1806 = vtanh.pop %v1802
    %v1807 = vtanh.pop %v1803
    %v1808 = vtanh.pop %v1804
    %v1809 = vmul.f32 %v1698, %v1805
    %v1810 = vmul.f32 %v1700, %v1806
    %v1811 = vmul.f32 %v1769, %v1807
    %v1812 = vmul.f32 %v1771, %v1808
    %v1813 = vadd.f32 %v78, %v1809
    %v1814 = vadd.f32 %v79, %v1810
    %v1815 = vadd.f32 %v80, %v1811
    %v1816 = vadd.f32 %v81, %v1812
    %1817 = vrot.lane.b32.xlu0 %v1813, 127
    %v1818 = vpop.permute.xlu0 %1817
    %1819 = vrot.lane.b32.xlu0 %v1814, 127
    %v1820 = vpop.permute.xlu0 %1819
    %1821 = vrot.lane.b32.xlu0 %v1815, 127
    %v1822 = vpop.permute.xlu0 %1821
    %1823 = vrot.lane.b32.xlu0 %v1816, 127
    %v1824 = vpop.permute.xlu0 %1823
    %v1825 = vsel %vm452, %v1822, %v1824
    %v1826 = vsel %vm452, %v1820, %v1822
    %v1827 = vsel %vm452, %v1818, %v1820
    %v1828 = vsel %vm452, %v1824, %v1818
    %v1829 = vmax.f32 %v1813, %v1827
    %v1830 = vmax.f32 %v1814, %v1826
    %v1831 = vmax.f32 %v1815, %v1825
    %v1832 = vmax.f32 %v1816, %v1828
    %1833 = vrot.lane.b32.xlu0 %v1829, 126
    %v1834 = vpop.permute.xlu0 %1833
    %1835 = vrot.lane.b32.xlu0 %v1830, 126
    %v1836 = vpop.permute.xlu0 %1835
    %1837 = vrot.lane.b32.xlu0 %v1831, 126
    %v1838 = vpop.permute.xlu0 %1837
    %1839 = vrot.lane.b32.xlu0 %v1832, 126
    %v1840 = vpop.permute.xlu0 %1839
    %vm1841 = vcmp.lt.s32.totalorder %v114, 126
    %v1842 = vsel %vm1841, %v1838, %v1840
    %v1843 = vsel %vm1841, %v1836, %v1838
    %v1844 = vsel %vm1841, %v1834, %v1836
    %v1845 = vsel %vm1841, %v1840, %v1834
    %v1846 = vmax.f32 %v1829, %v1844
    %v1847 = vmax.f32 %v1830, %v1843
    %v1848 = vmax.f32 %v1831, %v1842
    %v1849 = vmax.f32 %v1832, %v1845
    %1850 = vrot.lane.b32.xlu0 %v1846, 120
    %v1851 = vpop.permute.xlu0 %1850
    %1852 = vrot.lane.b32.xlu0 %v1847, 120
    %v1853 = vpop.permute.xlu0 %1852
    %1854 = vrot.lane.b32.xlu0 %v1848, 120
    %v1855 = vpop.permute.xlu0 %1854
    %1856 = vrot.lane.b32.xlu0 %v1849, 120
    %v1857 = vpop.permute.xlu0 %1856
    %v1858 = vsel %vm502, %v1855, %v1857
    %v1859 = vsel %vm502, %v1853, %v1855
    %v1860 = vsel %vm502, %v1851, %v1853
    %v1861 = vsel %vm502, %v1857, %v1851
    %v1862 = vmax.f32 %v1846, %v1860
    %v1863 = vmax.f32 %v1847, %v1859
    %v1864 = vmax.f32 %v1848, %v1858
    %v1865 = vmax.f32 %v1849, %v1861
    %1866 = vrot.lane.b32.xlu0 %v1862, 112
    %v1867 = vpop.permute.xlu0 %1866
    %1868 = vrot.lane.b32.xlu0 %v1863, 112
    %v1869 = vpop.permute.xlu0 %1868
    %1870 = vrot.lane.b32.xlu0 %v1864, 112
    %v1871 = vpop.permute.xlu0 %1870
    %1872 = vrot.lane.b32.xlu0 %v1865, 112
    %v1873 = vpop.permute.xlu0 %1872
    %vm1874 = vcmp.lt.s32.totalorder %v114, 112
    %v1875 = vsel %vm1874, %v1871, %v1873
    %v1876 = vsel %vm1874, %v1869, %v1871
    %v1877 = vsel %vm1874, %v1867, %v1869
    %v1878 = vsel %vm1874, %v1873, %v1867
    %v1879 = vmax.f32 %v1862, %v1877
    %v1880 = vmax.f32 %v1863, %v1876
    %v1881 = vmax.f32 %v1864, %v1875
    %v1882 = vmax.f32 %v1865, %v1878
    %1883 = vrot.lane.b32.xlu0 %v1879, 64
    %v1884 = vpop.permute.xlu0 %1883
    %1885 = vrot.lane.b32.xlu0 %v1880, 64
    %v1886 = vpop.permute.xlu0 %1885
    %1887 = vrot.lane.b32.xlu0 %v1881, 64
    %v1888 = vpop.permute.xlu0 %1887
    %1889 = vrot.lane.b32.xlu0 %v1882, 64
    %v1890 = vpop.permute.xlu0 %1889
    %v1891 = vsel %vm215, %v1888, %v1890
    %v1892 = vsel %vm215, %v1886, %v1888
    %v1893 = vsel %vm215, %v1884, %v1886
    %v1894 = vsel %vm215, %v1890, %v1884
    %v1895 = vmax.f32 %v1879, %v1893
    %v1896 = vmax.f32 %v1880, %v1892
    %v1897 = vmax.f32 %v1881, %v1891
    %v1898 = vmax.f32 %v1882, %v1894
    %v1899 = vmax.f32 %v1895, %v1896
    %v1900 = vmax.f32 %v1896, %v1897
    %v1901 = vmax.f32 %v1897, %v1898
    %v1902 = vmax.f32 %v1898, %v1895
    %v1903 = vld [vmem:[#allocation8 + $0x360] sm:$0xff]
    %v1904 = vld [vmem:[#allocation8 + $0x368] sm:$0xff]
    %v1905 = vld [vmem:[#allocation8 + $0x370] sm:$0xff]
    %v1906 = vld [vmem:[#allocation8 + $0x378] sm:$0xff]
    %v1907 = vmul.f32 %v1899, %v1903
    %v1908 = vmul.f32 %v1900, %v1904
    %v1909 = vmul.f32 %v1901, %v1905
    %v1910 = vmul.f32 %v1902, %v1906
    %v1911 = vadd.f32 %v1907, %v1908
    %v1912 = vadd.f32 %v1911, %v1909
    %v1913 = vadd.f32 %v1912, %v1910
    %1914 = vadd.xlane.f32.xlu0 %v1913
    %v1915 = vpop.xlane.xlu0 %1914
    %v1916 = vmul.f32 %v1915, 0.125
    %v1917 = vsub.f32 %v1899, %v1916
    %v1918 = vsub.f32 %v1900, %v1916
    %v1919 = vsub.f32 %v1901, %v1916
    %v1920 = vsub.f32 %v1902, %v1916
    %v1921 = vmul.f32 %v1917, %v1903
    %v1922 = vmul.f32 %v1918, %v1904
    %v1923 = vmul.f32 %v1919, %v1905
    %v1924 = vmul.f32 %v1920, %v1906
    %v1925 = vmul.f32 %v1921, %v1921
    %v1926 = vmul.f32 %v1922, %v1922
    %v1927 = vmul.f32 %v1923, %v1923
    %v1928 = vmul.f32 %v1924, %v1924
    %v1929 = vadd.f32 %v1925, %v1926
    %v1930 = vadd.f32 %v1929, %v1927
    %v1931 = vadd.f32 %v1930, %v1928
    %1932 = vadd.xlane.f32.xlu0 %v1931
    %v1933 = vpop.xlane.xlu0 %1932
    %v1934 = vmul.f32 %v1933, 0.125
    %v1935 = vadd.f32 %v1934, 1e-05
    %v1936 = vrsqrt.pop %v1935
    %v1937 = vmul.f32 %v1917, %v1936
    %v1938 = vmul.f32 %v1918, %v1936
    %v1939 = vmul.f32 %v1919, %v1936
    %v1940 = vmul.f32 %v1920, %v1936
    %v1941 = vld [vmem:[#allocation9] sm:$0xff]
    %v1942 = vld [vmem:[#allocation9 + $0x8] sm:$0xff]
    %v1943 = vld [vmem:[#allocation9 + $0x10] sm:$0xff]
    %v1944 = vld [vmem:[#allocation9 + $0x18] sm:$0xff]
    %v1945 = vld [vmem:[#allocation9 + $0x20] sm:$0xff]
    %v1946 = vld [vmem:[#allocation9 + $0x28] sm:$0xff]
    %v1947 = vld [vmem:[#allocation9 + $0x30] sm:$0xff]
    %v1948 = vld [vmem:[#allocation9 + $0x38] sm:$0xff]
    %v1949 = vld [vmem:[#allocation9 + $0x40] sm:$0xff]
    %v1950 = vld [vmem:[#allocation9 + $0x48] sm:$0xff]
    %v1951 = vld [vmem:[#allocation9 + $0x50] sm:$0xff]
    %v1952 = vld [vmem:[#allocation9 + $0x58] sm:$0xff]
    %v1953 = vld [vmem:[#allocation9 + $0x60] sm:$0xff]
    %v1954 = vld [vmem:[#allocation9 + $0x68] sm:$0xff]
    %v1955 = vld [vmem:[#allocation9 + $0x70] sm:$0xff]
    %v1956 = vld [vmem:[#allocation9 + $0x78] sm:$0xff]
    %v1957 = vld [vmem:[#allocation9 + $0x80] sm:$0xff]
    %v1958 = vld [vmem:[#allocation9 + $0x88] sm:$0xff]
    %v1959 = vld [vmem:[#allocation9 + $0x90] sm:$0xff]
    %v1960 = vld [vmem:[#allocation9 + $0x98] sm:$0xff]
    %v1961 = vld [vmem:[#allocation9 + $0xa0] sm:$0xff]
    %v1962 = vld [vmem:[#allocation9 + $0xa8] sm:$0xff]
    %v1963 = vld [vmem:[#allocation9 + $0xb0] sm:$0xff]
    %v1964 = vld [vmem:[#allocation9 + $0xb8] sm:$0xff]
    %v1965 = vld [vmem:[#allocation9 + $0xc0] sm:$0xff]
    %v1966 = vld [vmem:[#allocation9 + $0xc8] sm:$0xff]
    %v1967 = vld [vmem:[#allocation9 + $0xd0] sm:$0xff]
    %v1968 = vld [vmem:[#allocation9 + $0xd8] sm:$0xff]
    %v1969 = vld [vmem:[#allocation9 + $0xe0] sm:$0xff]
    %v1970 = vld [vmem:[#allocation9 + $0xe8] sm:$0xff]
    %v1971 = vld [vmem:[#allocation9 + $0xf0] sm:$0xff]
    %v1972 = vld [vmem:[#allocation9 + $0xf8] sm:$0xff]
    %v1973 = vld [vmem:[#allocation9 + $0x100] sm:$0xff]
    %v1974 = vld [vmem:[#allocation9 + $0x108] sm:$0xff]
    %v1975 = vld [vmem:[#allocation9 + $0x110] sm:$0xff]
    %v1976 = vld [vmem:[#allocation9 + $0x118] sm:$0xff]
    %v1977 = vld [vmem:[#allocation9 + $0x120] sm:$0xff]
    %v1978 = vld [vmem:[#allocation9 + $0x128] sm:$0xff]
    %v1979 = vld [vmem:[#allocation9 + $0x130] sm:$0xff]
    %v1980 = vld [vmem:[#allocation9 + $0x138] sm:$0xff]
    %v1981 = vld [vmem:[#allocation9 + $0x140] sm:$0xff]
    %v1982 = vld [vmem:[#allocation9 + $0x148] sm:$0xff]
    %v1983 = vld [vmem:[#allocation9 + $0x150] sm:$0xff]
    %v1984 = vld [vmem:[#allocation9 + $0x158] sm:$0xff]
    %v1985 = vld [vmem:[#allocation9 + $0x160] sm:$0xff]
    %v1986 = vld [vmem:[#allocation9 + $0x168] sm:$0xff]
    %v1987 = vld [vmem:[#allocation9 + $0x170] sm:$0xff]
    %v1988 = vld [vmem:[#allocation9 + $0x178] sm:$0xff]
    %v1989 = vld [vmem:[#allocation9 + $0x180] sm:$0xff]
    %v1990 = vld [vmem:[#allocation9 + $0x188] sm:$0xff]
    %v1991 = vld [vmem:[#allocation9 + $0x190] sm:$0xff]
    %v1992 = vld [vmem:[#allocation9 + $0x198] sm:$0xff]
    %v1993 = vld [vmem:[#allocation9 + $0x1a0] sm:$0xff]
    %v1994 = vld [vmem:[#allocation9 + $0x1a8] sm:$0xff]
    %v1995 = vld [vmem:[#allocation9 + $0x1b0] sm:$0xff]
    %v1996 = vld [vmem:[#allocation9 + $0x1b8] sm:$0xff]
    %v1997 = vld [vmem:[#allocation9 + $0x1c0] sm:$0xff]
    %v1998 = vld [vmem:[#allocation9 + $0x1c8] sm:$0xff]
    %v1999 = vld [vmem:[#allocation9 + $0x1d0] sm:$0xff]
    %v2000 = vld [vmem:[#allocation9 + $0x1d8] sm:$0xff]
    %v2001 = vld [vmem:[#allocation9 + $0x1e0] sm:$0xff]
    %v2002 = vld [vmem:[#allocation9 + $0x1e8] sm:$0xff]
    %v2003 = vld [vmem:[#allocation9 + $0x1f0] sm:$0xff]
    %v2004 = vld [vmem:[#allocation9 + $0x1f8] sm:$0xff]
    %2005 = vmatprep.subr.mxu0 0.0
    %2006 = vmatpush1.msra.mxu0 %v1956
    %2007 = vmatprep.subr.mxu0 0.0
    %2008 = vmatpush1.msra.mxu0 %v1955
    %2009 = vmatprep.subr.mxu0 0.0
    %2010 = vmatpush1.msra.mxu0 %v1954
    %2011 = vmatprep.subr.mxu0 0.0
    %2012 = vmatpush1.msra.mxu0 %v1953
    %2013 = vmatprep.subr.mxu0 0.0
    %2014 = vmatpush1.msra.mxu0 %v1952
    %2015 = vmatprep.subr.mxu0 0.0
    %2016 = vmatpush1.msra.mxu0 %v1951
    %2017 = vmatprep.subr.mxu0 0.0
    %2018 = vmatpush1.msra.mxu0 %v1950
    %2019 = vmatprep.subr.mxu0 0.0
    %2020 = vmatpush1.msra.mxu0 %v1949
    %2021 = vmatprep.subr.mxu0 0.0
    %2022 = vmatpush1.msra.mxu0 %v1948
    %2023 = vmatprep.subr.mxu0 0.0
    %2024 = vmatpush1.msra.mxu0 %v1947
    %2025 = vmatprep.subr.mxu0 0.0
    %2026 = vmatpush1.msra.mxu0 %v1946
    %2027 = vmatprep.subr.mxu0 0.0
    %2028 = vmatpush1.msra.mxu0 %v1945
    %2029 = vmatprep.subr.mxu0 0.0
    %2030 = vmatpush1.msra.mxu0 %v1944
    %2031 = vmatprep.subr.mxu0 0.0
    %2032 = vmatpush1.msra.mxu0 %v1943
    %2033 = vmatprep.subr.mxu0 0.0
    %2034 = vmatpush1.msra.mxu0 %v1942
    %2035 = vmatprep.subr.mxu0 0.0
    %2036 = vmatpush1.msra.mxu0 %v1941
    %2037 = vmatprep.subr.mxu0 0.0
    %2038 = vmatpush2.msra.mxu0 %v1972
    %2039 = vmatprep.subr.mxu0 0.0
    %2040 = vmatpush2.msra.mxu0 %v1971
    %2041 = vmatprep.subr.mxu0 0.0
    %2042 = vmatpush2.msra.mxu0 %v1970
    %2043 = vmatprep.subr.mxu0 0.0
    %2044 = vmatpush2.msra.mxu0 %v1969
    %2045 = vmatprep.subr.mxu0 0.0
    %2046 = vmatpush2.msra.mxu0 %v1968
    %2047 = vmatprep.subr.mxu0 0.0
    %2048 = vmatpush2.msra.mxu0 %v1967
    %2049 = vmatprep.subr.mxu0 0.0
    %2050 = vmatpush2.msra.mxu0 %v1966
    %2051 = vmatprep.subr.mxu0 0.0
    %2052 = vmatpush2.msra.mxu0 %v1965
    %2053 = vmatprep.subr.mxu0 0.0
    %2054 = vmatpush2.msra.mxu0 %v1964
    %2055 = vmatprep.subr.mxu0 0.0
    %2056 = vmatpush2.msra.mxu0 %v1963
    %2057 = vmatprep.subr.mxu0 0.0
    %2058 = vmatpush2.msra.mxu0 %v1962
    %2059 = vmatprep.subr.mxu0 0.0
    %2060 = vmatpush2.msra.mxu0 %v1961
    %2061 = vmatprep.subr.mxu0 0.0
    %2062 = vmatpush2.msra.mxu0 %v1960
    %2063 = vmatprep.subr.mxu0 0.0
    %2064 = vmatpush2.msra.mxu0 %v1959
    %2065 = vmatprep.subr.mxu0 0.0
    %2066 = vmatpush2.msra.mxu0 %v1958
    %2067 = vmatprep.subr.mxu0 0.0
    %2068 = vmatpush2.msra.mxu0 %v1957
    %2069 = vmatprep.mubr.f32.mxu0 %v1938
    %2070 = vmatmul.mubr.f32.gmra.mxu0 %v1937
    %v2071 = vpop.f32.mrf.mxu0
    %v2072 = vadd.f32 0.0, %v2071
    %v2073 = vpop.f32.mrf.mxu0
    %2074 = vdwg.mxu0
    %2075 = vmatprep.subr.mxu0 0.0
    %2076 = vmatpush1.msra.mxu0 %v1988
    %2077 = vmatprep.subr.mxu0 0.0
    %2078 = vmatpush1.msra.mxu0 %v1987
    %2079 = vmatprep.subr.mxu0 0.0
    %2080 = vmatpush1.msra.mxu0 %v1986
    %2081 = vmatprep.subr.mxu0 0.0
    %2082 = vmatpush1.msra.mxu0 %v1985
    %2083 = vmatprep.subr.mxu0 0.0
    %2084 = vmatpush1.msra.mxu0 %v1984
    %2085 = vmatprep.subr.mxu0 0.0
    %2086 = vmatpush1.msra.mxu0 %v1983
    %2087 = vmatprep.subr.mxu0 0.0
    %2088 = vmatpush1.msra.mxu0 %v1982
    %2089 = vmatprep.subr.mxu0 0.0
    %2090 = vmatpush1.msra.mxu0 %v1981
    %2091 = vmatprep.subr.mxu0 0.0
    %2092 = vmatpush1.msra.mxu0 %v1980
    %2093 = vmatprep.subr.mxu0 0.0
    %2094 = vmatpush1.msra.mxu0 %v1979
    %2095 = vmatprep.subr.mxu0 0.0
    %2096 = vmatpush1.msra.mxu0 %v1978
    %2097 = vmatprep.subr.mxu0 0.0
    %2098 = vmatpush1.msra.mxu0 %v1977
    %2099 = vmatprep.subr.mxu0 0.0
    %2100 = vmatpush1.msra.mxu0 %v1976
    %2101 = vmatprep.subr.mxu0 0.0
    %2102 = vmatpush1.msra.mxu0 %v1975
    %2103 = vmatprep.subr.mxu0 0.0
    %2104 = vmatpush1.msra.mxu0 %v1974
    %2105 = vmatprep.subr.mxu0 0.0
    %2106 = vmatpush1.msra.mxu0 %v1973
    %2107 = vmatprep.subr.mxu0 0.0
    %2108 = vmatpush2.msra.mxu0 %v2004
    %2109 = vmatprep.subr.mxu0 0.0
    %2110 = vmatpush2.msra.mxu0 %v2003
    %2111 = vmatprep.subr.mxu0 0.0
    %2112 = vmatpush2.msra.mxu0 %v2002
    %2113 = vmatprep.subr.mxu0 0.0
    %2114 = vmatpush2.msra.mxu0 %v2001
    %2115 = vmatprep.subr.mxu0 0.0
    %2116 = vmatpush2.msra.mxu0 %v2000
    %2117 = vmatprep.subr.mxu0 0.0
    %2118 = vmatpush2.msra.mxu0 %v1999
    %2119 = vmatprep.subr.mxu0 0.0
    %2120 = vmatpush2.msra.mxu0 %v1998
    %2121 = vmatprep.subr.mxu0 0.0
    %2122 = vmatpush2.msra.mxu0 %v1997
    %2123 = vmatprep.subr.mxu0 0.0
    %2124 = vmatpush2.msra.mxu0 %v1996
    %2125 = vmatprep.subr.mxu0 0.0
    %2126 = vmatpush2.msra.mxu0 %v1995
    %2127 = vmatprep.subr.mxu0 0.0
    %2128 = vmatpush2.msra.mxu0 %v1994
    %2129 = vmatprep.subr.mxu0 0.0
    %2130 = vmatpush2.msra.mxu0 %v1993
    %2131 = vmatprep.subr.mxu0 0.0
    %2132 = vmatpush2.msra.mxu0 %v1992
    %2133 = vmatprep.subr.mxu0 0.0
    %2134 = vmatpush2.msra.mxu0 %v1991
    %2135 = vmatprep.subr.mxu0 0.0
    %2136 = vmatpush2.msra.mxu0 %v1990
    %2137 = vmatprep.subr.mxu0 0.0
    %2138 = vmatpush2.msra.mxu0 %v1989
    %2139 = vmatprep.mubr.f32.mxu0 %v1940
    %2140 = vmatmul.mubr.f32.gmra.mxu0 %v1939
    %v2141 = vpop.f32.mrf.mxu0
    %v2142 = vadd.f32 %v2072, %v2141
    %v2143 = vpop.f32.mrf.mxu0
    %2144 = vdwg.mxu0
    %2145 = vst [vmem:[#allocation11] sm:$0xff] %v2142
    // Predicated region
    $region46: #{tpu_custom_call.1} parent=1 // pred_check
      _
    $region47: #{tpu_custom_call.1} parent=1 // pred_check_branch
      %2147 = sbr.rel (0) target = $region49
    $region48: #{tpu_custom_call.1} parent=1 // pred_region
      %s2149 = ssub.s32 128, 128
      %2150 = vsyncadd [#allocation5], %s2149
      %s2152 = sshll.u32 [#allocation11], 4
      %s2153 = int_to_ptr.vmem [resolvable:$true] %s2152
      %2155 = dma.vmem_to_hbm [thread:$0]  %s2153, 128, %s7, [#allocation5]
    $region49: #{tpu_custom_call.1} parent=1 // pred_fallthru
      _
    // Predicated region
    $region50: #{tpu_custom_call.1} parent=1 // pred_check
      _
    $region51: #{tpu_custom_call.1} parent=1 // pred_check_branch
      %2157 = sbr.rel (0) target = $region53
    $region52: #{tpu_custom_call.1} parent=1 // pred_region
      %2158 = dma.done [#allocation5], 128
    $region53: #{tpu_custom_call.1} parent=1 // pred_fallthru
      _
    %2159 = vsyncpa [#allocation4], 1
    %2160 = vsyncpa [#allocation7], 1
    %2161 = vsyncpa [#allocation10], 1
    %2162 = vsyncpa [#allocation5], 1

</llo_original>
